<compile_context>
chip_gen: v6e
topology: v6e:2x2x1
jax: 0.10.0
libtpu: 0.0.40
codegen_flags: <defaults>
</compile_context>

<pallas_src>
import jax
import jax.numpy as jnp
from jax import lax
from jax.experimental import pallas as pl
from jax.experimental.pallas import tpu as pltpu

KSIZE = 7
PAD = KSIZE // 2


def _make_kernel(C_total, H, W, Ct, itemsize):
    HW = H * W
    pad_len = PAD * W + PAD          # flat zero-pad on each side of a plane
    CH = max(8, 32 // itemsize)      # channel chunk = sublane pack (8/16/32)
    n_full = Ct // CH
    rem = Ct - n_full * CH
    MAX_UNROLL = 16

    def kernel(x_ref, w_ref, o_ref, sum_ref, max_ref):
        # x_ref : (Bt, Ct, HW)  VMEM   lane-dense channel-streaming block
        # w_ref : (2*KSIZE*KSIZE,) SMEM  flattened OIHW conv weight (O=1)
        # o_ref : (Bt, 1, HW)   VMEM
        # sum_ref, max_ref : (Bt, HW) f32 VMEM scratch (running sum / max)
        c_idx = pl.program_id(1)
        Bt = sum_ref.shape[0]

        @pl.when(c_idx == 0)
        def _():
            sum_ref[...] = jnp.zeros(sum_ref.shape, sum_ref.dtype)
            max_ref[...] = jnp.full(max_ref.shape, -jnp.inf, max_ref.dtype)

        # ---- fused sum/max channel reduction, one pass over CH-sized chunks
        def fold(chunk):
            cf = chunk.astype(jnp.float32)                    # (Bt, ch, HW)
            sum_ref[...] = sum_ref[...] + jnp.sum(cf, axis=1)
            max_ref[...] = jnp.maximum(max_ref[...], jnp.max(cf, axis=1))

        if n_full > 0:
            if n_full <= MAX_UNROLL:
                for k in range(n_full):                       # static slices
                    fold(x_ref[:, k * CH:(k + 1) * CH, :])
            else:
                @pl.loop(0, n_full)
                def _(k):
                    start = pl.multiple_of(k * CH, CH)        # tile-aligned
                    fold(x_ref[:, pl.ds(start, CH), :])
        if rem > 0:
            fold(x_ref[:, n_full * CH:Ct, :])

        # ---- epilogue: 7x7 "SAME" conv on [avg, max] planes + sigmoid ------
        @pl.when(c_idx == pl.num_programs(1) - 1)
        def _():
            avg = sum_ref[...] * (1.0 / C_total)              # (Bt, HW)
            mx = max_ref[...]                                 # (Bt, HW)

            # column-validity masks generated in-kernel (no extra DMA stream)
            col = lax.broadcasted_iota(jnp.int32, (1, HW), 1) % W
            col_masks = []
            for j in range(KSIZE):
                dj = j - PAD
                col_masks.append(
                    ((col + dj >= 0) & (col + dj < W)).astype(jnp.float32))

            zpad = jnp.zeros((Bt, pad_len), jnp.float32)
            acc = jnp.zeros((Bt, HW), jnp.float32)
            for c, plane in enumerate((avg, mx)):
                # flat zero-padded plane covering +-PAD rows and +-PAD cols
                pf = jnp.concatenate([zpad, plane, zpad], axis=1)
                for j in range(KSIZE):                        # column offset
                    acc_j = jnp.zeros((Bt, HW), jnp.float32)
                    for i in range(KSIZE):                    # row offset
                        wv = w_ref[c * KSIZE * KSIZE + i * KSIZE + j]
                        acc_j = acc_j + wv * pf[:, i * W + j: i * W + j + HW]
                    # mask factored out of the 49-tap inner loop
                    acc = acc + col_masks[j] * acc_j

            o_ref[...] = jax.nn.sigmoid(acc)[:, None, :].astype(o_ref.dtype)

    return kernel


def _vmem_budget():
    """(vmem_limit_bytes, per-buffer x block cap, per-plane Bt*HW*4 cap)."""
    try:
        cap = int(pltpu.get_tpu_info().vmem_capacity_bytes)
    except Exception:
        cap = 64 * 1024 * 1024                       # conservative fallback
    if cap >= 96 * 1024 * 1024:                      # v5e / v6e (128 MiB)
        return 64 * 1024 * 1024, 14 * 1024 * 1024, 2 * 1024 * 1024
    else:                                            # v7x (64 MiB)
        return 44 * 1024 * 1024, 7 * 1024 * 1024, 1 * 1024 * 1024


def _pick_block_sizes(B, C, HW, itemsize, x_block_cap, plane_cap):
    """Batch/channel block sizes.

    Bt is a leading block dim (unconstrained by the (8,128) rule) but is
    bounded so scratch/epilogue planes stay small and so the batch axis has
    >= 2 parallel steps whenever B >= 2 (keeps both v7x TensorCores busy).
    Ct is the second-minor block dim: a multiple of the dtype sublane pack
    (8 f32 / 16 bf16 / 32 int8) or the full channel extent.
    """
    sub = max(8, 32 // itemsize)

    def divisors(n):
        return [d for d in range(1, n + 1) if n % d == 0]

    b_cands = divisors(B)
    if B >= 2:
        b_cands = [d for d in b_cands if d <= B // 2] or [1]
    b_fit = [d for d in b_cands if d * HW * 4 <= plane_cap]
    Bt = max(b_fit) if b_fit else 1

    c_cands = [d for d in divisors(C) if d % sub == 0 or d == C]
    c_fit = [d for d in c_cands if Bt * d * HW * itemsize <= x_block_cap]
    Ct = max(c_fit) if c_fit else min(c_cands)
    return Bt, Ct


def spatial_attention(x, conv_weight):
    """x: (B, C, H, W), conv_weight: (1, 2, KSIZE, KSIZE) -> (B, 1, H, W)."""
    B, C, H, W = x.shape
    HW = H * W
    x_flat = x.reshape(B, C, HW)                            # lane-dense view
    w_flat = conv_weight.reshape(-1).astype(jnp.float32)    # (2*K*K,) -> SMEM

    vmem_limit, x_block_cap, plane_cap = _vmem_budget()
    Bt, Ct = _pick_block_sizes(B, C, HW, x.dtype.itemsize,
                               x_block_cap, plane_cap)
    kernel = _make_kernel(C, H, W, Ct, x.dtype.itemsize)

    out_flat = pl.pallas_call(
        kernel,
        out_shape=jax.ShapeDtypeStruct((B, 1, HW), x.dtype),
        grid_spec=pltpu.PrefetchScalarGridSpec(
            num_scalar_prefetch=0,
            grid=(B // Bt, C // Ct),
            in_specs=[
                pl.BlockSpec((Bt, Ct, HW), lambda b, c: (b, c, 0)),
                pl.BlockSpec(memory_space=pltpu.MemorySpace.SMEM),
            ],
            out_specs=pl.BlockSpec((Bt, 1, HW), lambda b, c: (b, 0, 0)),
            scratch_shapes=[
                pltpu.VMEM((Bt, HW), jnp.float32),   # running channel sum
                pltpu.VMEM((Bt, HW), jnp.float32),   # running channel max
            ],
        ),
        compiler_params=pltpu.CompilerParams(
            dimension_semantics=("parallel", "arbitrary"),
            vmem_limit_bytes=vmem_limit),
    )(x_flat, w_flat)

    return out_flat.reshape(B, 1, H, W)


def reference(x, conv_weight):
    avg = jnp.mean(x, axis=1, keepdims=True)
    mx = jnp.max(x, axis=1, keepdims=True)
    cat = jnp.concatenate([avg, mx], axis=1)
    y = lax.conv_general_dilated(
        cat, conv_weight,
        window_strides=(1, 1),
        padding=[(PAD, PAD), (PAD, PAD)],
        dimension_numbers=("NCHW", "OIHW", "NCHW"),
        precision=lax.Precision.HIGHEST,
    )
    return jax.nn.sigmoid(y)


if __name__ == "__main__":
    key = jax.random.PRNGKey(0)
    kx, kw = jax.random.split(key)

    B, C, H, W = 2, 4, 16, 16
    x = jax.random.normal(kx, (B, C, H, W), dtype=jnp.float32)
    # deterministic conv weight (nn.Conv2d(2, 1, 7, bias=False) shape)
    conv_weight = (jax.random.normal(kw, (1, 2, KSIZE, KSIZE),
                                     dtype=jnp.float32) * 0.1)

    out = spatial_attention(x, conv_weight)
    out = jax.block_until_ready(out)

    ref = reference(x, conv_weight)
    assert out.shape == (B, 1, H, W)
    assert jnp.allclose(out, ref, atol=1e-5, rtol=1e-5)
    print("KERNEL_OK")
</pallas_src>

<mosaic_0001>
module attributes {stable_mosaic.version = 11 : i64} {
  func.func @kernel(%arg0: i32, %arg1: i32, %arg2: memref<1x4x256xf32, #tpu.memory_space<vmem>>, %arg3: memref<98xf32, #tpu.memory_space<smem>>, %arg4: memref<1x1x256xf32, #tpu.memory_space<vmem>>, %arg5: memref<1x256xf32, #tpu.memory_space<vmem>>, %arg6: memref<1x256xf32, #tpu.memory_space<vmem>>) attributes {dimension_semantics = [#tpu.dimension_semantics<parallel>, #tpu.dimension_semantics<arbitrary>], iteration_bounds = array<i64: 2, 1>, scalar_prefetch = 0 : i64, scratch_operands = 2 : i64, tpu.core_type = #tpu.core_type<tc>, window_params = [{transform_indices = @transform_0, window_bounds = array<i64: 1, 4, 256>}, {transform_indices = @transform_1, window_bounds = array<i64: 98>}, {transform_indices = @transform_2, window_bounds = array<i64: 1, 1, 256>}]} {
    %c0_i32 = arith.constant 0 : i32
    %0 = arith.cmpi eq, %arg1, %c0_i32 : i32
    %1 = arith.extui %0 : i1 to i32
    %c0_i32_0 = arith.constant 0 : i32
    %2 = arith.cmpi ne, %1, %c0_i32_0 : i32
    scf.if %2 {
      %cst_14 = arith.constant 0.000000e+00 : f32
      %15 = vector.broadcast %cst_14 : f32 to vector<1x256xf32>
      %c0_15 = arith.constant 0 : index
      %c0_16 = arith.constant 0 : index
      %16 = vector.load %arg5[%c0_15, %c0_16] : memref<1x256xf32, #tpu.memory_space<vmem>>, vector<1x256xf32>
      tpu.vector_store %arg5[%c0_15, %c0_16], %15 {strides = array<i32>} : memref<1x256xf32, #tpu.memory_space<vmem>>, vector<1x256xf32>,
      %cst_17 = arith.constant 0xFF800000 : f32
      %17 = vector.broadcast %cst_17 : f32 to vector<1x256xf32>
      %c0_18 = arith.constant 0 : index
      %c0_19 = arith.constant 0 : index
      %18 = vector.load %arg6[%c0_18, %c0_19] : memref<1x256xf32, #tpu.memory_space<vmem>>, vector<1x256xf32>
      tpu.vector_store %arg6[%c0_18, %c0_19], %17 {strides = array<i32>} : memref<1x256xf32, #tpu.memory_space<vmem>>, vector<1x256xf32>,
    } else {
    }
    %c0 = arith.constant 0 : index
    %c0_1 = arith.constant 0 : index
    %c0_2 = arith.constant 0 : index
    %3 = vector.load %arg2[%c0, %c0_1, %c0_2] : memref<1x4x256xf32, #tpu.memory_space<vmem>>, vector<1x4x256xf32>
    %c0_3 = arith.constant 0 : index
    %c0_4 = arith.constant 0 : index
    %4 = vector.load %arg5[%c0_3, %c0_4] : memref<1x256xf32, #tpu.memory_space<vmem>>, vector<1x256xf32>
    %cst = arith.constant dense<0.000000e+00> : vector<1x256xf32>
    %5 = vector.multi_reduction <add>, %3, %cst [1] : vector<1x4x256xf32> to vector<1x256xf32>
    %6 = arith.addf %4, %5 : vector<1x256xf32>
    %c0_5 = arith.constant 0 : index
    %c0_6 = arith.constant 0 : index
    %7 = vector.load %arg5[%c0_5, %c0_6] : memref<1x256xf32, #tpu.memory_space<vmem>>, vector<1x256xf32>
    tpu.vector_store %arg5[%c0_5, %c0_6], %6 {strides = array<i32>} : memref<1x256xf32, #tpu.memory_space<vmem>>, vector<1x256xf32>,
    %c0_7 = arith.constant 0 : index
    %c0_8 = arith.constant 0 : index
    %8 = vector.load %arg6[%c0_7, %c0_8] : memref<1x256xf32, #tpu.memory_space<vmem>>, vector<1x256xf32>
    %cst_9 = arith.constant dense<0xFF800000> : vector<1x256xf32>
    %9 = vector.multi_reduction <maximumf>, %3, %cst_9 [1] : vector<1x4x256xf32> to vector<1x256xf32>
    %10 = arith.maximumf %8, %9 : vector<1x256xf32>
    %c0_10 = arith.constant 0 : index
    %c0_11 = arith.constant 0 : index
    %11 = vector.load %arg6[%c0_10, %c0_11] : memref<1x256xf32, #tpu.memory_space<vmem>>, vector<1x256xf32>
    tpu.vector_store %arg6[%c0_10, %c0_11], %10 {strides = array<i32>} : memref<1x256xf32, #tpu.memory_space<vmem>>, vector<1x256xf32>,
    %c0_i32_12 = arith.constant 0 : i32
    %12 = arith.cmpi eq, %arg1, %c0_i32_12 : i32
    %13 = arith.extui %12 : i1 to i32
    %c0_i32_13 = arith.constant 0 : i32
    %14 = arith.cmpi ne, %13, %c0_i32_13 : i32
    scf.if %14 {
      %c0_14 = arith.constant 0 : index
      %c0_15 = arith.constant 0 : index
      %15 = vector.load %arg5[%c0_14, %c0_15] : memref<1x256xf32, #tpu.memory_space<vmem>>, vector<1x256xf32>
      %cst_16 = arith.constant 2.500000e-01 : f32
      %16 = vector.broadcast %cst_16 : f32 to vector<1x256xf32>
      %17 = arith.mulf %15, %16 : vector<1x256xf32>
      %c0_17 = arith.constant 0 : index
      %c0_18 = arith.constant 0 : index
      %18 = vector.load %arg6[%c0_17, %c0_18] : memref<1x256xf32, #tpu.memory_space<vmem>>, vector<1x256xf32>
      %19 = tpu.iota {dimensions = array<i32: 1>} : vector<1x256xi32>
      %c16_i32 = arith.constant 16 : i32
      %c0_i32_19 = arith.constant 0 : i32
      %20 = arith.cmpi eq, %c16_i32, %c0_i32_19 : i32
      %c1_i32 = arith.constant 1 : i32
      %21 = arith.select %20, %c1_i32, %c16_i32 : i32
      %22 = vector.broadcast %21 : i32 to vector<1x256xi32>
      %23 = arith.remsi %19, %22 : vector<1x256xi32>
      %c0_i32_20 = arith.constant 0 : i32
      %24 = vector.broadcast %c0_i32_20 : i32 to vector<1x256xi32>
      %25 = arith.cmpi ne, %23, %24 : vector<1x256xi32>
      %c0_i32_21 = arith.constant 0 : i32
      %26 = vector.broadcast %c0_i32_21 : i32 to vector<1x256xi32>
      %27 = arith.cmpi slt, %23, %26 : vector<1x256xi32>
      %c0_i32_22 = arith.constant 0 : i32
      %28 = arith.cmpi slt, %21, %c0_i32_22 : i32
      %29 = vector.broadcast %28 : i1 to vector<1x256xi1>
      %30 = vector.broadcast %29 : vector<1x256xi1> to vector<1x256xi1>
      %31 = arith.xori %27, %30 : vector<1x256xi1>
      %32 = arith.andi %31, %25 : vector<1x256xi1>
      %33 = vector.broadcast %21 : i32 to vector<1x256xi32>
      %34 = arith.addi %23, %33 : vector<1x256xi32>
      %35 = arith.select %32, %34, %23 : vector<1x256xi1>, vector<1x256xi32>
      %c-3_i32 = arith.constant -3 : i32
      %36 = vector.broadcast %c-3_i32 : i32 to vector<1x256xi32>
      %37 = arith.addi %35, %36 : vector<1x256xi32>
      %c0_i32_23 = arith.constant 0 : i32
      %38 = vector.broadcast %c0_i32_23 : i32 to vector<1x256xi32>
      %39 = arith.cmpi sge, %37, %38 : vector<1x256xi32>
      %c-3_i32_24 = arith.constant -3 : i32
      %40 = vector.broadcast %c-3_i32_24 : i32 to vector<1x256xi32>
      %41 = arith.addi %35, %40 : vector<1x256xi32>
      %c16_i32_25 = arith.constant 16 : i32
      %42 = vector.broadcast %c16_i32_25 : i32 to vector<1x256xi32>
      %43 = arith.cmpi slt, %41, %42 : vector<1x256xi32>
      %44 = arith.andi %39, %43 : vector<1x256xi1>
      %45 = arith.extui %44 : vector<1x256xi1> to vector<1x256xi32>
      %46 = arith.sitofp %45 : vector<1x256xi32> to vector<1x256xf32>
      %c-2_i32 = arith.constant -2 : i32
      %47 = vector.broadcast %c-2_i32 : i32 to vector<1x256xi32>
      %48 = arith.addi %35, %47 : vector<1x256xi32>
      %c0_i32_26 = arith.constant 0 : i32
      %49 = vector.broadcast %c0_i32_26 : i32 to vector<1x256xi32>
      %50 = arith.cmpi sge, %48, %49 : vector<1x256xi32>
      %c-2_i32_27 = arith.constant -2 : i32
      %51 = vector.broadcast %c-2_i32_27 : i32 to vector<1x256xi32>
      %52 = arith.addi %35, %51 : vector<1x256xi32>
      %c16_i32_28 = arith.constant 16 : i32
      %53 = vector.broadcast %c16_i32_28 : i32 to vector<1x256xi32>
      %54 = arith.cmpi slt, %52, %53 : vector<1x256xi32>
      %55 = arith.andi %50, %54 : vector<1x256xi1>
      %56 = arith.extui %55 : vector<1x256xi1> to vector<1x256xi32>
      %57 = arith.sitofp %56 : vector<1x256xi32> to vector<1x256xf32>
      %c-1_i32 = arith.constant -1 : i32
      %58 = vector.broadcast %c-1_i32 : i32 to vector<1x256xi32>
      %59 = arith.addi %35, %58 : vector<1x256xi32>
      %c0_i32_29 = arith.constant 0 : i32
      %60 = vector.broadcast %c0_i32_29 : i32 to vector<1x256xi32>
      %61 = arith.cmpi sge, %59, %60 : vector<1x256xi32>
      %c-1_i32_30 = arith.constant -1 : i32
      %62 = vector.broadcast %c-1_i32_30 : i32 to vector<1x256xi32>
      %63 = arith.addi %35, %62 : vector<1x256xi32>
      %c16_i32_31 = arith.constant 16 : i32
      %64 = vector.broadcast %c16_i32_31 : i32 to vector<1x256xi32>
      %65 = arith.cmpi slt, %63, %64 : vector<1x256xi32>
      %66 = arith.andi %61, %65 : vector<1x256xi1>
      %67 = arith.extui %66 : vector<1x256xi1> to vector<1x256xi32>
      %68 = arith.sitofp %67 : vector<1x256xi32> to vector<1x256xf32>
      %c0_i32_32 = arith.constant 0 : i32
      %69 = vector.broadcast %c0_i32_32 : i32 to vector<1x256xi32>
      %70 = arith.addi %35, %69 : vector<1x256xi32>
      %c0_i32_33 = arith.constant 0 : i32
      %71 = vector.broadcast %c0_i32_33 : i32 to vector<1x256xi32>
      %72 = arith.cmpi sge, %70, %71 : vector<1x256xi32>
      %c0_i32_34 = arith.constant 0 : i32
      %73 = vector.broadcast %c0_i32_34 : i32 to vector<1x256xi32>
      %74 = arith.addi %35, %73 : vector<1x256xi32>
      %c16_i32_35 = arith.constant 16 : i32
      %75 = vector.broadcast %c16_i32_35 : i32 to vector<1x256xi32>
      %76 = arith.cmpi slt, %74, %75 : vector<1x256xi32>
      %77 = arith.andi %72, %76 : vector<1x256xi1>
      %78 = arith.extui %77 : vector<1x256xi1> to vector<1x256xi32>
      %79 = arith.sitofp %78 : vector<1x256xi32> to vector<1x256xf32>
      %c1_i32_36 = arith.constant 1 : i32
      %80 = vector.broadcast %c1_i32_36 : i32 to vector<1x256xi32>
      %81 = arith.addi %35, %80 : vector<1x256xi32>
      %c0_i32_37 = arith.constant 0 : i32
      %82 = vector.broadcast %c0_i32_37 : i32 to vector<1x256xi32>
      %83 = arith.cmpi sge, %81, %82 : vector<1x256xi32>
      %c1_i32_38 = arith.constant 1 : i32
      %84 = vector.broadcast %c1_i32_38 : i32 to vector<1x256xi32>
      %85 = arith.addi %35, %84 : vector<1x256xi32>
      %c16_i32_39 = arith.constant 16 : i32
      %86 = vector.broadcast %c16_i32_39 : i32 to vector<1x256xi32>
      %87 = arith.cmpi slt, %85, %86 : vector<1x256xi32>
      %88 = arith.andi %83, %87 : vector<1x256xi1>
      %89 = arith.extui %88 : vector<1x256xi1> to vector<1x256xi32>
      %90 = arith.sitofp %89 : vector<1x256xi32> to vector<1x256xf32>
      %c2_i32 = arith.constant 2 : i32
      %91 = vector.broadcast %c2_i32 : i32 to vector<1x256xi32>
      %92 = arith.addi %35, %91 : vector<1x256xi32>
      %c0_i32_40 = arith.constant 0 : i32
      %93 = vector.broadcast %c0_i32_40 : i32 to vector<1x256xi32>
      %94 = arith.cmpi sge, %92, %93 : vector<1x256xi32>
      %c2_i32_41 = arith.constant 2 : i32
      %95 = vector.broadcast %c2_i32_41 : i32 to vector<1x256xi32>
      %96 = arith.addi %35, %95 : vector<1x256xi32>
      %c16_i32_42 = arith.constant 16 : i32
      %97 = vector.broadcast %c16_i32_42 : i32 to vector<1x256xi32>
      %98 = arith.cmpi slt, %96, %97 : vector<1x256xi32>
      %99 = arith.andi %94, %98 : vector<1x256xi1>
      %100 = arith.extui %99 : vector<1x256xi1> to vector<1x256xi32>
      %101 = arith.sitofp %100 : vector<1x256xi32> to vector<1x256xf32>
      %c3_i32 = arith.constant 3 : i32
      %102 = vector.broadcast %c3_i32 : i32 to vector<1x256xi32>
      %103 = arith.addi %35, %102 : vector<1x256xi32>
      %c0_i32_43 = arith.constant 0 : i32
      %104 = vector.broadcast %c0_i32_43 : i32 to vector<1x256xi32>
      %105 = arith.cmpi sge, %103, %104 : vector<1x256xi32>
      %c3_i32_44 = arith.constant 3 : i32
      %106 = vector.broadcast %c3_i32_44 : i32 to vector<1x256xi32>
      %107 = arith.addi %35, %106 : vector<1x256xi32>
      %c16_i32_45 = arith.constant 16 : i32
      %108 = vector.broadcast %c16_i32_45 : i32 to vector<1x256xi32>
      %109 = arith.cmpi slt, %107, %108 : vector<1x256xi32>
      %110 = arith.andi %105, %109 : vector<1x256xi1>
      %111 = arith.extui %110 : vector<1x256xi1> to vector<1x256xi32>
      %112 = arith.sitofp %111 : vector<1x256xi32> to vector<1x256xf32>
      %cst_46 = arith.constant 0.000000e+00 : f32
      %113 = vector.broadcast %cst_46 : f32 to vector<1x51xf32>
      %cst_47 = arith.constant 0.000000e+00 : f32
      %114 = vector.broadcast %cst_47 : f32 to vector<1x256xf32>
      %115 = tpu.concatenate %113, %17, %113 in 1 : vector<1x51xf32>, vector<1x256xf32>, vector<1x51xf32> -> vector<1x358xf32>
      %cst_48 = arith.constant 0.000000e+00 : f32
      %116 = vector.broadcast %cst_48 : f32 to vector<1x256xf32>
      %c0_49 = arith.constant 0 : index
      %117 = memref.load %arg3[%c0_49] : memref<98xf32, #tpu.memory_space<smem>>
      %118 = vector.extract_strided_slice %115 {offsets = [0, 0], sizes = [1, 256], strides = [1, 1]} : vector<1x358xf32> to vector<1x256xf32>
      %119 = vector.broadcast %117 : f32 to vector<1x256xf32>
      %120 = arith.mulf %119, %118 : vector<1x256xf32>
      %121 = arith.addf %116, %120 : vector<1x256xf32>
      %c7 = arith.constant 7 : index
      %122 = memref.load %arg3[%c7] : memref<98xf32, #tpu.memory_space<smem>>
      %123 = vector.extract_strided_slice %115 {offsets = [0, 16], sizes = [1, 256], strides = [1, 1]} : vector<1x358xf32> to vector<1x256xf32>
      %124 = vector.broadcast %122 : f32 to vector<1x256xf32>
      %125 = arith.mulf %124, %123 : vector<1x256xf32>
      %126 = arith.addf %121, %125 : vector<1x256xf32>
      %c14 = arith.constant 14 : index
      %127 = memref.load %arg3[%c14] : memref<98xf32, #tpu.memory_space<smem>>
      %128 = vector.extract_strided_slice %115 {offsets = [0, 32], sizes = [1, 256], strides = [1, 1]} : vector<1x358xf32> to vector<1x256xf32>
      %129 = vector.broadcast %127 : f32 to vector<1x256xf32>
      %130 = arith.mulf %129, %128 : vector<1x256xf32>
      %131 = arith.addf %126, %130 : vector<1x256xf32>
      %c21 = arith.constant 21 : index
      %132 = memref.load %arg3[%c21] : memref<98xf32, #tpu.memory_space<smem>>
      %133 = vector.extract_strided_slice %115 {offsets = [0, 48], sizes = [1, 256], strides = [1, 1]} : vector<1x358xf32> to vector<1x256xf32>
      %134 = vector.broadcast %132 : f32 to vector<1x256xf32>
      %135 = arith.mulf %134, %133 : vector<1x256xf32>
      %136 = arith.addf %131, %135 : vector<1x256xf32>
      %c28 = arith.constant 28 : index
      %137 = memref.load %arg3[%c28] : memref<98xf32, #tpu.memory_space<smem>>
      %138 = vector.extract_strided_slice %115 {offsets = [0, 64], sizes = [1, 256], strides = [1, 1]} : vector<1x358xf32> to vector<1x256xf32>
      %139 = vector.broadcast %137 : f32 to vector<1x256xf32>
      %140 = arith.mulf %139, %138 : vector<1x256xf32>
      %141 = arith.addf %136, %140 : vector<1x256xf32>
      %c35 = arith.constant 35 : index
      %142 = memref.load %arg3[%c35] : memref<98xf32, #tpu.memory_space<smem>>
      %143 = vector.extract_strided_slice %115 {offsets = [0, 80], sizes = [1, 256], strides = [1, 1]} : vector<1x358xf32> to vector<1x256xf32>
      %144 = vector.broadcast %142 : f32 to vector<1x256xf32>
      %145 = arith.mulf %144, %143 : vector<1x256xf32>
      %146 = arith.addf %141, %145 : vector<1x256xf32>
      %c42 = arith.constant 42 : index
      %147 = memref.load %arg3[%c42] : memref<98xf32, #tpu.memory_space<smem>>
      %148 = vector.extract_strided_slice %115 {offsets = [0, 96], sizes = [1, 256], strides = [1, 1]} : vector<1x358xf32> to vector<1x256xf32>
      %149 = vector.broadcast %147 : f32 to vector<1x256xf32>
      %150 = arith.mulf %149, %148 : vector<1x256xf32>
      %151 = arith.addf %146, %150 : vector<1x256xf32>
      %152 = arith.mulf %46, %151 : vector<1x256xf32>
      %153 = arith.addf %114, %152 : vector<1x256xf32>
      %cst_50 = arith.constant 0.000000e+00 : f32
      %154 = vector.broadcast %cst_50 : f32 to vector<1x256xf32>
      %c1 = arith.constant 1 : index
      %155 = memref.load %arg3[%c1] : memref<98xf32, #tpu.memory_space<smem>>
      %156 = vector.extract_strided_slice %115 {offsets = [0, 1], sizes = [1, 256], strides = [1, 1]} : vector<1x358xf32> to vector<1x256xf32>
      %157 = vector.broadcast %155 : f32 to vector<1x256xf32>
      %158 = arith.mulf %157, %156 : vector<1x256xf32>
      %159 = arith.addf %154, %158 : vector<1x256xf32>
      %c8 = arith.constant 8 : index
      %160 = memref.load %arg3[%c8] : memref<98xf32, #tpu.memory_space<smem>>
      %161 = vector.extract_strided_slice %115 {offsets = [0, 17], sizes = [1, 256], strides = [1, 1]} : vector<1x358xf32> to vector<1x256xf32>
      %162 = vector.broadcast %160 : f32 to vector<1x256xf32>
      %163 = arith.mulf %162, %161 : vector<1x256xf32>
      %164 = arith.addf %159, %163 : vector<1x256xf32>
      %c15 = arith.constant 15 : index
      %165 = memref.load %arg3[%c15] : memref<98xf32, #tpu.memory_space<smem>>
      %166 = vector.extract_strided_slice %115 {offsets = [0, 33], sizes = [1, 256], strides = [1, 1]} : vector<1x358xf32> to vector<1x256xf32>
      %167 = vector.broadcast %165 : f32 to vector<1x256xf32>
      %168 = arith.mulf %167, %166 : vector<1x256xf32>
      %169 = arith.addf %164, %168 : vector<1x256xf32>
      %c22 = arith.constant 22 : index
      %170 = memref.load %arg3[%c22] : memref<98xf32, #tpu.memory_space<smem>>
      %171 = vector.extract_strided_slice %115 {offsets = [0, 49], sizes = [1, 256], strides = [1, 1]} : vector<1x358xf32> to vector<1x256xf32>
      %172 = vector.broadcast %170 : f32 to vector<1x256xf32>
      %173 = arith.mulf %172, %171 : vector<1x256xf32>
      %174 = arith.addf %169, %173 : vector<1x256xf32>
      %c29 = arith.constant 29 : index
      %175 = memref.load %arg3[%c29] : memref<98xf32, #tpu.memory_space<smem>>
      %176 = vector.extract_strided_slice %115 {offsets = [0, 65], sizes = [1, 256], strides = [1, 1]} : vector<1x358xf32> to vector<1x256xf32>
      %177 = vector.broadcast %175 : f32 to vector<1x256xf32>
      %178 = arith.mulf %177, %176 : vector<1x256xf32>
      %179 = arith.addf %174, %178 : vector<1x256xf32>
      %c36 = arith.constant 36 : index
      %180 = memref.load %arg3[%c36] : memref<98xf32, #tpu.memory_space<smem>>
      %181 = vector.extract_strided_slice %115 {offsets = [0, 81], sizes = [1, 256], strides = [1, 1]} : vector<1x358xf32> to vector<1x256xf32>
      %182 = vector.broadcast %180 : f32 to vector<1x256xf32>
      %183 = arith.mulf %182, %181 : vector<1x256xf32>
      %184 = arith.addf %179, %183 : vector<1x256xf32>
      %c43 = arith.constant 43 : index
      %185 = memref.load %arg3[%c43] : memref<98xf32, #tpu.memory_space<smem>>
      %186 = vector.extract_strided_slice %115 {offsets = [0, 97], sizes = [1, 256], strides = [1, 1]} : vector<1x358xf32> to vector<1x256xf32>
      %187 = vector.broadcast %185 : f32 to vector<1x256xf32>
      %188 = arith.mulf %187, %186 : vector<1x256xf32>
      %189 = arith.addf %184, %188 : vector<1x256xf32>
      %190 = arith.mulf %57, %189 : vector<1x256xf32>
      %191 = arith.addf %153, %190 : vector<1x256xf32>
      %cst_51 = arith.constant 0.000000e+00 : f32
      %192 = vector.broadcast %cst_51 : f32 to vector<1x256xf32>
      %c2 = arith.constant 2 : index
      %193 = memref.load %arg3[%c2] : memref<98xf32, #tpu.memory_space<smem>>
      %194 = vector.extract_strided_slice %115 {offsets = [0, 2], sizes = [1, 256], strides = [1, 1]} : vector<1x358xf32> to vector<1x256xf32>
      %195 = vector.broadcast %193 : f32 to vector<1x256xf32>
      %196 = arith.mulf %195, %194 : vector<1x256xf32>
      %197 = arith.addf %192, %196 : vector<1x256xf32>
      %c9 = arith.constant 9 : index
      %198 = memref.load %arg3[%c9] : memref<98xf32, #tpu.memory_space<smem>>
      %199 = vector.extract_strided_slice %115 {offsets = [0, 18], sizes = [1, 256], strides = [1, 1]} : vector<1x358xf32> to vector<1x256xf32>
      %200 = vector.broadcast %198 : f32 to vector<1x256xf32>
      %201 = arith.mulf %200, %199 : vector<1x256xf32>
      %202 = arith.addf %197, %201 : vector<1x256xf32>
      %c16 = arith.constant 16 : index
      %203 = memref.load %arg3[%c16] : memref<98xf32, #tpu.memory_space<smem>>
      %204 = vector.extract_strided_slice %115 {offsets = [0, 34], sizes = [1, 256], strides = [1, 1]} : vector<1x358xf32> to vector<1x256xf32>
      %205 = vector.broadcast %203 : f32 to vector<1x256xf32>
      %206 = arith.mulf %205, %204 : vector<1x256xf32>
      %207 = arith.addf %202, %206 : vector<1x256xf32>
      %c23 = arith.constant 23 : index
      %208 = memref.load %arg3[%c23] : memref<98xf32, #tpu.memory_space<smem>>
      %209 = vector.extract_strided_slice %115 {offsets = [0, 50], sizes = [1, 256], strides = [1, 1]} : vector<1x358xf32> to vector<1x256xf32>
      %210 = vector.broadcast %208 : f32 to vector<1x256xf32>
      %211 = arith.mulf %210, %209 : vector<1x256xf32>
      %212 = arith.addf %207, %211 : vector<1x256xf32>
      %c30 = arith.constant 30 : index
      %213 = memref.load %arg3[%c30] : memref<98xf32, #tpu.memory_space<smem>>
      %214 = vector.extract_strided_slice %115 {offsets = [0, 66], sizes = [1, 256], strides = [1, 1]} : vector<1x358xf32> to vector<1x256xf32>
      %215 = vector.broadcast %213 : f32 to vector<1x256xf32>
      %216 = arith.mulf %215, %214 : vector<1x256xf32>
      %217 = arith.addf %212, %216 : vector<1x256xf32>
      %c37 = arith.constant 37 : index
      %218 = memref.load %arg3[%c37] : memref<98xf32, #tpu.memory_space<smem>>
      %219 = vector.extract_strided_slice %115 {offsets = [0, 82], sizes = [1, 256], strides = [1, 1]} : vector<1x358xf32> to vector<1x256xf32>
      %220 = vector.broadcast %218 : f32 to vector<1x256xf32>
      %221 = arith.mulf %220, %219 : vector<1x256xf32>
      %222 = arith.addf %217, %221 : vector<1x256xf32>
      %c44 = arith.constant 44 : index
      %223 = memref.load %arg3[%c44] : memref<98xf32, #tpu.memory_space<smem>>
      %224 = vector.extract_strided_slice %115 {offsets = [0, 98], sizes = [1, 256], strides = [1, 1]} : vector<1x358xf32> to vector<1x256xf32>
      %225 = vector.broadcast %223 : f32 to vector<1x256xf32>
      %226 = arith.mulf %225, %224 : vector<1x256xf32>
      %227 = arith.addf %222, %226 : vector<1x256xf32>
      %228 = arith.mulf %68, %227 : vector<1x256xf32>
      %229 = arith.addf %191, %228 : vector<1x256xf32>
      %cst_52 = arith.constant 0.000000e+00 : f32
      %230 = vector.broadcast %cst_52 : f32 to vector<1x256xf32>
      %c3 = arith.constant 3 : index
      %231 = memref.load %arg3[%c3] : memref<98xf32, #tpu.memory_space<smem>>
      %232 = vector.extract_strided_slice %115 {offsets = [0, 3], sizes = [1, 256], strides = [1, 1]} : vector<1x358xf32> to vector<1x256xf32>
      %233 = vector.broadcast %231 : f32 to vector<1x256xf32>
      %234 = arith.mulf %233, %232 : vector<1x256xf32>
      %235 = arith.addf %230, %234 : vector<1x256xf32>
      %c10 = arith.constant 10 : index
      %236 = memref.load %arg3[%c10] : memref<98xf32, #tpu.memory_space<smem>>
      %237 = vector.extract_strided_slice %115 {offsets = [0, 19], sizes = [1, 256], strides = [1, 1]} : vector<1x358xf32> to vector<1x256xf32>
      %238 = vector.broadcast %236 : f32 to vector<1x256xf32>
      %239 = arith.mulf %238, %237 : vector<1x256xf32>
      %240 = arith.addf %235, %239 : vector<1x256xf32>
      %c17 = arith.constant 17 : index
      %241 = memref.load %arg3[%c17] : memref<98xf32, #tpu.memory_space<smem>>
      %242 = vector.extract_strided_slice %115 {offsets = [0, 35], sizes = [1, 256], strides = [1, 1]} : vector<1x358xf32> to vector<1x256xf32>
      %243 = vector.broadcast %241 : f32 to vector<1x256xf32>
      %244 = arith.mulf %243, %242 : vector<1x256xf32>
      %245 = arith.addf %240, %244 : vector<1x256xf32>
      %c24 = arith.constant 24 : index
      %246 = memref.load %arg3[%c24] : memref<98xf32, #tpu.memory_space<smem>>
      %247 = vector.extract_strided_slice %115 {offsets = [0, 51], sizes = [1, 256], strides = [1, 1]} : vector<1x358xf32> to vector<1x256xf32>
      %248 = vector.broadcast %246 : f32 to vector<1x256xf32>
      %249 = arith.mulf %248, %247 : vector<1x256xf32>
      %250 = arith.addf %245, %249 : vector<1x256xf32>
      %c31 = arith.constant 31 : index
      %251 = memref.load %arg3[%c31] : memref<98xf32, #tpu.memory_space<smem>>
      %252 = vector.extract_strided_slice %115 {offsets = [0, 67], sizes = [1, 256], strides = [1, 1]} : vector<1x358xf32> to vector<1x256xf32>
      %253 = vector.broadcast %251 : f32 to vector<1x256xf32>
      %254 = arith.mulf %253, %252 : vector<1x256xf32>
      %255 = arith.addf %250, %254 : vector<1x256xf32>
      %c38 = arith.constant 38 : index
      %256 = memref.load %arg3[%c38] : memref<98xf32, #tpu.memory_space<smem>>
      %257 = vector.extract_strided_slice %115 {offsets = [0, 83], sizes = [1, 256], strides = [1, 1]} : vector<1x358xf32> to vector<1x256xf32>
      %258 = vector.broadcast %256 : f32 to vector<1x256xf32>
      %259 = arith.mulf %258, %257 : vector<1x256xf32>
      %260 = arith.addf %255, %259 : vector<1x256xf32>
      %c45 = arith.constant 45 : index
      %261 = memref.load %arg3[%c45] : memref<98xf32, #tpu.memory_space<smem>>
      %262 = vector.extract_strided_slice %115 {offsets = [0, 99], sizes = [1, 256], strides = [1, 1]} : vector<1x358xf32> to vector<1x256xf32>
      %263 = vector.broadcast %261 : f32 to vector<1x256xf32>
      %264 = arith.mulf %263, %262 : vector<1x256xf32>
      %265 = arith.addf %260, %264 : vector<1x256xf32>
      %266 = arith.mulf %79, %265 : vector<1x256xf32>
      %267 = arith.addf %229, %266 : vector<1x256xf32>
      %cst_53 = arith.constant 0.000000e+00 : f32
      %268 = vector.broadcast %cst_53 : f32 to vector<1x256xf32>
      %c4 = arith.constant 4 : index
      %269 = memref.load %arg3[%c4] : memref<98xf32, #tpu.memory_space<smem>>
      %270 = vector.extract_strided_slice %115 {offsets = [0, 4], sizes = [1, 256], strides = [1, 1]} : vector<1x358xf32> to vector<1x256xf32>
      %271 = vector.broadcast %269 : f32 to vector<1x256xf32>
      %272 = arith.mulf %271, %270 : vector<1x256xf32>
      %273 = arith.addf %268, %272 : vector<1x256xf32>
      %c11 = arith.constant 11 : index
      %274 = memref.load %arg3[%c11] : memref<98xf32, #tpu.memory_space<smem>>
      %275 = vector.extract_strided_slice %115 {offsets = [0, 20], sizes = [1, 256], strides = [1, 1]} : vector<1x358xf32> to vector<1x256xf32>
      %276 = vector.broadcast %274 : f32 to vector<1x256xf32>
      %277 = arith.mulf %276, %275 : vector<1x256xf32>
      %278 = arith.addf %273, %277 : vector<1x256xf32>
      %c18 = arith.constant 18 : index
      %279 = memref.load %arg3[%c18] : memref<98xf32, #tpu.memory_space<smem>>
      %280 = vector.extract_strided_slice %115 {offsets = [0, 36], sizes = [1, 256], strides = [1, 1]} : vector<1x358xf32> to vector<1x256xf32>
      %281 = vector.broadcast %279 : f32 to vector<1x256xf32>
      %282 = arith.mulf %281, %280 : vector<1x256xf32>
      %283 = arith.addf %278, %282 : vector<1x256xf32>
      %c25 = arith.constant 25 : index
      %284 = memref.load %arg3[%c25] : memref<98xf32, #tpu.memory_space<smem>>
      %285 = vector.extract_strided_slice %115 {offsets = [0, 52], sizes = [1, 256], strides = [1, 1]} : vector<1x358xf32> to vector<1x256xf32>
      %286 = vector.broadcast %284 : f32 to vector<1x256xf32>
      %287 = arith.mulf %286, %285 : vector<1x256xf32>
      %288 = arith.addf %283, %287 : vector<1x256xf32>
      %c32 = arith.constant 32 : index
      %289 = memref.load %arg3[%c32] : memref<98xf32, #tpu.memory_space<smem>>
      %290 = vector.extract_strided_slice %115 {offsets = [0, 68], sizes = [1, 256], strides = [1, 1]} : vector<1x358xf32> to vector<1x256xf32>
      %291 = vector.broadcast %289 : f32 to vector<1x256xf32>
      %292 = arith.mulf %291, %290 : vector<1x256xf32>
      %293 = arith.addf %288, %292 : vector<1x256xf32>
      %c39 = arith.constant 39 : index
      %294 = memref.load %arg3[%c39] : memref<98xf32, #tpu.memory_space<smem>>
      %295 = vector.extract_strided_slice %115 {offsets = [0, 84], sizes = [1, 256], strides = [1, 1]} : vector<1x358xf32> to vector<1x256xf32>
      %296 = vector.broadcast %294 : f32 to vector<1x256xf32>
      %297 = arith.mulf %296, %295 : vector<1x256xf32>
      %298 = arith.addf %293, %297 : vector<1x256xf32>
      %c46 = arith.constant 46 : index
      %299 = memref.load %arg3[%c46] : memref<98xf32, #tpu.memory_space<smem>>
      %300 = vector.extract_strided_slice %115 {offsets = [0, 100], sizes = [1, 256], strides = [1, 1]} : vector<1x358xf32> to vector<1x256xf32>
      %301 = vector.broadcast %299 : f32 to vector<1x256xf32>
      %302 = arith.mulf %301, %300 : vector<1x256xf32>
      %303 = arith.addf %298, %302 : vector<1x256xf32>
      %304 = arith.mulf %90, %303 : vector<1x256xf32>
      %305 = arith.addf %267, %304 : vector<1x256xf32>
      %cst_54 = arith.constant 0.000000e+00 : f32
      %306 = vector.broadcast %cst_54 : f32 to vector<1x256xf32>
      %c5 = arith.constant 5 : index
      %307 = memref.load %arg3[%c5] : memref<98xf32, #tpu.memory_space<smem>>
      %308 = vector.extract_strided_slice %115 {offsets = [0, 5], sizes = [1, 256], strides = [1, 1]} : vector<1x358xf32> to vector<1x256xf32>
      %309 = vector.broadcast %307 : f32 to vector<1x256xf32>
      %310 = arith.mulf %309, %308 : vector<1x256xf32>
      %311 = arith.addf %306, %310 : vector<1x256xf32>
      %c12 = arith.constant 12 : index
      %312 = memref.load %arg3[%c12] : memref<98xf32, #tpu.memory_space<smem>>
      %313 = vector.extract_strided_slice %115 {offsets = [0, 21], sizes = [1, 256], strides = [1, 1]} : vector<1x358xf32> to vector<1x256xf32>
      %314 = vector.broadcast %312 : f32 to vector<1x256xf32>
      %315 = arith.mulf %314, %313 : vector<1x256xf32>
      %316 = arith.addf %311, %315 : vector<1x256xf32>
      %c19 = arith.constant 19 : index
      %317 = memref.load %arg3[%c19] : memref<98xf32, #tpu.memory_space<smem>>
      %318 = vector.extract_strided_slice %115 {offsets = [0, 37], sizes = [1, 256], strides = [1, 1]} : vector<1x358xf32> to vector<1x256xf32>
      %319 = vector.broadcast %317 : f32 to vector<1x256xf32>
      %320 = arith.mulf %319, %318 : vector<1x256xf32>
      %321 = arith.addf %316, %320 : vector<1x256xf32>
      %c26 = arith.constant 26 : index
      %322 = memref.load %arg3[%c26] : memref<98xf32, #tpu.memory_space<smem>>
      %323 = vector.extract_strided_slice %115 {offsets = [0, 53], sizes = [1, 256], strides = [1, 1]} : vector<1x358xf32> to vector<1x256xf32>
      %324 = vector.broadcast %322 : f32 to vector<1x256xf32>
      %325 = arith.mulf %324, %323 : vector<1x256xf32>
      %326 = arith.addf %321, %325 : vector<1x256xf32>
      %c33 = arith.constant 33 : index
      %327 = memref.load %arg3[%c33] : memref<98xf32, #tpu.memory_space<smem>>
      %328 = vector.extract_strided_slice %115 {offsets = [0, 69], sizes = [1, 256], strides = [1, 1]} : vector<1x358xf32> to vector<1x256xf32>
      %329 = vector.broadcast %327 : f32 to vector<1x256xf32>
      %330 = arith.mulf %329, %328 : vector<1x256xf32>
      %331 = arith.addf %326, %330 : vector<1x256xf32>
      %c40 = arith.constant 40 : index
      %332 = memref.load %arg3[%c40] : memref<98xf32, #tpu.memory_space<smem>>
      %333 = vector.extract_strided_slice %115 {offsets = [0, 85], sizes = [1, 256], strides = [1, 1]} : vector<1x358xf32> to vector<1x256xf32>
      %334 = vector.broadcast %332 : f32 to vector<1x256xf32>
      %335 = arith.mulf %334, %333 : vector<1x256xf32>
      %336 = arith.addf %331, %335 : vector<1x256xf32>
      %c47 = arith.constant 47 : index
      %337 = memref.load %arg3[%c47] : memref<98xf32, #tpu.memory_space<smem>>
      %338 = vector.extract_strided_slice %115 {offsets = [0, 101], sizes = [1, 256], strides = [1, 1]} : vector<1x358xf32> to vector<1x256xf32>
      %339 = vector.broadcast %337 : f32 to vector<1x256xf32>
      %340 = arith.mulf %339, %338 : vector<1x256xf32>
      %341 = arith.addf %336, %340 : vector<1x256xf32>
      %342 = arith.mulf %101, %341 : vector<1x256xf32>
      %343 = arith.addf %305, %342 : vector<1x256xf32>
      %cst_55 = arith.constant 0.000000e+00 : f32
      %344 = vector.broadcast %cst_55 : f32 to vector<1x256xf32>
      %c6 = arith.constant 6 : index
      %345 = memref.load %arg3[%c6] : memref<98xf32, #tpu.memory_space<smem>>
      %346 = vector.extract_strided_slice %115 {offsets = [0, 6], sizes = [1, 256], strides = [1, 1]} : vector<1x358xf32> to vector<1x256xf32>
      %347 = vector.broadcast %345 : f32 to vector<1x256xf32>
      %348 = arith.mulf %347, %346 : vector<1x256xf32>
      %349 = arith.addf %344, %348 : vector<1x256xf32>
      %c13 = arith.constant 13 : index
      %350 = memref.load %arg3[%c13] : memref<98xf32, #tpu.memory_space<smem>>
      %351 = vector.extract_strided_slice %115 {offsets = [0, 22], sizes = [1, 256], strides = [1, 1]} : vector<1x358xf32> to vector<1x256xf32>
      %352 = vector.broadcast %350 : f32 to vector<1x256xf32>
      %353 = arith.mulf %352, %351 : vector<1x256xf32>
      %354 = arith.addf %349, %353 : vector<1x256xf32>
      %c20 = arith.constant 20 : index
      %355 = memref.load %arg3[%c20] : memref<98xf32, #tpu.memory_space<smem>>
      %356 = vector.extract_strided_slice %115 {offsets = [0, 38], sizes = [1, 256], strides = [1, 1]} : vector<1x358xf32> to vector<1x256xf32>
      %357 = vector.broadcast %355 : f32 to vector<1x256xf32>
      %358 = arith.mulf %357, %356 : vector<1x256xf32>
      %359 = arith.addf %354, %358 : vector<1x256xf32>
      %c27 = arith.constant 27 : index
      %360 = memref.load %arg3[%c27] : memref<98xf32, #tpu.memory_space<smem>>
      %361 = vector.extract_strided_slice %115 {offsets = [0, 54], sizes = [1, 256], strides = [1, 1]} : vector<1x358xf32> to vector<1x256xf32>
      %362 = vector.broadcast %360 : f32 to vector<1x256xf32>
      %363 = arith.mulf %362, %361 : vector<1x256xf32>
      %364 = arith.addf %359, %363 : vector<1x256xf32>
      %c34 = arith.constant 34 : index
      %365 = memref.load %arg3[%c34] : memref<98xf32, #tpu.memory_space<smem>>
      %366 = vector.extract_strided_slice %115 {offsets = [0, 70], sizes = [1, 256], strides = [1, 1]} : vector<1x358xf32> to vector<1x256xf32>
      %367 = vector.broadcast %365 : f32 to vector<1x256xf32>
      %368 = arith.mulf %367, %366 : vector<1x256xf32>
      %369 = arith.addf %364, %368 : vector<1x256xf32>
      %c41 = arith.constant 41 : index
      %370 = memref.load %arg3[%c41] : memref<98xf32, #tpu.memory_space<smem>>
      %371 = vector.extract_strided_slice %115 {offsets = [0, 86], sizes = [1, 256], strides = [1, 1]} : vector<1x358xf32> to vector<1x256xf32>
      %372 = vector.broadcast %370 : f32 to vector<1x256xf32>
      %373 = arith.mulf %372, %371 : vector<1x256xf32>
      %374 = arith.addf %369, %373 : vector<1x256xf32>
      %c48 = arith.constant 48 : index
      %375 = memref.load %arg3[%c48] : memref<98xf32, #tpu.memory_space<smem>>
      %376 = vector.extract_strided_slice %115 {offsets = [0, 102], sizes = [1, 256], strides = [1, 1]} : vector<1x358xf32> to vector<1x256xf32>
      %377 = vector.broadcast %375 : f32 to vector<1x256xf32>
      %378 = arith.mulf %377, %376 : vector<1x256xf32>
      %379 = arith.addf %374, %378 : vector<1x256xf32>
      %380 = arith.mulf %112, %379 : vector<1x256xf32>
      %381 = arith.addf %343, %380 : vector<1x256xf32>
      %382 = tpu.concatenate %113, %18, %113 in 1 : vector<1x51xf32>, vector<1x256xf32>, vector<1x51xf32> -> vector<1x358xf32>
      %cst_56 = arith.constant 0.000000e+00 : f32
      %383 = vector.broadcast %cst_56 : f32 to vector<1x256xf32>
      %c49 = arith.constant 49 : index
      %384 = memref.load %arg3[%c49] : memref<98xf32, #tpu.memory_space<smem>>
      %385 = vector.extract_strided_slice %382 {offsets = [0, 0], sizes = [1, 256], strides = [1, 1]} : vector<1x358xf32> to vector<1x256xf32>
      %386 = vector.broadcast %384 : f32 to vector<1x256xf32>
      %387 = arith.mulf %386, %385 : vector<1x256xf32>
      %388 = arith.addf %383, %387 : vector<1x256xf32>
      %c56 = arith.constant 56 : index
      %389 = memref.load %arg3[%c56] : memref<98xf32, #tpu.memory_space<smem>>
      %390 = vector.extract_strided_slice %382 {offsets = [0, 16], sizes = [1, 256], strides = [1, 1]} : vector<1x358xf32> to vector<1x256xf32>
      %391 = vector.broadcast %389 : f32 to vector<1x256xf32>
      %392 = arith.mulf %391, %390 : vector<1x256xf32>
      %393 = arith.addf %388, %392 : vector<1x256xf32>
      %c63 = arith.constant 63 : index
      %394 = memref.load %arg3[%c63] : memref<98xf32, #tpu.memory_space<smem>>
      %395 = vector.extract_strided_slice %382 {offsets = [0, 32], sizes = [1, 256], strides = [1, 1]} : vector<1x358xf32> to vector<1x256xf32>
      %396 = vector.broadcast %394 : f32 to vector<1x256xf32>
      %397 = arith.mulf %396, %395 : vector<1x256xf32>
      %398 = arith.addf %393, %397 : vector<1x256xf32>
      %c70 = arith.constant 70 : index
      %399 = memref.load %arg3[%c70] : memref<98xf32, #tpu.memory_space<smem>>
      %400 = vector.extract_strided_slice %382 {offsets = [0, 48], sizes = [1, 256], strides = [1, 1]} : vector<1x358xf32> to vector<1x256xf32>
      %401 = vector.broadcast %399 : f32 to vector<1x256xf32>
      %402 = arith.mulf %401, %400 : vector<1x256xf32>
      %403 = arith.addf %398, %402 : vector<1x256xf32>
      %c77 = arith.constant 77 : index
      %404 = memref.load %arg3[%c77] : memref<98xf32, #tpu.memory_space<smem>>
      %405 = vector.extract_strided_slice %382 {offsets = [0, 64], sizes = [1, 256], strides = [1, 1]} : vector<1x358xf32> to vector<1x256xf32>
      %406 = vector.broadcast %404 : f32 to vector<1x256xf32>
      %407 = arith.mulf %406, %405 : vector<1x256xf32>
      %408 = arith.addf %403, %407 : vector<1x256xf32>
      %c84 = arith.constant 84 : index
      %409 = memref.load %arg3[%c84] : memref<98xf32, #tpu.memory_space<smem>>
      %410 = vector.extract_strided_slice %382 {offsets = [0, 80], sizes = [1, 256], strides = [1, 1]} : vector<1x358xf32> to vector<1x256xf32>
      %411 = vector.broadcast %409 : f32 to vector<1x256xf32>
      %412 = arith.mulf %411, %410 : vector<1x256xf32>
      %413 = arith.addf %408, %412 : vector<1x256xf32>
      %c91 = arith.constant 91 : index
      %414 = memref.load %arg3[%c91] : memref<98xf32, #tpu.memory_space<smem>>
      %415 = vector.extract_strided_slice %382 {offsets = [0, 96], sizes = [1, 256], strides = [1, 1]} : vector<1x358xf32> to vector<1x256xf32>
      %416 = vector.broadcast %414 : f32 to vector<1x256xf32>
      %417 = arith.mulf %416, %415 : vector<1x256xf32>
      %418 = arith.addf %413, %417 : vector<1x256xf32>
      %419 = arith.mulf %46, %418 : vector<1x256xf32>
      %420 = arith.addf %381, %419 : vector<1x256xf32>
      %cst_57 = arith.constant 0.000000e+00 : f32
      %421 = vector.broadcast %cst_57 : f32 to vector<1x256xf32>
      %c50 = arith.constant 50 : index
      %422 = memref.load %arg3[%c50] : memref<98xf32, #tpu.memory_space<smem>>
      %423 = vector.extract_strided_slice %382 {offsets = [0, 1], sizes = [1, 256], strides = [1, 1]} : vector<1x358xf32> to vector<1x256xf32>
      %424 = vector.broadcast %422 : f32 to vector<1x256xf32>
      %425 = arith.mulf %424, %423 : vector<1x256xf32>
      %426 = arith.addf %421, %425 : vector<1x256xf32>
      %c57 = arith.constant 57 : index
      %427 = memref.load %arg3[%c57] : memref<98xf32, #tpu.memory_space<smem>>
      %428 = vector.extract_strided_slice %382 {offsets = [0, 17], sizes = [1, 256], strides = [1, 1]} : vector<1x358xf32> to vector<1x256xf32>
      %429 = vector.broadcast %427 : f32 to vector<1x256xf32>
      %430 = arith.mulf %429, %428 : vector<1x256xf32>
      %431 = arith.addf %426, %430 : vector<1x256xf32>
      %c64 = arith.constant 64 : index
      %432 = memref.load %arg3[%c64] : memref<98xf32, #tpu.memory_space<smem>>
      %433 = vector.extract_strided_slice %382 {offsets = [0, 33], sizes = [1, 256], strides = [1, 1]} : vector<1x358xf32> to vector<1x256xf32>
      %434 = vector.broadcast %432 : f32 to vector<1x256xf32>
      %435 = arith.mulf %434, %433 : vector<1x256xf32>
      %436 = arith.addf %431, %435 : vector<1x256xf32>
      %c71 = arith.constant 71 : index
      %437 = memref.load %arg3[%c71] : memref<98xf32, #tpu.memory_space<smem>>
      %438 = vector.extract_strided_slice %382 {offsets = [0, 49], sizes = [1, 256], strides = [1, 1]} : vector<1x358xf32> to vector<1x256xf32>
      %439 = vector.broadcast %437 : f32 to vector<1x256xf32>
      %440 = arith.mulf %439, %438 : vector<1x256xf32>
      %441 = arith.addf %436, %440 : vector<1x256xf32>
      %c78 = arith.constant 78 : index
      %442 = memref.load %arg3[%c78] : memref<98xf32, #tpu.memory_space<smem>>
      %443 = vector.extract_strided_slice %382 {offsets = [0, 65], sizes = [1, 256], strides = [1, 1]} : vector<1x358xf32> to vector<1x256xf32>
      %444 = vector.broadcast %442 : f32 to vector<1x256xf32>
      %445 = arith.mulf %444, %443 : vector<1x256xf32>
      %446 = arith.addf %441, %445 : vector<1x256xf32>
      %c85 = arith.constant 85 : index
      %447 = memref.load %arg3[%c85] : memref<98xf32, #tpu.memory_space<smem>>
      %448 = vector.extract_strided_slice %382 {offsets = [0, 81], sizes = [1, 256], strides = [1, 1]} : vector<1x358xf32> to vector<1x256xf32>
      %449 = vector.broadcast %447 : f32 to vector<1x256xf32>
      %450 = arith.mulf %449, %448 : vector<1x256xf32>
      %451 = arith.addf %446, %450 : vector<1x256xf32>
      %c92 = arith.constant 92 : index
      %452 = memref.load %arg3[%c92] : memref<98xf32, #tpu.memory_space<smem>>
      %453 = vector.extract_strided_slice %382 {offsets = [0, 97], sizes = [1, 256], strides = [1, 1]} : vector<1x358xf32> to vector<1x256xf32>
      %454 = vector.broadcast %452 : f32 to vector<1x256xf32>
      %455 = arith.mulf %454, %453 : vector<1x256xf32>
      %456 = arith.addf %451, %455 : vector<1x256xf32>
      %457 = arith.mulf %57, %456 : vector<1x256xf32>
      %458 = arith.addf %420, %457 : vector<1x256xf32>
      %cst_58 = arith.constant 0.000000e+00 : f32
      %459 = vector.broadcast %cst_58 : f32 to vector<1x256xf32>
      %c51 = arith.constant 51 : index
      %460 = memref.load %arg3[%c51] : memref<98xf32, #tpu.memory_space<smem>>
      %461 = vector.extract_strided_slice %382 {offsets = [0, 2], sizes = [1, 256], strides = [1, 1]} : vector<1x358xf32> to vector<1x256xf32>
      %462 = vector.broadcast %460 : f32 to vector<1x256xf32>
      %463 = arith.mulf %462, %461 : vector<1x256xf32>
      %464 = arith.addf %459, %463 : vector<1x256xf32>
      %c58 = arith.constant 58 : index
      %465 = memref.load %arg3[%c58] : memref<98xf32, #tpu.memory_space<smem>>
      %466 = vector.extract_strided_slice %382 {offsets = [0, 18], sizes = [1, 256], strides = [1, 1]} : vector<1x358xf32> to vector<1x256xf32>
      %467 = vector.broadcast %465 : f32 to vector<1x256xf32>
      %468 = arith.mulf %467, %466 : vector<1x256xf32>
      %469 = arith.addf %464, %468 : vector<1x256xf32>
      %c65 = arith.constant 65 : index
      %470 = memref.load %arg3[%c65] : memref<98xf32, #tpu.memory_space<smem>>
      %471 = vector.extract_strided_slice %382 {offsets = [0, 34], sizes = [1, 256], strides = [1, 1]} : vector<1x358xf32> to vector<1x256xf32>
      %472 = vector.broadcast %470 : f32 to vector<1x256xf32>
      %473 = arith.mulf %472, %471 : vector<1x256xf32>
      %474 = arith.addf %469, %473 : vector<1x256xf32>
      %c72 = arith.constant 72 : index
      %475 = memref.load %arg3[%c72] : memref<98xf32, #tpu.memory_space<smem>>
      %476 = vector.extract_strided_slice %382 {offsets = [0, 50], sizes = [1, 256], strides = [1, 1]} : vector<1x358xf32> to vector<1x256xf32>
      %477 = vector.broadcast %475 : f32 to vector<1x256xf32>
      %478 = arith.mulf %477, %476 : vector<1x256xf32>
      %479 = arith.addf %474, %478 : vector<1x256xf32>
      %c79 = arith.constant 79 : index
      %480 = memref.load %arg3[%c79] : memref<98xf32, #tpu.memory_space<smem>>
      %481 = vector.extract_strided_slice %382 {offsets = [0, 66], sizes = [1, 256], strides = [1, 1]} : vector<1x358xf32> to vector<1x256xf32>
      %482 = vector.broadcast %480 : f32 to vector<1x256xf32>
      %483 = arith.mulf %482, %481 : vector<1x256xf32>
      %484 = arith.addf %479, %483 : vector<1x256xf32>
      %c86 = arith.constant 86 : index
      %485 = memref.load %arg3[%c86] : memref<98xf32, #tpu.memory_space<smem>>
      %486 = vector.extract_strided_slice %382 {offsets = [0, 82], sizes = [1, 256], strides = [1, 1]} : vector<1x358xf32> to vector<1x256xf32>
      %487 = vector.broadcast %485 : f32 to vector<1x256xf32>
      %488 = arith.mulf %487, %486 : vector<1x256xf32>
      %489 = arith.addf %484, %488 : vector<1x256xf32>
      %c93 = arith.constant 93 : index
      %490 = memref.load %arg3[%c93] : memref<98xf32, #tpu.memory_space<smem>>
      %491 = vector.extract_strided_slice %382 {offsets = [0, 98], sizes = [1, 256], strides = [1, 1]} : vector<1x358xf32> to vector<1x256xf32>
      %492 = vector.broadcast %490 : f32 to vector<1x256xf32>
      %493 = arith.mulf %492, %491 : vector<1x256xf32>
      %494 = arith.addf %489, %493 : vector<1x256xf32>
      %495 = arith.mulf %68, %494 : vector<1x256xf32>
      %496 = arith.addf %458, %495 : vector<1x256xf32>
      %cst_59 = arith.constant 0.000000e+00 : f32
      %497 = vector.broadcast %cst_59 : f32 to vector<1x256xf32>
      %c52 = arith.constant 52 : index
      %498 = memref.load %arg3[%c52] : memref<98xf32, #tpu.memory_space<smem>>
      %499 = vector.extract_strided_slice %382 {offsets = [0, 3], sizes = [1, 256], strides = [1, 1]} : vector<1x358xf32> to vector<1x256xf32>
      %500 = vector.broadcast %498 : f32 to vector<1x256xf32>
      %501 = arith.mulf %500, %499 : vector<1x256xf32>
      %502 = arith.addf %497, %501 : vector<1x256xf32>
      %c59 = arith.constant 59 : index
      %503 = memref.load %arg3[%c59] : memref<98xf32, #tpu.memory_space<smem>>
      %504 = vector.extract_strided_slice %382 {offsets = [0, 19], sizes = [1, 256], strides = [1, 1]} : vector<1x358xf32> to vector<1x256xf32>
      %505 = vector.broadcast %503 : f32 to vector<1x256xf32>
      %506 = arith.mulf %505, %504 : vector<1x256xf32>
      %507 = arith.addf %502, %506 : vector<1x256xf32>
      %c66 = arith.constant 66 : index
      %508 = memref.load %arg3[%c66] : memref<98xf32, #tpu.memory_space<smem>>
      %509 = vector.extract_strided_slice %382 {offsets = [0, 35], sizes = [1, 256], strides = [1, 1]} : vector<1x358xf32> to vector<1x256xf32>
      %510 = vector.broadcast %508 : f32 to vector<1x256xf32>
      %511 = arith.mulf %510, %509 : vector<1x256xf32>
      %512 = arith.addf %507, %511 : vector<1x256xf32>
      %c73 = arith.constant 73 : index
      %513 = memref.load %arg3[%c73] : memref<98xf32, #tpu.memory_space<smem>>
      %514 = vector.extract_strided_slice %382 {offsets = [0, 51], sizes = [1, 256], strides = [1, 1]} : vector<1x358xf32> to vector<1x256xf32>
      %515 = vector.broadcast %513 : f32 to vector<1x256xf32>
      %516 = arith.mulf %515, %514 : vector<1x256xf32>
      %517 = arith.addf %512, %516 : vector<1x256xf32>
      %c80 = arith.constant 80 : index
      %518 = memref.load %arg3[%c80] : memref<98xf32, #tpu.memory_space<smem>>
      %519 = vector.extract_strided_slice %382 {offsets = [0, 67], sizes = [1, 256], strides = [1, 1]} : vector<1x358xf32> to vector<1x256xf32>
      %520 = vector.broadcast %518 : f32 to vector<1x256xf32>
      %521 = arith.mulf %520, %519 : vector<1x256xf32>
      %522 = arith.addf %517, %521 : vector<1x256xf32>
      %c87 = arith.constant 87 : index
      %523 = memref.load %arg3[%c87] : memref<98xf32, #tpu.memory_space<smem>>
      %524 = vector.extract_strided_slice %382 {offsets = [0, 83], sizes = [1, 256], strides = [1, 1]} : vector<1x358xf32> to vector<1x256xf32>
      %525 = vector.broadcast %523 : f32 to vector<1x256xf32>
      %526 = arith.mulf %525, %524 : vector<1x256xf32>
      %527 = arith.addf %522, %526 : vector<1x256xf32>
      %c94 = arith.constant 94 : index
      %528 = memref.load %arg3[%c94] : memref<98xf32, #tpu.memory_space<smem>>
      %529 = vector.extract_strided_slice %382 {offsets = [0, 99], sizes = [1, 256], strides = [1, 1]} : vector<1x358xf32> to vector<1x256xf32>
      %530 = vector.broadcast %528 : f32 to vector<1x256xf32>
      %531 = arith.mulf %530, %529 : vector<1x256xf32>
      %532 = arith.addf %527, %531 : vector<1x256xf32>
      %533 = arith.mulf %79, %532 : vector<1x256xf32>
      %534 = arith.addf %496, %533 : vector<1x256xf32>
      %cst_60 = arith.constant 0.000000e+00 : f32
      %535 = vector.broadcast %cst_60 : f32 to vector<1x256xf32>
      %c53 = arith.constant 53 : index
      %536 = memref.load %arg3[%c53] : memref<98xf32, #tpu.memory_space<smem>>
      %537 = vector.extract_strided_slice %382 {offsets = [0, 4], sizes = [1, 256], strides = [1, 1]} : vector<1x358xf32> to vector<1x256xf32>
      %538 = vector.broadcast %536 : f32 to vector<1x256xf32>
      %539 = arith.mulf %538, %537 : vector<1x256xf32>
      %540 = arith.addf %535, %539 : vector<1x256xf32>
      %c60 = arith.constant 60 : index
      %541 = memref.load %arg3[%c60] : memref<98xf32, #tpu.memory_space<smem>>
      %542 = vector.extract_strided_slice %382 {offsets = [0, 20], sizes = [1, 256], strides = [1, 1]} : vector<1x358xf32> to vector<1x256xf32>
      %543 = vector.broadcast %541 : f32 to vector<1x256xf32>
      %544 = arith.mulf %543, %542 : vector<1x256xf32>
      %545 = arith.addf %540, %544 : vector<1x256xf32>
      %c67 = arith.constant 67 : index
      %546 = memref.load %arg3[%c67] : memref<98xf32, #tpu.memory_space<smem>>
      %547 = vector.extract_strided_slice %382 {offsets = [0, 36], sizes = [1, 256], strides = [1, 1]} : vector<1x358xf32> to vector<1x256xf32>
      %548 = vector.broadcast %546 : f32 to vector<1x256xf32>
      %549 = arith.mulf %548, %547 : vector<1x256xf32>
      %550 = arith.addf %545, %549 : vector<1x256xf32>
      %c74 = arith.constant 74 : index
      %551 = memref.load %arg3[%c74] : memref<98xf32, #tpu.memory_space<smem>>
      %552 = vector.extract_strided_slice %382 {offsets = [0, 52], sizes = [1, 256], strides = [1, 1]} : vector<1x358xf32> to vector<1x256xf32>
      %553 = vector.broadcast %551 : f32 to vector<1x256xf32>
      %554 = arith.mulf %553, %552 : vector<1x256xf32>
      %555 = arith.addf %550, %554 : vector<1x256xf32>
      %c81 = arith.constant 81 : index
      %556 = memref.load %arg3[%c81] : memref<98xf32, #tpu.memory_space<smem>>
      %557 = vector.extract_strided_slice %382 {offsets = [0, 68], sizes = [1, 256], strides = [1, 1]} : vector<1x358xf32> to vector<1x256xf32>
      %558 = vector.broadcast %556 : f32 to vector<1x256xf32>
      %559 = arith.mulf %558, %557 : vector<1x256xf32>
      %560 = arith.addf %555, %559 : vector<1x256xf32>
      %c88 = arith.constant 88 : index
      %561 = memref.load %arg3[%c88] : memref<98xf32, #tpu.memory_space<smem>>
      %562 = vector.extract_strided_slice %382 {offsets = [0, 84], sizes = [1, 256], strides = [1, 1]} : vector<1x358xf32> to vector<1x256xf32>
      %563 = vector.broadcast %561 : f32 to vector<1x256xf32>
      %564 = arith.mulf %563, %562 : vector<1x256xf32>
      %565 = arith.addf %560, %564 : vector<1x256xf32>
      %c95 = arith.constant 95 : index
      %566 = memref.load %arg3[%c95] : memref<98xf32, #tpu.memory_space<smem>>
      %567 = vector.extract_strided_slice %382 {offsets = [0, 100], sizes = [1, 256], strides = [1, 1]} : vector<1x358xf32> to vector<1x256xf32>
      %568 = vector.broadcast %566 : f32 to vector<1x256xf32>
      %569 = arith.mulf %568, %567 : vector<1x256xf32>
      %570 = arith.addf %565, %569 : vector<1x256xf32>
      %571 = arith.mulf %90, %570 : vector<1x256xf32>
      %572 = arith.addf %534, %571 : vector<1x256xf32>
      %cst_61 = arith.constant 0.000000e+00 : f32
      %573 = vector.broadcast %cst_61 : f32 to vector<1x256xf32>
      %c54 = arith.constant 54 : index
      %574 = memref.load %arg3[%c54] : memref<98xf32, #tpu.memory_space<smem>>
      %575 = vector.extract_strided_slice %382 {offsets = [0, 5], sizes = [1, 256], strides = [1, 1]} : vector<1x358xf32> to vector<1x256xf32>
      %576 = vector.broadcast %574 : f32 to vector<1x256xf32>
      %577 = arith.mulf %576, %575 : vector<1x256xf32>
      %578 = arith.addf %573, %577 : vector<1x256xf32>
      %c61 = arith.constant 61 : index
      %579 = memref.load %arg3[%c61] : memref<98xf32, #tpu.memory_space<smem>>
      %580 = vector.extract_strided_slice %382 {offsets = [0, 21], sizes = [1, 256], strides = [1, 1]} : vector<1x358xf32> to vector<1x256xf32>
      %581 = vector.broadcast %579 : f32 to vector<1x256xf32>
      %582 = arith.mulf %581, %580 : vector<1x256xf32>
      %583 = arith.addf %578, %582 : vector<1x256xf32>
      %c68 = arith.constant 68 : index
      %584 = memref.load %arg3[%c68] : memref<98xf32, #tpu.memory_space<smem>>
      %585 = vector.extract_strided_slice %382 {offsets = [0, 37], sizes = [1, 256], strides = [1, 1]} : vector<1x358xf32> to vector<1x256xf32>
      %586 = vector.broadcast %584 : f32 to vector<1x256xf32>
      %587 = arith.mulf %586, %585 : vector<1x256xf32>
      %588 = arith.addf %583, %587 : vector<1x256xf32>
      %c75 = arith.constant 75 : index
      %589 = memref.load %arg3[%c75] : memref<98xf32, #tpu.memory_space<smem>>
      %590 = vector.extract_strided_slice %382 {offsets = [0, 53], sizes = [1, 256], strides = [1, 1]} : vector<1x358xf32> to vector<1x256xf32>
      %591 = vector.broadcast %589 : f32 to vector<1x256xf32>
      %592 = arith.mulf %591, %590 : vector<1x256xf32>
      %593 = arith.addf %588, %592 : vector<1x256xf32>
      %c82 = arith.constant 82 : index
      %594 = memref.load %arg3[%c82] : memref<98xf32, #tpu.memory_space<smem>>
      %595 = vector.extract_strided_slice %382 {offsets = [0, 69], sizes = [1, 256], strides = [1, 1]} : vector<1x358xf32> to vector<1x256xf32>
      %596 = vector.broadcast %594 : f32 to vector<1x256xf32>
      %597 = arith.mulf %596, %595 : vector<1x256xf32>
      %598 = arith.addf %593, %597 : vector<1x256xf32>
      %c89 = arith.constant 89 : index
      %599 = memref.load %arg3[%c89] : memref<98xf32, #tpu.memory_space<smem>>
      %600 = vector.extract_strided_slice %382 {offsets = [0, 85], sizes = [1, 256], strides = [1, 1]} : vector<1x358xf32> to vector<1x256xf32>
      %601 = vector.broadcast %599 : f32 to vector<1x256xf32>
      %602 = arith.mulf %601, %600 : vector<1x256xf32>
      %603 = arith.addf %598, %602 : vector<1x256xf32>
      %c96 = arith.constant 96 : index
      %604 = memref.load %arg3[%c96] : memref<98xf32, #tpu.memory_space<smem>>
      %605 = vector.extract_strided_slice %382 {offsets = [0, 101], sizes = [1, 256], strides = [1, 1]} : vector<1x358xf32> to vector<1x256xf32>
      %606 = vector.broadcast %604 : f32 to vector<1x256xf32>
      %607 = arith.mulf %606, %605 : vector<1x256xf32>
      %608 = arith.addf %603, %607 : vector<1x256xf32>
      %609 = arith.mulf %101, %608 : vector<1x256xf32>
      %610 = arith.addf %572, %609 : vector<1x256xf32>
      %cst_62 = arith.constant 0.000000e+00 : f32
      %611 = vector.broadcast %cst_62 : f32 to vector<1x256xf32>
      %c55 = arith.constant 55 : index
      %612 = memref.load %arg3[%c55] : memref<98xf32, #tpu.memory_space<smem>>
      %613 = vector.extract_strided_slice %382 {offsets = [0, 6], sizes = [1, 256], strides = [1, 1]} : vector<1x358xf32> to vector<1x256xf32>
      %614 = vector.broadcast %612 : f32 to vector<1x256xf32>
      %615 = arith.mulf %614, %613 : vector<1x256xf32>
      %616 = arith.addf %611, %615 : vector<1x256xf32>
      %c62 = arith.constant 62 : index
      %617 = memref.load %arg3[%c62] : memref<98xf32, #tpu.memory_space<smem>>
      %618 = vector.extract_strided_slice %382 {offsets = [0, 22], sizes = [1, 256], strides = [1, 1]} : vector<1x358xf32> to vector<1x256xf32>
      %619 = vector.broadcast %617 : f32 to vector<1x256xf32>
      %620 = arith.mulf %619, %618 : vector<1x256xf32>
      %621 = arith.addf %616, %620 : vector<1x256xf32>
      %c69 = arith.constant 69 : index
      %622 = memref.load %arg3[%c69] : memref<98xf32, #tpu.memory_space<smem>>
      %623 = vector.extract_strided_slice %382 {offsets = [0, 38], sizes = [1, 256], strides = [1, 1]} : vector<1x358xf32> to vector<1x256xf32>
      %624 = vector.broadcast %622 : f32 to vector<1x256xf32>
      %625 = arith.mulf %624, %623 : vector<1x256xf32>
      %626 = arith.addf %621, %625 : vector<1x256xf32>
      %c76 = arith.constant 76 : index
      %627 = memref.load %arg3[%c76] : memref<98xf32, #tpu.memory_space<smem>>
      %628 = vector.extract_strided_slice %382 {offsets = [0, 54], sizes = [1, 256], strides = [1, 1]} : vector<1x358xf32> to vector<1x256xf32>
      %629 = vector.broadcast %627 : f32 to vector<1x256xf32>
      %630 = arith.mulf %629, %628 : vector<1x256xf32>
      %631 = arith.addf %626, %630 : vector<1x256xf32>
      %c83 = arith.constant 83 : index
      %632 = memref.load %arg3[%c83] : memref<98xf32, #tpu.memory_space<smem>>
      %633 = vector.extract_strided_slice %382 {offsets = [0, 70], sizes = [1, 256], strides = [1, 1]} : vector<1x358xf32> to vector<1x256xf32>
      %634 = vector.broadcast %632 : f32 to vector<1x256xf32>
      %635 = arith.mulf %634, %633 : vector<1x256xf32>
      %636 = arith.addf %631, %635 : vector<1x256xf32>
      %c90 = arith.constant 90 : index
      %637 = memref.load %arg3[%c90] : memref<98xf32, #tpu.memory_space<smem>>
      %638 = vector.extract_strided_slice %382 {offsets = [0, 86], sizes = [1, 256], strides = [1, 1]} : vector<1x358xf32> to vector<1x256xf32>
      %639 = vector.broadcast %637 : f32 to vector<1x256xf32>
      %640 = arith.mulf %639, %638 : vector<1x256xf32>
      %641 = arith.addf %636, %640 : vector<1x256xf32>
      %c97 = arith.constant 97 : index
      %642 = memref.load %arg3[%c97] : memref<98xf32, #tpu.memory_space<smem>>
      %643 = vector.extract_strided_slice %382 {offsets = [0, 102], sizes = [1, 256], strides = [1, 1]} : vector<1x358xf32> to vector<1x256xf32>
      %644 = vector.broadcast %642 : f32 to vector<1x256xf32>
      %645 = arith.mulf %644, %643 : vector<1x256xf32>
      %646 = arith.addf %641, %645 : vector<1x256xf32>
      %647 = arith.mulf %112, %646 : vector<1x256xf32>
      %648 = arith.addf %610, %647 : vector<1x256xf32>
      %649 = arith.negf %648 : vector<1x256xf32>
      %650 = math.exp %649 : vector<1x256xf32>
      %cst_63 = arith.constant 1.000000e+00 : f32
      %651 = vector.broadcast %cst_63 : f32 to vector<1x256xf32>
      %652 = arith.addf %651, %650 : vector<1x256xf32>
      %653 = arith.divf %651, %652 : vector<1x256xf32>
      %654 = vector.shape_cast %653 : vector<1x256xf32> to vector<1x1x256xf32>
      %c0_64 = arith.constant 0 : index
      %c0_65 = arith.constant 0 : index
      %c0_66 = arith.constant 0 : index
      %655 = vector.load %arg4[%c0_64, %c0_65, %c0_66] : memref<1x1x256xf32, #tpu.memory_space<vmem>>, vector<1x1x256xf32>
      tpu.vector_store %arg4[%c0_64, %c0_65, %c0_66], %654 {strides = array<i32>} : memref<1x1x256xf32, #tpu.memory_space<vmem>>, vector<1x1x256xf32>,
    } else {
    }
    return
  }
  func.func @transform_0(%arg0: i32, %arg1: i32) -> (i32, i32, i32) {
    %c0_i32 = arith.constant 0 : i32
    %c0_i32_0 = arith.constant 0 : i32
    return %arg0, %arg1, %c0_i32 : i32, i32, i32
  }
  func.func @transform_1(%arg0: i32, %arg1: i32) -> i32 {
    %c0_i32 = arith.constant 0 : i32
    %c0_i32_0 = arith.constant 0 : i32
    return %c0_i32 : i32
  }
  func.func @transform_2(%arg0: i32, %arg1: i32) -> (i32, i32, i32) {
    %c0_i32 = arith.constant 0 : i32
    %c0_i32_0 = arith.constant 0 : i32
    %c0_i32_1 = arith.constant 0 : i32
    return %arg0, %c0_i32, %c0_i32_0 : i32, i32, i32
  }
}

</mosaic_0001>

<llo_original>
// kernel: tpu_custom_call.1
$region0: #{tpu_custom_call.1}
  #allocation0 [shape = 'u32[]', space=smem, size = 0x4, offset = 0x4, fixed_abs, tag = 'smem constant byte address 0x4 - core index']
  #allocation1 [shape = 'u32[144,128]{1,0:T(1,128)}', space=vmem, size = 0x12000, scoped, tag = 'internal scratch']
  #allocation2 [shape = 'f32[1,256]{1,0:T(1,128)}', space=vmem, size = 0x400, scoped, tag = 'scratch operand']
  #allocation3 [shape = 'f32[1,256]{1,0:T(1,128)}', space=vmem, size = 0x400, scoped, tag = 'scratch operand']
  %s0 = inlined_call_operand.hbm [shape: f32[2,4,256], index: 0, kind: input, shape index: {}]
  %s1 = inlined_call_operand.vmem [shape: f32[98], index: 1, kind: input, shape index: {}]
  %s2 = inlined_call_operand.hbm [shape: f32[2,1,256], index: 2, kind: output, shape index: {}]
  %s3 = sld [smem:[#allocation0]]
  $region57: #{tpu_custom_call.1} parent=0
    _
  %s5 = ssub.s32 1, %s3
  %s6 = scalar_select 0, %s5, %s3
  $region1: #{tpu_custom_call.1} parent=0
    #allocation4 [shape = 'u8[8192]{0}', space=vmem, size = 0x2000, scoped, tag = 'input window, operand 0']
    #allocation5 [shape = 's32[2]{0}', space=sflag, size = 0x8, scoped, tag = 'scoped memory for tpu_custom_call.1']
    #allocation6 [shape = 's32[2]{0}', space=sflag, size = 0x8, scoped, tag = 'scoped memory for tpu_custom_call.1']
    #allocation7 [shape = 's32[2]{0}', space=sflag, size = 0x8, scoped, tag = 'scoped memory for tpu_custom_call.1']
    #allocation8 [shape = 'u8[512]{0}', space=smem, size = 0x200, scoped, tag = 'input window, operand 1, single buffered']
    #allocation9 [shape = 'u8[2048]{0}', space=vmem, size = 0x800, scoped, tag = 'output window, operand 0']
    %7 = vsyncpa [#allocation5], 0
    %s8 = scalar_lea.sflag [#allocation5], 1
    %9 = vsyncpa %s8, 0
    %10 = vsyncpa [#allocation7], 0
    %11 = vsyncpa [#allocation6], 0
    %s12 = scalar_lea.sflag [#allocation6], 1
    %13 = vsyncpa %s12, 0
    loop: start=0, step=1, limit=4
    $region2: #{tpu_custom_call.1} parent=1 // loop_pre_header
      _
    $region3: #{tpu_custom_call.1} parent=1 // loop_header
      %s15 = sphi 0, %s19
      %p16 = scmp.ge.s32.totalorder %s15, 4
      %s22 = sphi 0, %s34
      %s23 = sphi 0, %s30
      %s24 = sphi 0, %s22
      %s25 = sphi 0, %s23
      %s26 = sphi 0, %s24
      %s27 = sphi 0, %s25
      %s39 = sphi 0, %s41
      %s42 = sphi 0, %s39
      %s43 = sphi 0, %s42
      %s59 = sphi 0, %s43
      %s63 = sphi 0, %s63
      %s65 = sphi 0, %s63
      %s66 = sphi 0, %s65
      %s80 = sphi 0, %s66
      %s86 = sphi 0, %s88
      %s89 = sphi 0, %s86
      %s90 = sphi 0, %s89
      %s106 = sphi 0, %s90
    $region4: #{tpu_custom_call.1} parent=1 // loop_header_branch
      %18 = sbr.rel (%p16) target = $region8
    $region5: #{tpu_custom_call.1} parent=1 // loop_body
      %s20 = ssub.s32 %s15, 1
      %s21 = ssub.s32 %s15, 2
      %s28 = sadd.s32 1, %s23
      %p29 = scmp.ge.s32.totalorder %s28, 1
      %s30 = scalar_select %p29, 0, %s28
      %s31 = sadd.s32 1, %s22
      %s32 = scalar_select %p29, %s31, %s22
      %p33 = scmp.ge.s32.totalorder %s32, 2
      %s34 = scalar_select %p33, 0, %s32
      %s35 = ssub.s32 %s22, %s34
      %s36 = ssub.s32 %s23, %s30
      %s37 = sor.u32 %s35, %s36
      %p38 = scmp.eq.s32.totalorder %s37, 0
      %s40 = sadd.s32 %s39, 1
      %s41 = scalar_select %p38, %s39, %s40
      %p44 = pneg %p38
      %p45 = scmp.eq.s32.totalorder %s15, 1
      %p46 = por %p44, %p45
      %p47 = scmp.ne.s32.totalorder %s39, %s42
      %p48 = scmp.eq.s32.totalorder %s15, 0
      %p49 = por %p47, %p48
      %p50 = scmp.ne.s32.totalorder %s39, %s42
      %p51 = scmp.eq.s32.totalorder %s20, 1
      %p52 = por %p50, %p51
      %p53 = scmp.ne.s32.totalorder %s42, %s43
      %p54 = scmp.eq.s32.totalorder %s20, 0
      %p55 = por %p53, %p54
      %p56 = scmp.ne.s32.totalorder %s42, %s43
      %p57 = scmp.eq.s32.totalorder %s21, 1
      %p58 = por %p56, %p57
      %p60 = scmp.ne.s32.totalorder %s43, %s59
      %p61 = scmp.eq.s32.totalorder %s21, 0
      %p62 = por %p60, %p61
      %s64 = sadd.s32 %s63, 1
      %p67 = scmp.eq.s32.totalorder %s15, 1
      %p68 = scmp.ne.s32.totalorder %s63, %s65
      %p69 = scmp.eq.s32.totalorder %s15, 0
      %p70 = por %p68, %p69
      %p71 = scmp.ne.s32.totalorder %s63, %s65
      %p72 = scmp.eq.s32.totalorder %s20, 1
      %p73 = por %p71, %p72
      %p74 = scmp.ne.s32.totalorder %s65, %s66
      %p75 = scmp.eq.s32.totalorder %s20, 0
      %p76 = por %p74, %p75
      %p77 = scmp.ne.s32.totalorder %s65, %s66
      %p78 = scmp.eq.s32.totalorder %s21, 1
      %p79 = por %p77, %p78
      %p81 = scmp.ne.s32.totalorder %s66, %s80
      %p82 = scmp.eq.s32.totalorder %s21, 0
      %p83 = por %p81, %p82
      %s84 = ssub.s32 %s22, %s34
      %p85 = scmp.eq.s32.totalorder %s84, 0
      %s87 = sadd.s32 %s86, 1
      %s88 = scalar_select %p85, %s86, %s87
      %p91 = pneg %p85
      %p92 = scmp.eq.s32.totalorder %s15, 1
      %p93 = por %p91, %p92
      %p94 = scmp.ne.s32.totalorder %s86, %s89
      %p95 = scmp.eq.s32.totalorder %s15, 0
      %p96 = por %p94, %p95
      %p97 = scmp.ne.s32.totalorder %s86, %s89
      %p98 = scmp.eq.s32.totalorder %s20, 1
      %p99 = por %p97, %p98
      %p100 = scmp.ne.s32.totalorder %s89, %s90
      %p101 = scmp.eq.s32.totalorder %s20, 0
      %p102 = por %p100, %p101
      %p103 = scmp.ne.s32.totalorder %s89, %s90
      %p104 = scmp.eq.s32.totalorder %s21, 1
      %p105 = por %p103, %p104
      %p107 = scmp.ne.s32.totalorder %s90, %s106
      %p108 = scmp.eq.s32.totalorder %s21, 0
      %p109 = por %p107, %p108
      %p110 = scmp.le.s32.totalorder 1, %s15
      %p111 = scmp.lt.s32.totalorder %s15, 3
      %p112 = pnand %p110, %p111
      %p113 = pneg %p112
      // Predicated region
      $region9: #{tpu_custom_call.1} parent=5 // pred_check
        _
      $region10: #{tpu_custom_call.1} parent=5 // pred_check_branch
        %115 = sbr.rel (%p112) target = $region12
      $region11: #{tpu_custom_call.1} parent=5 // pred_region
        %s116 = ssub.s32 %s15, 1
        // Predicated region
        $region13: #{tpu_custom_call.1} parent=11 // pred_check
          %p117 = pneg %p76
        $region14: #{tpu_custom_call.1} parent=11 // pred_check_branch
          %119 = sbr.rel (%p117) target = $region16
        $region15: #{tpu_custom_call.1} parent=11 // pred_region
          %s121 = ssub.s32 16, 16
          %122 = vsyncadd [#allocation7], %s121
          %s124 = sshll.u32 %s1, 4
          %s125 = int_to_ptr.vmem [resolvable:$true] %s124
          %127 = dma.vmem_to_smem %s125, 16, [#allocation8], [#allocation7]
        $region16: #{tpu_custom_call.1} parent=11 // pred_fallthru
          _
      $region12: #{tpu_custom_call.1} parent=5 // pred_fallthru
        _
      %p128 = scmp.lt.s32.totalorder %s15, 2
      // Predicated region
      $region17: #{tpu_custom_call.1} parent=5 // pred_check
        %p129 = pneg %p128
      $region18: #{tpu_custom_call.1} parent=5 // pred_check_branch
        %131 = sbr.rel (%p129) target = $region20
      $region19: #{tpu_custom_call.1} parent=5 // pred_region
        // Predicated region
        $region21: #{tpu_custom_call.1} parent=19 // pred_check
          %p132 = pneg %p49
        $region22: #{tpu_custom_call.1} parent=19 // pred_check_branch
          %134 = sbr.rel (%p132) target = $region24
        $region23: #{tpu_custom_call.1} parent=19 // pred_region
          %s135 = sand.u32 %s39, 1
          %s136 = scalar_lea.sflag [#allocation5], %s135
          %s137 = sand.u32 %s39, 1
          %s138 = smul.addr %s137, 8
          %s139 = scalar_lea.vmem [#allocation4], %s138
          %s141 = ssub.s32 128, 128
          %142 = vsyncadd %s136, %s141
          %s143 = smul.addr %s23, 2
          %s144 = smul.addr %s22, 2
          %s145 = sadd.s32 %s143, %s144
          %s146 = smul.addr %s145, 64
          %s147 = scalar_lea.hbm %s0, %s146
          %s149 = sshll.u32 %s139, 4
          %s150 = int_to_ptr.vmem [resolvable:$true] %s149
          %152 = dma.hbm_to_vmem [thread:$0]  %s147, 128, %s150, %s136
        $region24: #{tpu_custom_call.1} parent=19 // pred_fallthru
          _
      $region20: #{tpu_custom_call.1} parent=5 // pred_fallthru
        _
      %p153 = scmp.le.s32.totalorder 1, %s15
      %p154 = scmp.lt.s32.totalorder %s15, 3
      %p155 = pnand %p153, %p154
      %p156 = pneg %p155
      // Predicated region
      $region25: #{tpu_custom_call.1} parent=5 // pred_check
        _
      $region26: #{tpu_custom_call.1} parent=5 // pred_check_branch
        %158 = sbr.rel (%p155) target = $region28
      $region27: #{tpu_custom_call.1} parent=5 // pred_region
        %s159 = ssub.s32 %s15, 1
        %s160 = sand.u32 %s42, 1
        %s161 = scalar_lea.sflag [#allocation5], %s160
        %s162 = sand.u32 %s42, 1
        %s163 = smul.addr %s162, 8
        %s164 = scalar_lea.vmem [#allocation4], %s163
        // Predicated region
        $region29: #{tpu_custom_call.1} parent=27 // pred_check
          %p165 = pneg %p55
        $region30: #{tpu_custom_call.1} parent=27 // pred_check_branch
          %167 = sbr.rel (%p165) target = $region32
        $region31: #{tpu_custom_call.1} parent=27 // pred_region
          %168 = dma.done %s161, 128
        $region32: #{tpu_custom_call.1} parent=27 // pred_fallthru
          _
        // Predicated region
        $region33: #{tpu_custom_call.1} parent=27 // pred_check
          %p169 = pneg %p76
        $region34: #{tpu_custom_call.1} parent=27 // pred_check_branch
          %171 = sbr.rel (%p169) target = $region36
        $region35: #{tpu_custom_call.1} parent=27 // pred_region
          %172 = dma.done [#allocation7], 16
        $region36: #{tpu_custom_call.1} parent=27 // pred_fallthru
          _
        %173 = sfence
        %s174 = sand.u32 %s42, 1
        %s175 = scalar_lea.sflag [#allocation5], %s174
        %s176 = sand.u32 %s42, 1
        %s177 = smul.addr %s176, 8
        %s178 = scalar_lea.vmem [#allocation4], %s177
        %p179 = pneg %p55
        %p180 = pneg %p52
        %p181 = pneg %p76
        %p182 = pneg %p73
        %p183 = pneg %p102
        %p184 = pneg %p99
        %s185 = sand.u32 %s89, 1
        %s186 = scalar_lea.sflag [#allocation6], %s185
        %s187 = sand.u32 %s89, 1
        %s188 = smul.addr %s187, 2
        %s189 = scalar_lea.vmem [#allocation9], %s188
        %p190 = scmp.eq.s32.totalorder %s25, 0
        // Predicated region
        $region37: #{tpu_custom_call.1} parent=27 // pred_check
          %p191 = pneg %p190
        $region38: #{tpu_custom_call.1} parent=27 // pred_check_branch
          %193 = sbr.rel (%p191) target = $region40
        $region39: #{tpu_custom_call.1} parent=27 // pred_region
          %v194 = vlaneseq
          %vm195 = vcmp.ge.s32.totalorder %v194, 0
          %vm196 = vcmp.lt.s32.totalorder %v194, 256
          %vm197 = vmand %vm195, %vm196
          %198 = vst.msk [vmem:[#allocation2] sm:$0x3] %vm197, 0.0
          %199 = vst.msk [vmem:[#allocation3] sm:$0x3] %vm197, -inf
        $region40: #{tpu_custom_call.1} parent=27 // pred_fallthru
          _
        %v200 = vld [vmem:[%s164] sm:$0xff]
        %v201 = vld [vmem:[#allocation2] sm:$0x3]
        %v203 = vcombine.high %v200, %v200
        %vm205 = vcmask 1043456
        %v206 = vsel %vm205, %v200, 0.0
        %v207 = vrot.slane %v206, 4
        %v208 = vadd.f32 %v206, %v207
        %v209 = vrot.slane %v208, 2
        %v210 = vadd.f32 %v208, %v209
        %v211 = vrot.slane %v210, 1
        %v212 = vadd.f32 %v210, %v211
        %v213 = vsel %vm205, %v203, 0.0
        %v214 = vrot.slane %v213, 4
        %v215 = vadd.f32 %v213, %v214
        %v216 = vrot.slane %v215, 2
        %v217 = vadd.f32 %v215, %v216
        %v218 = vrot.slane %v217, 1
        %v219 = vadd.f32 %v217, %v218
        %v222 = vcombine.low %v212, %v219
        %v224 = vunpack.c.l.s4 1966171168
        %v225 = vunpack.c.0.s8 %v224
        %v226 = vlaneseq
        %v227 = vshrl.u32 %v226, 7
        %v228 = vsub.s32 %v225, %v227
        %v229 = vrot.slane %v222, %v228
        %v231 = vunpack.c.l.s4 1966171168
        %v232 = vunpack.c.0.s8 %v231
        %v233 = vlaneseq
        %v234 = vshrl.u32 %v233, 7
        %v235 = vsub.s32 %v232, %v234
        %v236 = vrot.slane %v229, %v235
        %v238 = vadd.f32 %v201, %v236
        %v239 = vlaneseq
        %vm240 = vcmp.ge.s32.totalorder %v239, 0
        %vm241 = vcmp.lt.s32.totalorder %v239, 256
        %vm242 = vmand %vm240, %vm241
        %243 = vst.msk [vmem:[#allocation2] sm:$0x3] %vm242, %v238
        %v244 = vld [vmem:[#allocation3] sm:$0x3]
        %v245 = vsel %vm205, %v200, -inf
        %v246 = vrot.slane %v245, 4
        %v247 = vmax.f32 %v245, %v246
        %v248 = vrot.slane %v247, 2
        %v249 = vmax.f32 %v247, %v248
        %v250 = vrot.slane %v249, 1
        %v251 = vmax.f32 %v249, %v250
        %v252 = vsel %vm205, %v203, -inf
        %v253 = vrot.slane %v252, 4
        %v254 = vmax.f32 %v252, %v253
        %v255 = vrot.slane %v254, 2
        %v256 = vmax.f32 %v254, %v255
        %v257 = vrot.slane %v256, 1
        %v258 = vmax.f32 %v256, %v257
        %v261 = vcombine.low %v251, %v258
        %v263 = vunpack.c.l.s4 1966171168
        %v264 = vunpack.c.0.s8 %v263
        %v265 = vlaneseq
        %v266 = vshrl.u32 %v265, 7
        %v267 = vsub.s32 %v264, %v266
        %v268 = vrot.slane %v261, %v267
        %v270 = vunpack.c.l.s4 1966171168
        %v271 = vunpack.c.0.s8 %v270
        %v272 = vlaneseq
        %v273 = vshrl.u32 %v272, 7
        %v274 = vsub.s32 %v271, %v273
        %v275 = vrot.slane %v268, %v274
        %v277 = vmax.f32 %v244, %v275
        %278 = vst.msk [vmem:[#allocation3] sm:$0x3] %vm242, %v277
        // Predicated region
        $region41: #{tpu_custom_call.1} parent=27 // pred_check
          %p279 = pneg %p190
        $region42: #{tpu_custom_call.1} parent=27 // pred_check_branch
          %281 = sbr.rel (%p279) target = $region44
        $region43: #{tpu_custom_call.1} parent=27 // pred_region
          %v282 = vld [vmem:[#allocation2] sm:$0x3]
          %v283 = vmul.f32 %v282, 0.25
          %v284 = vld [vmem:[#allocation3] sm:$0x3]
          %v285 = vlaneseq
          %v286 = vand.u32 %v285, 127
          %v287 = vadd.s32 %v286, 128
          %vm288 = vcmp.lt.s32.totalorder %v286, 0
          %v289 = vsub.s32 0, %v286
          %v290 = vsel %vm288, %v289, %v286
          %v291 = vshrl.u32 %v290, 4
          %v292 = vand.u32 %v290, 15
          %v293 = vsub.s32 0, %v292
          %v294 = vsel %vm288, %v293, %v292
          %vm295 = vcmp.lt.s32.totalorder %v287, 0
          %v296 = vsub.s32 0, %v287
          %v297 = vsel %vm295, %v296, %v287
          %v298 = vshrl.u32 %v297, 4
          %v299 = vand.u32 %v297, 15
          %v300 = vsub.s32 0, %v299
          %v301 = vsel %vm295, %v300, %v299
          %vm302 = vcmp.ne.s32.totalorder %v294, 0
          %vm303 = vcmp.ne.s32.totalorder %v301, 0
          %vm304 = vcmp.lt.s32.totalorder %v294, 0
          %vm305 = vcmp.lt.s32.totalorder %v301, 0
          %vm306 = vmand %vm304, %vm302
          %vm307 = vmand %vm305, %vm303
          %v308 = vadd.s32 %v294, 16
          %v309 = vadd.s32 %v301, 16
          %v310 = vsel %vm306, %v308, %v294
          %v311 = vsel %vm307, %v309, %v301
          %v312 = vadd.s32 %v310, 4294967293
          %v313 = vadd.s32 %v311, 4294967293
          %vm314 = vcmp.ge.s32.totalorder %v312, 0
          %vm315 = vcmp.ge.s32.totalorder %v313, 0
          %vm316 = vcmp.lt.s32.totalorder %v312, 16
          %vm317 = vcmp.lt.s32.totalorder %v313, 16
          %vm318 = vmand %vm314, %vm316
          %vm319 = vmand %vm315, %vm317
          %v320 = vsel %vm318, 1, 0
          %v321 = vsel %vm319, 1, 0
          %v322 = vcvt.s32.f32 %v320
          %v323 = vcvt.s32.f32 %v321
          %v324 = vadd.s32 %v310, 4294967294
          %v325 = vadd.s32 %v311, 4294967294
          %vm326 = vcmp.ge.s32.totalorder %v324, 0
          %vm327 = vcmp.ge.s32.totalorder %v325, 0
          %vm328 = vcmp.lt.s32.totalorder %v324, 16
          %vm329 = vcmp.lt.s32.totalorder %v325, 16
          %vm330 = vmand %vm326, %vm328
          %vm331 = vmand %vm327, %vm329
          %v332 = vsel %vm330, 1, 0
          %v333 = vsel %vm331, 1, 0
          %v334 = vcvt.s32.f32 %v332
          %v335 = vcvt.s32.f32 %v333
          %v336 = vadd.s32 %v310, 4294967295
          %v337 = vadd.s32 %v311, 4294967295
          %vm338 = vcmp.ge.s32.totalorder %v336, 0
          %vm339 = vcmp.ge.s32.totalorder %v337, 0
          %vm340 = vcmp.lt.s32.totalorder %v336, 16
          %vm341 = vcmp.lt.s32.totalorder %v337, 16
          %vm342 = vmand %vm338, %vm340
          %vm343 = vmand %vm339, %vm341
          %v344 = vsel %vm342, 1, 0
          %v345 = vsel %vm343, 1, 0
          %v346 = vcvt.s32.f32 %v344
          %v347 = vcvt.s32.f32 %v345
          %vm348 = vcmp.ge.s32.totalorder %v310, 0
          %vm349 = vcmp.ge.s32.totalorder %v311, 0
          %vm350 = vcmp.lt.s32.totalorder %v310, 16
          %vm351 = vcmp.lt.s32.totalorder %v311, 16
          %vm352 = vmand %vm348, %vm350
          %vm353 = vmand %vm349, %vm351
          %v354 = vsel %vm352, 1, 0
          %v355 = vsel %vm353, 1, 0
          %v356 = vcvt.s32.f32 %v354
          %v357 = vcvt.s32.f32 %v355
          %v358 = vadd.s32 %v310, 1
          %v359 = vadd.s32 %v311, 1
          %vm360 = vcmp.ge.s32.totalorder %v358, 0
          %vm361 = vcmp.ge.s32.totalorder %v359, 0
          %vm362 = vcmp.lt.s32.totalorder %v358, 16
          %vm363 = vcmp.lt.s32.totalorder %v359, 16
          %vm364 = vmand %vm360, %vm362
          %vm365 = vmand %vm361, %vm363
          %v366 = vsel %vm364, 1, 0
          %v367 = vsel %vm365, 1, 0
          %v368 = vcvt.s32.f32 %v366
          %v369 = vcvt.s32.f32 %v367
          %v370 = vadd.s32 %v310, 2
          %v371 = vadd.s32 %v311, 2
          %vm372 = vcmp.ge.s32.totalorder %v370, 0
          %vm373 = vcmp.ge.s32.totalorder %v371, 0
          %vm374 = vcmp.lt.s32.totalorder %v370, 16
          %vm375 = vcmp.lt.s32.totalorder %v371, 16
          %vm376 = vmand %vm372, %vm374
          %vm377 = vmand %vm373, %vm375
          %v378 = vsel %vm376, 1, 0
          %v379 = vsel %vm377, 1, 0
          %v380 = vcvt.s32.f32 %v378
          %v381 = vcvt.s32.f32 %v379
          %v382 = vadd.s32 %v310, 3
          %v383 = vadd.s32 %v311, 3
          %vm384 = vcmp.ge.s32.totalorder %v382, 0
          %vm385 = vcmp.ge.s32.totalorder %v383, 0
          %vm386 = vcmp.lt.s32.totalorder %v382, 16
          %vm387 = vcmp.lt.s32.totalorder %v383, 16
          %vm388 = vmand %vm384, %vm386
          %vm389 = vmand %vm385, %vm387
          %v390 = vsel %vm388, 1, 0
          %v391 = vsel %vm389, 1, 0
          %v392 = vcvt.s32.f32 %v390
          %v393 = vcvt.s32.f32 %v391
          %v395 = vlaneseq
          %v396 = vshrl.u32 %v395, 7
          %v397 = vsub.s32 0, %v396
          %v398 = vrot.slane %v283, %v397
          %v399 = vlaneseq
          %v400 = vshrl.u32 %v399, 7
          %v401 = vsub.s32 1, %v400
          %v402 = vrot.slane %v283, %v401
          %403 = vrot.lane.b32.xlu0 %v398, 51
          %v404 = vpop.permute.xlu0 %403
          %405 = vrot.lane.b32.xlu0 %v402, 51
          %v406 = vpop.permute.xlu0 %405
          %vm407 = vcmask 416768
          %v408 = vsel %vm407, %v404, %v406
          %v412 = vsel %vm407, 0.0, %v404
          %v413 = vsel %vm407, %v406, 0.0
          %s414 = sld [smem:[#allocation8]]
          %v415 = vstv %s414
          %v416 = vmul.f32 %v415, %v412
          %v417 = vmul.f32 %v415, %v408
          %v418 = vadd.f32 %v416, 0.0
          %v419 = vadd.f32 %v417, 0.0
          %s420 = sld [smem:[#allocation8 + $0x7]]
          %v421 = vstv %s420
          %v422 = vmul.f32 %v421, %v412
          %v423 = vmul.f32 %v421, %v408
          %v424 = vmul.f32 %v421, %v413
          %428 = vrot.lane.b32.xlu0 %v422, 112
          %v429 = vpop.permute.xlu0 %428
          %430 = vrot.lane.b32.xlu0 %v423, 112
          %v431 = vpop.permute.xlu0 %430
          %432 = vrot.lane.b32.xlu0 %v424, 112
          %v433 = vpop.permute.xlu0 %432
          %vm434 = vcmask 916480
          %v435 = vsel %vm434, %v429, %v431
          %v436 = vsel %vm434, %v431, %v433
          %v439 = vadd.f32 %v418, %v435
          %v440 = vadd.f32 %v419, %v436
          %s441 = sld [smem:[#allocation8 + $0xe]]
          %v442 = vstv %s441
          %v443 = vmul.f32 %v442, %v412
          %v444 = vmul.f32 %v442, %v408
          %v445 = vmul.f32 %v442, %v413
          %449 = vrot.lane.b32.xlu0 %v443, 96
          %v450 = vpop.permute.xlu0 %449
          %451 = vrot.lane.b32.xlu0 %v444, 96
          %v452 = vpop.permute.xlu0 %451
          %453 = vrot.lane.b32.xlu0 %v445, 96
          %v454 = vpop.permute.xlu0 %453
          %vm455 = vcmask 785408
          %v456 = vsel %vm455, %v450, %v452
          %v457 = vsel %vm455, %v452, %v454
          %v460 = vadd.f32 %v439, %v456
          %v461 = vadd.f32 %v440, %v457
          %s462 = sld [smem:[#allocation8 + $0x15]]
          %v463 = vstv %s462
          %v464 = vmul.f32 %v463, %v412
          %v465 = vmul.f32 %v463, %v408
          %v466 = vmul.f32 %v463, %v413
          %470 = vrot.lane.b32.xlu0 %v464, 80
          %v471 = vpop.permute.xlu0 %470
          %472 = vrot.lane.b32.xlu0 %v465, 80
          %v473 = vpop.permute.xlu0 %472
          %474 = vrot.lane.b32.xlu0 %v466, 80
          %v475 = vpop.permute.xlu0 %474
          %vm476 = vcmask 654336
          %v477 = vsel %vm476, %v471, %v473
          %v478 = vsel %vm476, %v473, %v475
          %v481 = vadd.f32 %v460, %v477
          %v482 = vadd.f32 %v461, %v478
          %s483 = sld [smem:[#allocation8 + $0x1c]]
          %v484 = vstv %s483
          %v485 = vmul.f32 %v484, %v412
          %v486 = vmul.f32 %v484, %v408
          %v487 = vmul.f32 %v484, %v413
          %491 = vrot.lane.b32.xlu0 %v485, 64
          %v492 = vpop.permute.xlu0 %491
          %493 = vrot.lane.b32.xlu0 %v486, 64
          %v494 = vpop.permute.xlu0 %493
          %495 = vrot.lane.b32.xlu0 %v487, 64
          %v496 = vpop.permute.xlu0 %495
          %vm497 = vcmask 523264
          %v498 = vsel %vm497, %v492, %v494
          %v499 = vsel %vm497, %v494, %v496
          %v502 = vadd.f32 %v481, %v498
          %v503 = vadd.f32 %v482, %v499
          %s504 = sld [smem:[#allocation8 + $0x23]]
          %v505 = vstv %s504
          %v506 = vmul.f32 %v505, %v412
          %v507 = vmul.f32 %v505, %v408
          %v508 = vmul.f32 %v505, %v413
          %512 = vrot.lane.b32.xlu0 %v506, 48
          %v513 = vpop.permute.xlu0 %512
          %514 = vrot.lane.b32.xlu0 %v507, 48
          %v515 = vpop.permute.xlu0 %514
          %516 = vrot.lane.b32.xlu0 %v508, 48
          %v517 = vpop.permute.xlu0 %516
          %vm518 = vcmask 392192
          %v519 = vsel %vm518, %v513, %v515
          %v520 = vsel %vm518, %v515, %v517
          %v523 = vadd.f32 %v502, %v519
          %v524 = vadd.f32 %v503, %v520
          %s525 = sld [smem:[#allocation8 + $0x2a]]
          %v526 = vstv %s525
          %v527 = vmul.f32 %v526, %v412
          %v528 = vmul.f32 %v526, %v408
          %v529 = vmul.f32 %v526, %v413
          %533 = vrot.lane.b32.xlu0 %v527, 32
          %v534 = vpop.permute.xlu0 %533
          %535 = vrot.lane.b32.xlu0 %v528, 32
          %v536 = vpop.permute.xlu0 %535
          %537 = vrot.lane.b32.xlu0 %v529, 32
          %v538 = vpop.permute.xlu0 %537
          %vm539 = vcmask 261120
          %v540 = vsel %vm539, %v534, %v536
          %v541 = vsel %vm539, %v536, %v538
          %v544 = vadd.f32 %v523, %v540
          %v545 = vadd.f32 %v524, %v541
          %v546 = vmul.f32 %v322, %v544
          %v547 = vmul.f32 %v323, %v545
          %v548 = vadd.f32 %v546, 0.0
          %v549 = vadd.f32 %v547, 0.0
          %s550 = sld [smem:[#allocation8 + $0x1]]
          %v551 = vstv %s550
          %v552 = vmul.f32 %v551, %v412
          %v553 = vmul.f32 %v551, %v408
          %v554 = vmul.f32 %v551, %v413
          %v555 = vadd.f32 %v552, 0.0
          %v556 = vadd.f32 %v553, 0.0
          %v557 = vadd.f32 %v554, 0.0
          %s558 = sld [smem:[#allocation8 + $0x8]]
          %v559 = vstv %s558
          %v560 = vmul.f32 %v559, %v412
          %v561 = vmul.f32 %v559, %v408
          %v562 = vmul.f32 %v559, %v413
          %566 = vrot.lane.b32.xlu0 %v560, 112
          %v567 = vpop.permute.xlu0 %566
          %568 = vrot.lane.b32.xlu0 %v561, 112
          %v569 = vpop.permute.xlu0 %568
          %570 = vrot.lane.b32.xlu0 %v562, 112
          %v571 = vpop.permute.xlu0 %570
          %v572 = vsel %vm434, %v567, %v569
          %v573 = vsel %vm434, %v569, %v571
          %v577 = vadd.f32 %v555, %v572
          %v578 = vadd.f32 %v556, %v573
          %v579 = vadd.f32 %v557, %v571
          %s580 = sld [smem:[#allocation8 + $0xf]]
          %v581 = vstv %s580
          %v582 = vmul.f32 %v581, %v412
          %v583 = vmul.f32 %v581, %v408
          %v584 = vmul.f32 %v581, %v413
          %588 = vrot.lane.b32.xlu0 %v582, 96
          %v589 = vpop.permute.xlu0 %588
          %590 = vrot.lane.b32.xlu0 %v583, 96
          %v591 = vpop.permute.xlu0 %590
          %592 = vrot.lane.b32.xlu0 %v584, 96
          %v593 = vpop.permute.xlu0 %592
          %v594 = vsel %vm455, %v589, %v591
          %v595 = vsel %vm455, %v591, %v593
          %v599 = vadd.f32 %v577, %v594
          %v600 = vadd.f32 %v578, %v595
          %v601 = vadd.f32 %v579, %v593
          %s602 = sld [smem:[#allocation8 + $0x16]]
          %v603 = vstv %s602
          %v604 = vmul.f32 %v603, %v412
          %v605 = vmul.f32 %v603, %v408
          %v606 = vmul.f32 %v603, %v413
          %610 = vrot.lane.b32.xlu0 %v604, 80
          %v611 = vpop.permute.xlu0 %610
          %612 = vrot.lane.b32.xlu0 %v605, 80
          %v613 = vpop.permute.xlu0 %612
          %614 = vrot.lane.b32.xlu0 %v606, 80
          %v615 = vpop.permute.xlu0 %614
          %v616 = vsel %vm476, %v611, %v613
          %v617 = vsel %vm476, %v613, %v615
          %v621 = vadd.f32 %v599, %v616
          %v622 = vadd.f32 %v600, %v617
          %v623 = vadd.f32 %v601, %v615
          %s624 = sld [smem:[#allocation8 + $0x1d]]
          %v625 = vstv %s624
          %v626 = vmul.f32 %v625, %v412
          %v627 = vmul.f32 %v625, %v408
          %v628 = vmul.f32 %v625, %v413
          %632 = vrot.lane.b32.xlu0 %v626, 64
          %v633 = vpop.permute.xlu0 %632
          %634 = vrot.lane.b32.xlu0 %v627, 64
          %v635 = vpop.permute.xlu0 %634
          %636 = vrot.lane.b32.xlu0 %v628, 64
          %v637 = vpop.permute.xlu0 %636
          %v638 = vsel %vm497, %v633, %v635
          %v639 = vsel %vm497, %v635, %v637
          %v643 = vadd.f32 %v621, %v638
          %v644 = vadd.f32 %v622, %v639
          %v645 = vadd.f32 %v623, %v637
          %s646 = sld [smem:[#allocation8 + $0x24]]
          %v647 = vstv %s646
          %v648 = vmul.f32 %v647, %v412
          %v649 = vmul.f32 %v647, %v408
          %v650 = vmul.f32 %v647, %v413
          %654 = vrot.lane.b32.xlu0 %v648, 48
          %v655 = vpop.permute.xlu0 %654
          %656 = vrot.lane.b32.xlu0 %v649, 48
          %v657 = vpop.permute.xlu0 %656
          %658 = vrot.lane.b32.xlu0 %v650, 48
          %v659 = vpop.permute.xlu0 %658
          %v660 = vsel %vm518, %v655, %v657
          %v661 = vsel %vm518, %v657, %v659
          %v665 = vadd.f32 %v643, %v660
          %v666 = vadd.f32 %v644, %v661
          %v667 = vadd.f32 %v645, %v659
          %s668 = sld [smem:[#allocation8 + $0x2b]]
          %v669 = vstv %s668
          %v670 = vmul.f32 %v669, %v412
          %v671 = vmul.f32 %v669, %v408
          %v672 = vmul.f32 %v669, %v413
          %676 = vrot.lane.b32.xlu0 %v670, 32
          %v677 = vpop.permute.xlu0 %676
          %678 = vrot.lane.b32.xlu0 %v671, 32
          %v679 = vpop.permute.xlu0 %678
          %680 = vrot.lane.b32.xlu0 %v672, 32
          %v681 = vpop.permute.xlu0 %680
          %v682 = vsel %vm539, %v677, %v679
          %v683 = vsel %vm539, %v679, %v681
          %v687 = vadd.f32 %v665, %v682
          %v688 = vadd.f32 %v666, %v683
          %v689 = vadd.f32 %v667, %v681
          %693 = vrot.lane.b32.xlu0 %v687, 127
          %v694 = vpop.permute.xlu0 %693
          %695 = vrot.lane.b32.xlu0 %v688, 127
          %v696 = vpop.permute.xlu0 %695
          %697 = vrot.lane.b32.xlu0 %v689, 127
          %v698 = vpop.permute.xlu0 %697
          %vm699 = vcmask 1039360
          %v700 = vsel %vm699, %v694, %v696
          %v701 = vsel %vm699, %v696, %v698
          %v704 = vmul.f32 %v334, %v700
          %v705 = vmul.f32 %v335, %v701
          %v706 = vadd.f32 %v548, %v704
          %v707 = vadd.f32 %v549, %v705
          %s708 = sld [smem:[#allocation8 + $0x2]]
          %v709 = vstv %s708
          %v710 = vmul.f32 %v709, %v412
          %v711 = vmul.f32 %v709, %v408
          %v712 = vmul.f32 %v709, %v413
          %v713 = vadd.f32 %v710, 0.0
          %v714 = vadd.f32 %v711, 0.0
          %v715 = vadd.f32 %v712, 0.0
          %s716 = sld [smem:[#allocation8 + $0x9]]
          %v717 = vstv %s716
          %v718 = vmul.f32 %v717, %v412
          %v719 = vmul.f32 %v717, %v408
          %v720 = vmul.f32 %v717, %v413
          %724 = vrot.lane.b32.xlu0 %v718, 112
          %v725 = vpop.permute.xlu0 %724
          %726 = vrot.lane.b32.xlu0 %v719, 112
          %v727 = vpop.permute.xlu0 %726
          %728 = vrot.lane.b32.xlu0 %v720, 112
          %v729 = vpop.permute.xlu0 %728
          %v730 = vsel %vm434, %v725, %v727
          %v731 = vsel %vm434, %v727, %v729
          %v735 = vadd.f32 %v713, %v730
          %v736 = vadd.f32 %v714, %v731
          %v737 = vadd.f32 %v715, %v729
          %s738 = sld [smem:[#allocation8 + $0x10]]
          %v739 = vstv %s738
          %v740 = vmul.f32 %v739, %v412
          %v741 = vmul.f32 %v739, %v408
          %v742 = vmul.f32 %v739, %v413
          %746 = vrot.lane.b32.xlu0 %v740, 96
          %v747 = vpop.permute.xlu0 %746
          %748 = vrot.lane.b32.xlu0 %v741, 96
          %v749 = vpop.permute.xlu0 %748
          %750 = vrot.lane.b32.xlu0 %v742, 96
          %v751 = vpop.permute.xlu0 %750
          %v752 = vsel %vm455, %v747, %v749
          %v753 = vsel %vm455, %v749, %v751
          %v757 = vadd.f32 %v735, %v752
          %v758 = vadd.f32 %v736, %v753
          %v759 = vadd.f32 %v737, %v751
          %s760 = sld [smem:[#allocation8 + $0x17]]
          %v761 = vstv %s760
          %v762 = vmul.f32 %v761, %v412
          %v763 = vmul.f32 %v761, %v408
          %v764 = vmul.f32 %v761, %v413
          %768 = vrot.lane.b32.xlu0 %v762, 80
          %v769 = vpop.permute.xlu0 %768
          %770 = vrot.lane.b32.xlu0 %v763, 80
          %v771 = vpop.permute.xlu0 %770
          %772 = vrot.lane.b32.xlu0 %v764, 80
          %v773 = vpop.permute.xlu0 %772
          %v774 = vsel %vm476, %v769, %v771
          %v775 = vsel %vm476, %v771, %v773
          %v779 = vadd.f32 %v757, %v774
          %v780 = vadd.f32 %v758, %v775
          %v781 = vadd.f32 %v759, %v773
          %s782 = sld [smem:[#allocation8 + $0x1e]]
          %v783 = vstv %s782
          %v784 = vmul.f32 %v783, %v412
          %v785 = vmul.f32 %v783, %v408
          %v786 = vmul.f32 %v783, %v413
          %790 = vrot.lane.b32.xlu0 %v784, 64
          %v791 = vpop.permute.xlu0 %790
          %792 = vrot.lane.b32.xlu0 %v785, 64
          %v793 = vpop.permute.xlu0 %792
          %794 = vrot.lane.b32.xlu0 %v786, 64
          %v795 = vpop.permute.xlu0 %794
          %v796 = vsel %vm497, %v791, %v793
          %v797 = vsel %vm497, %v793, %v795
          %v801 = vadd.f32 %v779, %v796
          %v802 = vadd.f32 %v780, %v797
          %v803 = vadd.f32 %v781, %v795
          %s804 = sld [smem:[#allocation8 + $0x25]]
          %v805 = vstv %s804
          %v806 = vmul.f32 %v805, %v412
          %v807 = vmul.f32 %v805, %v408
          %v808 = vmul.f32 %v805, %v413
          %812 = vrot.lane.b32.xlu0 %v806, 48
          %v813 = vpop.permute.xlu0 %812
          %814 = vrot.lane.b32.xlu0 %v807, 48
          %v815 = vpop.permute.xlu0 %814
          %816 = vrot.lane.b32.xlu0 %v808, 48
          %v817 = vpop.permute.xlu0 %816
          %v818 = vsel %vm518, %v813, %v815
          %v819 = vsel %vm518, %v815, %v817
          %v823 = vadd.f32 %v801, %v818
          %v824 = vadd.f32 %v802, %v819
          %v825 = vadd.f32 %v803, %v817
          %s826 = sld [smem:[#allocation8 + $0x2c]]
          %v827 = vstv %s826
          %v828 = vmul.f32 %v827, %v412
          %v829 = vmul.f32 %v827, %v408
          %v830 = vmul.f32 %v827, %v413
          %834 = vrot.lane.b32.xlu0 %v828, 32
          %v835 = vpop.permute.xlu0 %834
          %836 = vrot.lane.b32.xlu0 %v829, 32
          %v837 = vpop.permute.xlu0 %836
          %838 = vrot.lane.b32.xlu0 %v830, 32
          %v839 = vpop.permute.xlu0 %838
          %v840 = vsel %vm539, %v835, %v837
          %v841 = vsel %vm539, %v837, %v839
          %v845 = vadd.f32 %v823, %v840
          %v846 = vadd.f32 %v824, %v841
          %v847 = vadd.f32 %v825, %v839
          %851 = vrot.lane.b32.xlu0 %v845, 126
          %v852 = vpop.permute.xlu0 %851
          %853 = vrot.lane.b32.xlu0 %v846, 126
          %v854 = vpop.permute.xlu0 %853
          %855 = vrot.lane.b32.xlu0 %v847, 126
          %v856 = vpop.permute.xlu0 %855
          %vm857 = vcmask 1031168
          %v858 = vsel %vm857, %v852, %v854
          %v859 = vsel %vm857, %v854, %v856
          %v862 = vmul.f32 %v346, %v858
          %v863 = vmul.f32 %v347, %v859
          %v864 = vadd.f32 %v706, %v862
          %v865 = vadd.f32 %v707, %v863
          %s866 = sld [smem:[#allocation8 + $0x3]]
          %v867 = vstv %s866
          %v868 = vmul.f32 %v867, %v412
          %v869 = vmul.f32 %v867, %v408
          %v870 = vmul.f32 %v867, %v413
          %v871 = vadd.f32 %v868, 0.0
          %v872 = vadd.f32 %v869, 0.0
          %v873 = vadd.f32 %v870, 0.0
          %s874 = sld [smem:[#allocation8 + $0xa]]
          %v875 = vstv %s874
          %v876 = vmul.f32 %v875, %v412
          %v877 = vmul.f32 %v875, %v408
          %v878 = vmul.f32 %v875, %v413
          %882 = vrot.lane.b32.xlu0 %v876, 112
          %v883 = vpop.permute.xlu0 %882
          %884 = vrot.lane.b32.xlu0 %v877, 112
          %v885 = vpop.permute.xlu0 %884
          %886 = vrot.lane.b32.xlu0 %v878, 112
          %v887 = vpop.permute.xlu0 %886
          %v888 = vsel %vm434, %v883, %v885
          %v889 = vsel %vm434, %v885, %v887
          %v893 = vadd.f32 %v871, %v888
          %v894 = vadd.f32 %v872, %v889
          %v895 = vadd.f32 %v873, %v887
          %s896 = sld [smem:[#allocation8 + $0x11]]
          %v897 = vstv %s896
          %v898 = vmul.f32 %v897, %v412
          %v899 = vmul.f32 %v897, %v408
          %v900 = vmul.f32 %v897, %v413
          %904 = vrot.lane.b32.xlu0 %v898, 96
          %v905 = vpop.permute.xlu0 %904
          %906 = vrot.lane.b32.xlu0 %v899, 96
          %v907 = vpop.permute.xlu0 %906
          %908 = vrot.lane.b32.xlu0 %v900, 96
          %v909 = vpop.permute.xlu0 %908
          %v910 = vsel %vm455, %v905, %v907
          %v911 = vsel %vm455, %v907, %v909
          %v915 = vadd.f32 %v893, %v910
          %v916 = vadd.f32 %v894, %v911
          %v917 = vadd.f32 %v895, %v909
          %s918 = sld [smem:[#allocation8 + $0x18]]
          %v919 = vstv %s918
          %v920 = vmul.f32 %v919, %v412
          %v921 = vmul.f32 %v919, %v408
          %v922 = vmul.f32 %v919, %v413
          %926 = vrot.lane.b32.xlu0 %v920, 80
          %v927 = vpop.permute.xlu0 %926
          %928 = vrot.lane.b32.xlu0 %v921, 80
          %v929 = vpop.permute.xlu0 %928
          %930 = vrot.lane.b32.xlu0 %v922, 80
          %v931 = vpop.permute.xlu0 %930
          %v932 = vsel %vm476, %v927, %v929
          %v933 = vsel %vm476, %v929, %v931
          %v937 = vadd.f32 %v915, %v932
          %v938 = vadd.f32 %v916, %v933
          %v939 = vadd.f32 %v917, %v931
          %s940 = sld [smem:[#allocation8 + $0x1f]]
          %v941 = vstv %s940
          %v942 = vmul.f32 %v941, %v412
          %v943 = vmul.f32 %v941, %v408
          %v944 = vmul.f32 %v941, %v413
          %948 = vrot.lane.b32.xlu0 %v942, 64
          %v949 = vpop.permute.xlu0 %948
          %950 = vrot.lane.b32.xlu0 %v943, 64
          %v951 = vpop.permute.xlu0 %950
          %952 = vrot.lane.b32.xlu0 %v944, 64
          %v953 = vpop.permute.xlu0 %952
          %v954 = vsel %vm497, %v949, %v951
          %v955 = vsel %vm497, %v951, %v953
          %v959 = vadd.f32 %v937, %v954
          %v960 = vadd.f32 %v938, %v955
          %v961 = vadd.f32 %v939, %v953
          %s962 = sld [smem:[#allocation8 + $0x26]]
          %v963 = vstv %s962
          %v964 = vmul.f32 %v963, %v412
          %v965 = vmul.f32 %v963, %v408
          %v966 = vmul.f32 %v963, %v413
          %970 = vrot.lane.b32.xlu0 %v964, 48
          %v971 = vpop.permute.xlu0 %970
          %972 = vrot.lane.b32.xlu0 %v965, 48
          %v973 = vpop.permute.xlu0 %972
          %974 = vrot.lane.b32.xlu0 %v966, 48
          %v975 = vpop.permute.xlu0 %974
          %v976 = vsel %vm518, %v971, %v973
          %v977 = vsel %vm518, %v973, %v975
          %v981 = vadd.f32 %v959, %v976
          %v982 = vadd.f32 %v960, %v977
          %v983 = vadd.f32 %v961, %v975
          %s984 = sld [smem:[#allocation8 + $0x2d]]
          %v985 = vstv %s984
          %v986 = vmul.f32 %v985, %v412
          %v987 = vmul.f32 %v985, %v408
          %v988 = vmul.f32 %v985, %v413
          %992 = vrot.lane.b32.xlu0 %v986, 32
          %v993 = vpop.permute.xlu0 %992
          %994 = vrot.lane.b32.xlu0 %v987, 32
          %v995 = vpop.permute.xlu0 %994
          %996 = vrot.lane.b32.xlu0 %v988, 32
          %v997 = vpop.permute.xlu0 %996
          %v998 = vsel %vm539, %v993, %v995
          %v999 = vsel %vm539, %v995, %v997
          %v1003 = vadd.f32 %v981, %v998
          %v1004 = vadd.f32 %v982, %v999
          %v1005 = vadd.f32 %v983, %v997
          %1009 = vrot.lane.b32.xlu0 %v1003, 125
          %v1010 = vpop.permute.xlu0 %1009
          %1011 = vrot.lane.b32.xlu0 %v1004, 125
          %v1012 = vpop.permute.xlu0 %1011
          %1013 = vrot.lane.b32.xlu0 %v1005, 125
          %v1014 = vpop.permute.xlu0 %1013
          %vm1015 = vcmask 1022976
          %v1016 = vsel %vm1015, %v1010, %v1012
          %v1017 = vsel %vm1015, %v1012, %v1014
          %v1020 = vmul.f32 %v356, %v1016
          %v1021 = vmul.f32 %v357, %v1017
          %v1022 = vadd.f32 %v864, %v1020
          %v1023 = vadd.f32 %v865, %v1021
          %s1024 = sld [smem:[#allocation8 + $0x4]]
          %v1025 = vstv %s1024
          %v1026 = vmul.f32 %v1025, %v412
          %v1027 = vmul.f32 %v1025, %v408
          %v1028 = vmul.f32 %v1025, %v413
          %v1029 = vadd.f32 %v1026, 0.0
          %v1030 = vadd.f32 %v1027, 0.0
          %v1031 = vadd.f32 %v1028, 0.0
          %s1032 = sld [smem:[#allocation8 + $0xb]]
          %v1033 = vstv %s1032
          %v1034 = vmul.f32 %v1033, %v412
          %v1035 = vmul.f32 %v1033, %v408
          %v1036 = vmul.f32 %v1033, %v413
          %1040 = vrot.lane.b32.xlu0 %v1034, 112
          %v1041 = vpop.permute.xlu0 %1040
          %1042 = vrot.lane.b32.xlu0 %v1035, 112
          %v1043 = vpop.permute.xlu0 %1042
          %1044 = vrot.lane.b32.xlu0 %v1036, 112
          %v1045 = vpop.permute.xlu0 %1044
          %v1046 = vsel %vm434, %v1041, %v1043
          %v1047 = vsel %vm434, %v1043, %v1045
          %v1051 = vadd.f32 %v1029, %v1046
          %v1052 = vadd.f32 %v1030, %v1047
          %v1053 = vadd.f32 %v1031, %v1045
          %s1054 = sld [smem:[#allocation8 + $0x12]]
          %v1055 = vstv %s1054
          %v1056 = vmul.f32 %v1055, %v412
          %v1057 = vmul.f32 %v1055, %v408
          %v1058 = vmul.f32 %v1055, %v413
          %1062 = vrot.lane.b32.xlu0 %v1056, 96
          %v1063 = vpop.permute.xlu0 %1062
          %1064 = vrot.lane.b32.xlu0 %v1057, 96
          %v1065 = vpop.permute.xlu0 %1064
          %1066 = vrot.lane.b32.xlu0 %v1058, 96
          %v1067 = vpop.permute.xlu0 %1066
          %v1068 = vsel %vm455, %v1063, %v1065
          %v1069 = vsel %vm455, %v1065, %v1067
          %v1073 = vadd.f32 %v1051, %v1068
          %v1074 = vadd.f32 %v1052, %v1069
          %v1075 = vadd.f32 %v1053, %v1067
          %s1076 = sld [smem:[#allocation8 + $0x19]]
          %v1077 = vstv %s1076
          %v1078 = vmul.f32 %v1077, %v412
          %v1079 = vmul.f32 %v1077, %v408
          %v1080 = vmul.f32 %v1077, %v413
          %1084 = vrot.lane.b32.xlu0 %v1078, 80
          %v1085 = vpop.permute.xlu0 %1084
          %1086 = vrot.lane.b32.xlu0 %v1079, 80
          %v1087 = vpop.permute.xlu0 %1086
          %1088 = vrot.lane.b32.xlu0 %v1080, 80
          %v1089 = vpop.permute.xlu0 %1088
          %v1090 = vsel %vm476, %v1085, %v1087
          %v1091 = vsel %vm476, %v1087, %v1089
          %v1095 = vadd.f32 %v1073, %v1090
          %v1096 = vadd.f32 %v1074, %v1091
          %v1097 = vadd.f32 %v1075, %v1089
          %s1098 = sld [smem:[#allocation8 + $0x20]]
          %v1099 = vstv %s1098
          %v1100 = vmul.f32 %v1099, %v412
          %v1101 = vmul.f32 %v1099, %v408
          %v1102 = vmul.f32 %v1099, %v413
          %1106 = vrot.lane.b32.xlu0 %v1100, 64
          %v1107 = vpop.permute.xlu0 %1106
          %1108 = vrot.lane.b32.xlu0 %v1101, 64
          %v1109 = vpop.permute.xlu0 %1108
          %1110 = vrot.lane.b32.xlu0 %v1102, 64
          %v1111 = vpop.permute.xlu0 %1110
          %v1112 = vsel %vm497, %v1107, %v1109
          %v1113 = vsel %vm497, %v1109, %v1111
          %v1117 = vadd.f32 %v1095, %v1112
          %v1118 = vadd.f32 %v1096, %v1113
          %v1119 = vadd.f32 %v1097, %v1111
          %s1120 = sld [smem:[#allocation8 + $0x27]]
          %v1121 = vstv %s1120
          %v1122 = vmul.f32 %v1121, %v412
          %v1123 = vmul.f32 %v1121, %v408
          %v1124 = vmul.f32 %v1121, %v413
          %1128 = vrot.lane.b32.xlu0 %v1122, 48
          %v1129 = vpop.permute.xlu0 %1128
          %1130 = vrot.lane.b32.xlu0 %v1123, 48
          %v1131 = vpop.permute.xlu0 %1130
          %1132 = vrot.lane.b32.xlu0 %v1124, 48
          %v1133 = vpop.permute.xlu0 %1132
          %v1134 = vsel %vm518, %v1129, %v1131
          %v1135 = vsel %vm518, %v1131, %v1133
          %v1139 = vadd.f32 %v1117, %v1134
          %v1140 = vadd.f32 %v1118, %v1135
          %v1141 = vadd.f32 %v1119, %v1133
          %s1142 = sld [smem:[#allocation8 + $0x2e]]
          %v1143 = vstv %s1142
          %v1144 = vmul.f32 %v1143, %v412
          %v1145 = vmul.f32 %v1143, %v408
          %v1146 = vmul.f32 %v1143, %v413
          %1150 = vrot.lane.b32.xlu0 %v1144, 32
          %v1151 = vpop.permute.xlu0 %1150
          %1152 = vrot.lane.b32.xlu0 %v1145, 32
          %v1153 = vpop.permute.xlu0 %1152
          %1154 = vrot.lane.b32.xlu0 %v1146, 32
          %v1155 = vpop.permute.xlu0 %1154
          %v1156 = vsel %vm539, %v1151, %v1153
          %v1157 = vsel %vm539, %v1153, %v1155
          %v1161 = vadd.f32 %v1139, %v1156
          %v1162 = vadd.f32 %v1140, %v1157
          %v1163 = vadd.f32 %v1141, %v1155
          %1167 = vrot.lane.b32.xlu0 %v1161, 124
          %v1168 = vpop.permute.xlu0 %1167
          %1169 = vrot.lane.b32.xlu0 %v1162, 124
          %v1170 = vpop.permute.xlu0 %1169
          %1171 = vrot.lane.b32.xlu0 %v1163, 124
          %v1172 = vpop.permute.xlu0 %1171
          %vm1173 = vcmask 1014784
          %v1174 = vsel %vm1173, %v1168, %v1170
          %v1175 = vsel %vm1173, %v1170, %v1172
          %v1178 = vmul.f32 %v368, %v1174
          %v1179 = vmul.f32 %v369, %v1175
          %v1180 = vadd.f32 %v1022, %v1178
          %v1181 = vadd.f32 %v1023, %v1179
          %s1182 = sld [smem:[#allocation8 + $0x5]]
          %v1183 = vstv %s1182
          %v1184 = vmul.f32 %v1183, %v412
          %v1185 = vmul.f32 %v1183, %v408
          %v1186 = vmul.f32 %v1183, %v413
          %v1187 = vadd.f32 %v1184, 0.0
          %v1188 = vadd.f32 %v1185, 0.0
          %v1189 = vadd.f32 %v1186, 0.0
          %s1190 = sld [smem:[#allocation8 + $0xc]]
          %v1191 = vstv %s1190
          %v1192 = vmul.f32 %v1191, %v412
          %v1193 = vmul.f32 %v1191, %v408
          %v1194 = vmul.f32 %v1191, %v413
          %1198 = vrot.lane.b32.xlu0 %v1192, 112
          %v1199 = vpop.permute.xlu0 %1198
          %1200 = vrot.lane.b32.xlu0 %v1193, 112
          %v1201 = vpop.permute.xlu0 %1200
          %1202 = vrot.lane.b32.xlu0 %v1194, 112
          %v1203 = vpop.permute.xlu0 %1202
          %v1204 = vsel %vm434, %v1199, %v1201
          %v1205 = vsel %vm434, %v1201, %v1203
          %v1209 = vadd.f32 %v1187, %v1204
          %v1210 = vadd.f32 %v1188, %v1205
          %v1211 = vadd.f32 %v1189, %v1203
          %s1212 = sld [smem:[#allocation8 + $0x13]]
          %v1213 = vstv %s1212
          %v1214 = vmul.f32 %v1213, %v412
          %v1215 = vmul.f32 %v1213, %v408
          %v1216 = vmul.f32 %v1213, %v413
          %1220 = vrot.lane.b32.xlu0 %v1214, 96
          %v1221 = vpop.permute.xlu0 %1220
          %1222 = vrot.lane.b32.xlu0 %v1215, 96
          %v1223 = vpop.permute.xlu0 %1222
          %1224 = vrot.lane.b32.xlu0 %v1216, 96
          %v1225 = vpop.permute.xlu0 %1224
          %v1226 = vsel %vm455, %v1221, %v1223
          %v1227 = vsel %vm455, %v1223, %v1225
          %v1231 = vadd.f32 %v1209, %v1226
          %v1232 = vadd.f32 %v1210, %v1227
          %v1233 = vadd.f32 %v1211, %v1225
          %s1234 = sld [smem:[#allocation8 + $0x1a]]
          %v1235 = vstv %s1234
          %v1236 = vmul.f32 %v1235, %v412
          %v1237 = vmul.f32 %v1235, %v408
          %v1238 = vmul.f32 %v1235, %v413
          %1242 = vrot.lane.b32.xlu0 %v1236, 80
          %v1243 = vpop.permute.xlu0 %1242
          %1244 = vrot.lane.b32.xlu0 %v1237, 80
          %v1245 = vpop.permute.xlu0 %1244
          %1246 = vrot.lane.b32.xlu0 %v1238, 80
          %v1247 = vpop.permute.xlu0 %1246
          %v1248 = vsel %vm476, %v1243, %v1245
          %v1249 = vsel %vm476, %v1245, %v1247
          %v1253 = vadd.f32 %v1231, %v1248
          %v1254 = vadd.f32 %v1232, %v1249
          %v1255 = vadd.f32 %v1233, %v1247
          %s1256 = sld [smem:[#allocation8 + $0x21]]
          %v1257 = vstv %s1256
          %v1258 = vmul.f32 %v1257, %v412
          %v1259 = vmul.f32 %v1257, %v408
          %v1260 = vmul.f32 %v1257, %v413
          %1264 = vrot.lane.b32.xlu0 %v1258, 64
          %v1265 = vpop.permute.xlu0 %1264
          %1266 = vrot.lane.b32.xlu0 %v1259, 64
          %v1267 = vpop.permute.xlu0 %1266
          %1268 = vrot.lane.b32.xlu0 %v1260, 64
          %v1269 = vpop.permute.xlu0 %1268
          %v1270 = vsel %vm497, %v1265, %v1267
          %v1271 = vsel %vm497, %v1267, %v1269
          %v1275 = vadd.f32 %v1253, %v1270
          %v1276 = vadd.f32 %v1254, %v1271
          %v1277 = vadd.f32 %v1255, %v1269
          %s1278 = sld [smem:[#allocation8 + $0x28]]
          %v1279 = vstv %s1278
          %v1280 = vmul.f32 %v1279, %v412
          %v1281 = vmul.f32 %v1279, %v408
          %v1282 = vmul.f32 %v1279, %v413
          %1286 = vrot.lane.b32.xlu0 %v1280, 48
          %v1287 = vpop.permute.xlu0 %1286
          %1288 = vrot.lane.b32.xlu0 %v1281, 48
          %v1289 = vpop.permute.xlu0 %1288
          %1290 = vrot.lane.b32.xlu0 %v1282, 48
          %v1291 = vpop.permute.xlu0 %1290
          %v1292 = vsel %vm518, %v1287, %v1289
          %v1293 = vsel %vm518, %v1289, %v1291
          %v1297 = vadd.f32 %v1275, %v1292
          %v1298 = vadd.f32 %v1276, %v1293
          %v1299 = vadd.f32 %v1277, %v1291
          %s1300 = sld [smem:[#allocation8 + $0x2f]]
          %v1301 = vstv %s1300
          %v1302 = vmul.f32 %v1301, %v412
          %v1303 = vmul.f32 %v1301, %v408
          %v1304 = vmul.f32 %v1301, %v413
          %1308 = vrot.lane.b32.xlu0 %v1302, 32
          %v1309 = vpop.permute.xlu0 %1308
          %1310 = vrot.lane.b32.xlu0 %v1303, 32
          %v1311 = vpop.permute.xlu0 %1310
          %1312 = vrot.lane.b32.xlu0 %v1304, 32
          %v1313 = vpop.permute.xlu0 %1312
          %v1314 = vsel %vm539, %v1309, %v1311
          %v1315 = vsel %vm539, %v1311, %v1313
          %v1319 = vadd.f32 %v1297, %v1314
          %v1320 = vadd.f32 %v1298, %v1315
          %v1321 = vadd.f32 %v1299, %v1313
          %1325 = vrot.lane.b32.xlu0 %v1319, 123
          %v1326 = vpop.permute.xlu0 %1325
          %1327 = vrot.lane.b32.xlu0 %v1320, 123
          %v1328 = vpop.permute.xlu0 %1327
          %1329 = vrot.lane.b32.xlu0 %v1321, 123
          %v1330 = vpop.permute.xlu0 %1329
          %vm1331 = vcmask 1006592
          %v1332 = vsel %vm1331, %v1326, %v1328
          %v1333 = vsel %vm1331, %v1328, %v1330
          %v1336 = vmul.f32 %v380, %v1332
          %v1337 = vmul.f32 %v381, %v1333
          %v1338 = vadd.f32 %v1180, %v1336
          %v1339 = vadd.f32 %v1181, %v1337
          %s1340 = sld [smem:[#allocation8 + $0x6]]
          %v1341 = vstv %s1340
          %v1342 = vmul.f32 %v1341, %v412
          %v1343 = vmul.f32 %v1341, %v408
          %v1344 = vmul.f32 %v1341, %v413
          %v1345 = vadd.f32 %v1342, 0.0
          %v1346 = vadd.f32 %v1343, 0.0
          %v1347 = vadd.f32 %v1344, 0.0
          %s1348 = sld [smem:[#allocation8 + $0xd]]
          %v1349 = vstv %s1348
          %v1350 = vmul.f32 %v1349, %v412
          %v1351 = vmul.f32 %v1349, %v408
          %v1352 = vmul.f32 %v1349, %v413
          %1356 = vrot.lane.b32.xlu0 %v1350, 112
          %v1357 = vpop.permute.xlu0 %1356
          %1358 = vrot.lane.b32.xlu0 %v1351, 112
          %v1359 = vpop.permute.xlu0 %1358
          %1360 = vrot.lane.b32.xlu0 %v1352, 112
          %v1361 = vpop.permute.xlu0 %1360
          %v1362 = vsel %vm434, %v1357, %v1359
          %v1363 = vsel %vm434, %v1359, %v1361
          %v1367 = vadd.f32 %v1345, %v1362
          %v1368 = vadd.f32 %v1346, %v1363
          %v1369 = vadd.f32 %v1347, %v1361
          %s1370 = sld [smem:[#allocation8 + $0x14]]
          %v1371 = vstv %s1370
          %v1372 = vmul.f32 %v1371, %v412
          %v1373 = vmul.f32 %v1371, %v408
          %v1374 = vmul.f32 %v1371, %v413
          %1378 = vrot.lane.b32.xlu0 %v1372, 96
          %v1379 = vpop.permute.xlu0 %1378
          %1380 = vrot.lane.b32.xlu0 %v1373, 96
          %v1381 = vpop.permute.xlu0 %1380
          %1382 = vrot.lane.b32.xlu0 %v1374, 96
          %v1383 = vpop.permute.xlu0 %1382
          %v1384 = vsel %vm455, %v1379, %v1381
          %v1385 = vsel %vm455, %v1381, %v1383
          %v1389 = vadd.f32 %v1367, %v1384
          %v1390 = vadd.f32 %v1368, %v1385
          %v1391 = vadd.f32 %v1369, %v1383
          %s1392 = sld [smem:[#allocation8 + $0x1b]]
          %v1393 = vstv %s1392
          %v1394 = vmul.f32 %v1393, %v412
          %v1395 = vmul.f32 %v1393, %v408
          %v1396 = vmul.f32 %v1393, %v413
          %1400 = vrot.lane.b32.xlu0 %v1394, 80
          %v1401 = vpop.permute.xlu0 %1400
          %1402 = vrot.lane.b32.xlu0 %v1395, 80
          %v1403 = vpop.permute.xlu0 %1402
          %1404 = vrot.lane.b32.xlu0 %v1396, 80
          %v1405 = vpop.permute.xlu0 %1404
          %v1406 = vsel %vm476, %v1401, %v1403
          %v1407 = vsel %vm476, %v1403, %v1405
          %v1411 = vadd.f32 %v1389, %v1406
          %v1412 = vadd.f32 %v1390, %v1407
          %v1413 = vadd.f32 %v1391, %v1405
          %s1414 = sld [smem:[#allocation8 + $0x22]]
          %v1415 = vstv %s1414
          %v1416 = vmul.f32 %v1415, %v412
          %v1417 = vmul.f32 %v1415, %v408
          %v1418 = vmul.f32 %v1415, %v413
          %1422 = vrot.lane.b32.xlu0 %v1416, 64
          %v1423 = vpop.permute.xlu0 %1422
          %1424 = vrot.lane.b32.xlu0 %v1417, 64
          %v1425 = vpop.permute.xlu0 %1424
          %1426 = vrot.lane.b32.xlu0 %v1418, 64
          %v1427 = vpop.permute.xlu0 %1426
          %v1428 = vsel %vm497, %v1423, %v1425
          %v1429 = vsel %vm497, %v1425, %v1427
          %v1433 = vadd.f32 %v1411, %v1428
          %v1434 = vadd.f32 %v1412, %v1429
          %v1435 = vadd.f32 %v1413, %v1427
          %s1436 = sld [smem:[#allocation8 + $0x29]]
          %v1437 = vstv %s1436
          %v1438 = vmul.f32 %v1437, %v412
          %v1439 = vmul.f32 %v1437, %v408
          %v1440 = vmul.f32 %v1437, %v413
          %1444 = vrot.lane.b32.xlu0 %v1438, 48
          %v1445 = vpop.permute.xlu0 %1444
          %1446 = vrot.lane.b32.xlu0 %v1439, 48
          %v1447 = vpop.permute.xlu0 %1446
          %1448 = vrot.lane.b32.xlu0 %v1440, 48
          %v1449 = vpop.permute.xlu0 %1448
          %v1450 = vsel %vm518, %v1445, %v1447
          %v1451 = vsel %vm518, %v1447, %v1449
          %v1455 = vadd.f32 %v1433, %v1450
          %v1456 = vadd.f32 %v1434, %v1451
          %v1457 = vadd.f32 %v1435, %v1449
          %s1458 = sld [smem:[#allocation8 + $0x30]]
          %v1459 = vstv %s1458
          %v1460 = vmul.f32 %v1459, %v412
          %v1461 = vmul.f32 %v1459, %v408
          %v1462 = vmul.f32 %v1459, %v413
          %1466 = vrot.lane.b32.xlu0 %v1460, 32
          %v1467 = vpop.permute.xlu0 %1466
          %1468 = vrot.lane.b32.xlu0 %v1461, 32
          %v1469 = vpop.permute.xlu0 %1468
          %1470 = vrot.lane.b32.xlu0 %v1462, 32
          %v1471 = vpop.permute.xlu0 %1470
          %v1472 = vsel %vm539, %v1467, %v1469
          %v1473 = vsel %vm539, %v1469, %v1471
          %v1477 = vadd.f32 %v1455, %v1472
          %v1478 = vadd.f32 %v1456, %v1473
          %v1479 = vadd.f32 %v1457, %v1471
          %1483 = vrot.lane.b32.xlu0 %v1477, 122
          %v1484 = vpop.permute.xlu0 %1483
          %1485 = vrot.lane.b32.xlu0 %v1478, 122
          %v1486 = vpop.permute.xlu0 %1485
          %1487 = vrot.lane.b32.xlu0 %v1479, 122
          %v1488 = vpop.permute.xlu0 %1487
          %vm1489 = vcmask 998400
          %v1490 = vsel %vm1489, %v1484, %v1486
          %v1491 = vsel %vm1489, %v1486, %v1488
          %v1494 = vmul.f32 %v392, %v1490
          %v1495 = vmul.f32 %v393, %v1491
          %v1496 = vadd.f32 %v1338, %v1494
          %v1497 = vadd.f32 %v1339, %v1495
          %v1499 = vlaneseq
          %v1500 = vshrl.u32 %v1499, 7
          %v1501 = vsub.s32 0, %v1500
          %v1502 = vrot.slane %v284, %v1501
          %v1503 = vlaneseq
          %v1504 = vshrl.u32 %v1503, 7
          %v1505 = vsub.s32 1, %v1504
          %v1506 = vrot.slane %v284, %v1505
          %1507 = vrot.lane.b32.xlu0 %v1502, 51
          %v1508 = vpop.permute.xlu0 %1507
          %1509 = vrot.lane.b32.xlu0 %v1506, 51
          %v1510 = vpop.permute.xlu0 %1509
          %v1511 = vsel %vm407, %v1508, %v1510
          %v1515 = vsel %vm407, 0.0, %v1508
          %v1516 = vsel %vm407, %v1510, 0.0
          %s1517 = sld [smem:[#allocation8 + $0x31]]
          %v1518 = vstv %s1517
          %v1519 = vmul.f32 %v1518, %v1515
          %v1520 = vmul.f32 %v1518, %v1511
          %v1521 = vadd.f32 %v1519, 0.0
          %v1522 = vadd.f32 %v1520, 0.0
          %s1523 = sld [smem:[#allocation8 + $0x38]]
          %v1524 = vstv %s1523
          %v1525 = vmul.f32 %v1524, %v1515
          %v1526 = vmul.f32 %v1524, %v1511
          %v1527 = vmul.f32 %v1524, %v1516
          %1531 = vrot.lane.b32.xlu0 %v1525, 112
          %v1532 = vpop.permute.xlu0 %1531
          %1533 = vrot.lane.b32.xlu0 %v1526, 112
          %v1534 = vpop.permute.xlu0 %1533
          %1535 = vrot.lane.b32.xlu0 %v1527, 112
          %v1536 = vpop.permute.xlu0 %1535
          %v1537 = vsel %vm434, %v1532, %v1534
          %v1538 = vsel %vm434, %v1534, %v1536
          %v1541 = vadd.f32 %v1521, %v1537
          %v1542 = vadd.f32 %v1522, %v1538
          %s1543 = sld [smem:[#allocation8 + $0x3f]]
          %v1544 = vstv %s1543
          %v1545 = vmul.f32 %v1544, %v1515
          %v1546 = vmul.f32 %v1544, %v1511
          %v1547 = vmul.f32 %v1544, %v1516
          %1551 = vrot.lane.b32.xlu0 %v1545, 96
          %v1552 = vpop.permute.xlu0 %1551
          %1553 = vrot.lane.b32.xlu0 %v1546, 96
          %v1554 = vpop.permute.xlu0 %1553
          %1555 = vrot.lane.b32.xlu0 %v1547, 96
          %v1556 = vpop.permute.xlu0 %1555
          %v1557 = vsel %vm455, %v1552, %v1554
          %v1558 = vsel %vm455, %v1554, %v1556
          %v1561 = vadd.f32 %v1541, %v1557
          %v1562 = vadd.f32 %v1542, %v1558
          %s1563 = sld [smem:[#allocation8 + $0x46]]
          %v1564 = vstv %s1563
          %v1565 = vmul.f32 %v1564, %v1515
          %v1566 = vmul.f32 %v1564, %v1511
          %v1567 = vmul.f32 %v1564, %v1516
          %1571 = vrot.lane.b32.xlu0 %v1565, 80
          %v1572 = vpop.permute.xlu0 %1571
          %1573 = vrot.lane.b32.xlu0 %v1566, 80
          %v1574 = vpop.permute.xlu0 %1573
          %1575 = vrot.lane.b32.xlu0 %v1567, 80
          %v1576 = vpop.permute.xlu0 %1575
          %v1577 = vsel %vm476, %v1572, %v1574
          %v1578 = vsel %vm476, %v1574, %v1576
          %v1581 = vadd.f32 %v1561, %v1577
          %v1582 = vadd.f32 %v1562, %v1578
          %s1583 = sld [smem:[#allocation8 + $0x4d]]
          %v1584 = vstv %s1583
          %v1585 = vmul.f32 %v1584, %v1515
          %v1586 = vmul.f32 %v1584, %v1511
          %v1587 = vmul.f32 %v1584, %v1516
          %1591 = vrot.lane.b32.xlu0 %v1585, 64
          %v1592 = vpop.permute.xlu0 %1591
          %1593 = vrot.lane.b32.xlu0 %v1586, 64
          %v1594 = vpop.permute.xlu0 %1593
          %1595 = vrot.lane.b32.xlu0 %v1587, 64
          %v1596 = vpop.permute.xlu0 %1595
          %v1597 = vsel %vm497, %v1592, %v1594
          %v1598 = vsel %vm497, %v1594, %v1596
          %v1601 = vadd.f32 %v1581, %v1597
          %v1602 = vadd.f32 %v1582, %v1598
          %s1603 = sld [smem:[#allocation8 + $0x54]]
          %v1604 = vstv %s1603
          %v1605 = vmul.f32 %v1604, %v1515
          %v1606 = vmul.f32 %v1604, %v1511
          %v1607 = vmul.f32 %v1604, %v1516
          %1611 = vrot.lane.b32.xlu0 %v1605, 48
          %v1612 = vpop.permute.xlu0 %1611
          %1613 = vrot.lane.b32.xlu0 %v1606, 48
          %v1614 = vpop.permute.xlu0 %1613
          %1615 = vrot.lane.b32.xlu0 %v1607, 48
          %v1616 = vpop.permute.xlu0 %1615
          %v1617 = vsel %vm518, %v1612, %v1614
          %v1618 = vsel %vm518, %v1614, %v1616
          %v1621 = vadd.f32 %v1601, %v1617
          %v1622 = vadd.f32 %v1602, %v1618
          %s1623 = sld [smem:[#allocation8 + $0x5b]]
          %v1624 = vstv %s1623
          %v1625 = vmul.f32 %v1624, %v1515
          %v1626 = vmul.f32 %v1624, %v1511
          %v1627 = vmul.f32 %v1624, %v1516
          %1631 = vrot.lane.b32.xlu0 %v1625, 32
          %v1632 = vpop.permute.xlu0 %1631
          %1633 = vrot.lane.b32.xlu0 %v1626, 32
          %v1634 = vpop.permute.xlu0 %1633
          %1635 = vrot.lane.b32.xlu0 %v1627, 32
          %v1636 = vpop.permute.xlu0 %1635
          %v1637 = vsel %vm539, %v1632, %v1634
          %v1638 = vsel %vm539, %v1634, %v1636
          %v1641 = vadd.f32 %v1621, %v1637
          %v1642 = vadd.f32 %v1622, %v1638
          %v1643 = vmul.f32 %v322, %v1641
          %v1644 = vmul.f32 %v323, %v1642
          %v1645 = vadd.f32 %v1496, %v1643
          %v1646 = vadd.f32 %v1497, %v1644
          %s1647 = sld [smem:[#allocation8 + $0x32]]
          %v1648 = vstv %s1647
          %v1649 = vmul.f32 %v1648, %v1515
          %v1650 = vmul.f32 %v1648, %v1511
          %v1651 = vmul.f32 %v1648, %v1516
          %v1652 = vadd.f32 %v1649, 0.0
          %v1653 = vadd.f32 %v1650, 0.0
          %v1654 = vadd.f32 %v1651, 0.0
          %s1655 = sld [smem:[#allocation8 + $0x39]]
          %v1656 = vstv %s1655
          %v1657 = vmul.f32 %v1656, %v1515
          %v1658 = vmul.f32 %v1656, %v1511
          %v1659 = vmul.f32 %v1656, %v1516
          %1663 = vrot.lane.b32.xlu0 %v1657, 112
          %v1664 = vpop.permute.xlu0 %1663
          %1665 = vrot.lane.b32.xlu0 %v1658, 112
          %v1666 = vpop.permute.xlu0 %1665
          %1667 = vrot.lane.b32.xlu0 %v1659, 112
          %v1668 = vpop.permute.xlu0 %1667
          %v1669 = vsel %vm434, %v1664, %v1666
          %v1670 = vsel %vm434, %v1666, %v1668
          %v1674 = vadd.f32 %v1652, %v1669
          %v1675 = vadd.f32 %v1653, %v1670
          %v1676 = vadd.f32 %v1654, %v1668
          %s1677 = sld [smem:[#allocation8 + $0x40]]
          %v1678 = vstv %s1677
          %v1679 = vmul.f32 %v1678, %v1515
          %v1680 = vmul.f32 %v1678, %v1511
          %v1681 = vmul.f32 %v1678, %v1516
          %1685 = vrot.lane.b32.xlu0 %v1679, 96
          %v1686 = vpop.permute.xlu0 %1685
          %1687 = vrot.lane.b32.xlu0 %v1680, 96
          %v1688 = vpop.permute.xlu0 %1687
          %1689 = vrot.lane.b32.xlu0 %v1681, 96
          %v1690 = vpop.permute.xlu0 %1689
          %v1691 = vsel %vm455, %v1686, %v1688
          %v1692 = vsel %vm455, %v1688, %v1690
          %v1696 = vadd.f32 %v1674, %v1691
          %v1697 = vadd.f32 %v1675, %v1692
          %v1698 = vadd.f32 %v1676, %v1690
          %s1699 = sld [smem:[#allocation8 + $0x47]]
          %v1700 = vstv %s1699
          %v1701 = vmul.f32 %v1700, %v1515
          %v1702 = vmul.f32 %v1700, %v1511
          %v1703 = vmul.f32 %v1700, %v1516
          %1707 = vrot.lane.b32.xlu0 %v1701, 80
          %v1708 = vpop.permute.xlu0 %1707
          %1709 = vrot.lane.b32.xlu0 %v1702, 80
          %v1710 = vpop.permute.xlu0 %1709
          %1711 = vrot.lane.b32.xlu0 %v1703, 80
          %v1712 = vpop.permute.xlu0 %1711
          %v1713 = vsel %vm476, %v1708, %v1710
          %v1714 = vsel %vm476, %v1710, %v1712
          %v1718 = vadd.f32 %v1696, %v1713
          %v1719 = vadd.f32 %v1697, %v1714
          %v1720 = vadd.f32 %v1698, %v1712
          %s1721 = sld [smem:[#allocation8 + $0x4e]]
          %v1722 = vstv %s1721
          %v1723 = vmul.f32 %v1722, %v1515
          %v1724 = vmul.f32 %v1722, %v1511
          %v1725 = vmul.f32 %v1722, %v1516
          %1729 = vrot.lane.b32.xlu0 %v1723, 64
          %v1730 = vpop.permute.xlu0 %1729
          %1731 = vrot.lane.b32.xlu0 %v1724, 64
          %v1732 = vpop.permute.xlu0 %1731
          %1733 = vrot.lane.b32.xlu0 %v1725, 64
          %v1734 = vpop.permute.xlu0 %1733
          %v1735 = vsel %vm497, %v1730, %v1732
          %v1736 = vsel %vm497, %v1732, %v1734
          %v1740 = vadd.f32 %v1718, %v1735
          %v1741 = vadd.f32 %v1719, %v1736
          %v1742 = vadd.f32 %v1720, %v1734
          %s1743 = sld [smem:[#allocation8 + $0x55]]
          %v1744 = vstv %s1743
          %v1745 = vmul.f32 %v1744, %v1515
          %v1746 = vmul.f32 %v1744, %v1511
          %v1747 = vmul.f32 %v1744, %v1516
          %1751 = vrot.lane.b32.xlu0 %v1745, 48
          %v1752 = vpop.permute.xlu0 %1751
          %1753 = vrot.lane.b32.xlu0 %v1746, 48
          %v1754 = vpop.permute.xlu0 %1753
          %1755 = vrot.lane.b32.xlu0 %v1747, 48
          %v1756 = vpop.permute.xlu0 %1755
          %v1757 = vsel %vm518, %v1752, %v1754
          %v1758 = vsel %vm518, %v1754, %v1756
          %v1762 = vadd.f32 %v1740, %v1757
          %v1763 = vadd.f32 %v1741, %v1758
          %v1764 = vadd.f32 %v1742, %v1756
          %s1765 = sld [smem:[#allocation8 + $0x5c]]
          %v1766 = vstv %s1765
          %v1767 = vmul.f32 %v1766, %v1515
          %v1768 = vmul.f32 %v1766, %v1511
          %v1769 = vmul.f32 %v1766, %v1516
          %1773 = vrot.lane.b32.xlu0 %v1767, 32
          %v1774 = vpop.permute.xlu0 %1773
          %1775 = vrot.lane.b32.xlu0 %v1768, 32
          %v1776 = vpop.permute.xlu0 %1775
          %1777 = vrot.lane.b32.xlu0 %v1769, 32
          %v1778 = vpop.permute.xlu0 %1777
          %v1779 = vsel %vm539, %v1774, %v1776
          %v1780 = vsel %vm539, %v1776, %v1778
          %v1784 = vadd.f32 %v1762, %v1779
          %v1785 = vadd.f32 %v1763, %v1780
          %v1786 = vadd.f32 %v1764, %v1778
          %1790 = vrot.lane.b32.xlu0 %v1784, 127
          %v1791 = vpop.permute.xlu0 %1790
          %1792 = vrot.lane.b32.xlu0 %v1785, 127
          %v1793 = vpop.permute.xlu0 %1792
          %1794 = vrot.lane.b32.xlu0 %v1786, 127
          %v1795 = vpop.permute.xlu0 %1794
          %v1796 = vsel %vm699, %v1791, %v1793
          %v1797 = vsel %vm699, %v1793, %v1795
          %v1800 = vmul.f32 %v334, %v1796
          %v1801 = vmul.f32 %v335, %v1797
          %v1802 = vadd.f32 %v1645, %v1800
          %v1803 = vadd.f32 %v1646, %v1801
          %s1804 = sld [smem:[#allocation8 + $0x33]]
          %v1805 = vstv %s1804
          %v1806 = vmul.f32 %v1805, %v1515
          %v1807 = vmul.f32 %v1805, %v1511
          %v1808 = vmul.f32 %v1805, %v1516
          %v1809 = vadd.f32 %v1806, 0.0
          %v1810 = vadd.f32 %v1807, 0.0
          %v1811 = vadd.f32 %v1808, 0.0
          %s1812 = sld [smem:[#allocation8 + $0x3a]]
          %v1813 = vstv %s1812
          %v1814 = vmul.f32 %v1813, %v1515
          %v1815 = vmul.f32 %v1813, %v1511
          %v1816 = vmul.f32 %v1813, %v1516
          %1820 = vrot.lane.b32.xlu0 %v1814, 112
          %v1821 = vpop.permute.xlu0 %1820
          %1822 = vrot.lane.b32.xlu0 %v1815, 112
          %v1823 = vpop.permute.xlu0 %1822
          %1824 = vrot.lane.b32.xlu0 %v1816, 112
          %v1825 = vpop.permute.xlu0 %1824
          %v1826 = vsel %vm434, %v1821, %v1823
          %v1827 = vsel %vm434, %v1823, %v1825
          %v1831 = vadd.f32 %v1809, %v1826
          %v1832 = vadd.f32 %v1810, %v1827
          %v1833 = vadd.f32 %v1811, %v1825
          %s1834 = sld [smem:[#allocation8 + $0x41]]
          %v1835 = vstv %s1834
          %v1836 = vmul.f32 %v1835, %v1515
          %v1837 = vmul.f32 %v1835, %v1511
          %v1838 = vmul.f32 %v1835, %v1516
          %1842 = vrot.lane.b32.xlu0 %v1836, 96
          %v1843 = vpop.permute.xlu0 %1842
          %1844 = vrot.lane.b32.xlu0 %v1837, 96
          %v1845 = vpop.permute.xlu0 %1844
          %1846 = vrot.lane.b32.xlu0 %v1838, 96
          %v1847 = vpop.permute.xlu0 %1846
          %v1848 = vsel %vm455, %v1843, %v1845
          %v1849 = vsel %vm455, %v1845, %v1847
          %v1853 = vadd.f32 %v1831, %v1848
          %v1854 = vadd.f32 %v1832, %v1849
          %v1855 = vadd.f32 %v1833, %v1847
          %s1856 = sld [smem:[#allocation8 + $0x48]]
          %v1857 = vstv %s1856
          %v1858 = vmul.f32 %v1857, %v1515
          %v1859 = vmul.f32 %v1857, %v1511
          %v1860 = vmul.f32 %v1857, %v1516
          %1864 = vrot.lane.b32.xlu0 %v1858, 80
          %v1865 = vpop.permute.xlu0 %1864
          %1866 = vrot.lane.b32.xlu0 %v1859, 80
          %v1867 = vpop.permute.xlu0 %1866
          %1868 = vrot.lane.b32.xlu0 %v1860, 80
          %v1869 = vpop.permute.xlu0 %1868
          %v1870 = vsel %vm476, %v1865, %v1867
          %v1871 = vsel %vm476, %v1867, %v1869
          %v1875 = vadd.f32 %v1853, %v1870
          %v1876 = vadd.f32 %v1854, %v1871
          %v1877 = vadd.f32 %v1855, %v1869
          %s1878 = sld [smem:[#allocation8 + $0x4f]]
          %v1879 = vstv %s1878
          %v1880 = vmul.f32 %v1879, %v1515
          %v1881 = vmul.f32 %v1879, %v1511
          %v1882 = vmul.f32 %v1879, %v1516
          %1886 = vrot.lane.b32.xlu0 %v1880, 64
          %v1887 = vpop.permute.xlu0 %1886
          %1888 = vrot.lane.b32.xlu0 %v1881, 64
          %v1889 = vpop.permute.xlu0 %1888
          %1890 = vrot.lane.b32.xlu0 %v1882, 64
          %v1891 = vpop.permute.xlu0 %1890
          %v1892 = vsel %vm497, %v1887, %v1889
          %v1893 = vsel %vm497, %v1889, %v1891
          %v1897 = vadd.f32 %v1875, %v1892
          %v1898 = vadd.f32 %v1876, %v1893
          %v1899 = vadd.f32 %v1877, %v1891
          %s1900 = sld [smem:[#allocation8 + $0x56]]
          %v1901 = vstv %s1900
          %v1902 = vmul.f32 %v1901, %v1515
          %v1903 = vmul.f32 %v1901, %v1511
          %v1904 = vmul.f32 %v1901, %v1516
          %1908 = vrot.lane.b32.xlu0 %v1902, 48
          %v1909 = vpop.permute.xlu0 %1908
          %1910 = vrot.lane.b32.xlu0 %v1903, 48
          %v1911 = vpop.permute.xlu0 %1910
          %1912 = vrot.lane.b32.xlu0 %v1904, 48
          %v1913 = vpop.permute.xlu0 %1912
          %v1914 = vsel %vm518, %v1909, %v1911
          %v1915 = vsel %vm518, %v1911, %v1913
          %v1919 = vadd.f32 %v1897, %v1914
          %v1920 = vadd.f32 %v1898, %v1915
          %v1921 = vadd.f32 %v1899, %v1913
          %s1922 = sld [smem:[#allocation8 + $0x5d]]
          %v1923 = vstv %s1922
          %v1924 = vmul.f32 %v1923, %v1515
          %v1925 = vmul.f32 %v1923, %v1511
          %v1926 = vmul.f32 %v1923, %v1516
          %1930 = vrot.lane.b32.xlu0 %v1924, 32
          %v1931 = vpop.permute.xlu0 %1930
          %1932 = vrot.lane.b32.xlu0 %v1925, 32
          %v1933 = vpop.permute.xlu0 %1932
          %1934 = vrot.lane.b32.xlu0 %v1926, 32
          %v1935 = vpop.permute.xlu0 %1934
          %v1936 = vsel %vm539, %v1931, %v1933
          %v1937 = vsel %vm539, %v1933, %v1935
          %v1941 = vadd.f32 %v1919, %v1936
          %v1942 = vadd.f32 %v1920, %v1937
          %v1943 = vadd.f32 %v1921, %v1935
          %1947 = vrot.lane.b32.xlu0 %v1941, 126
          %v1948 = vpop.permute.xlu0 %1947
          %1949 = vrot.lane.b32.xlu0 %v1942, 126
          %v1950 = vpop.permute.xlu0 %1949
          %1951 = vrot.lane.b32.xlu0 %v1943, 126
          %v1952 = vpop.permute.xlu0 %1951
          %v1953 = vsel %vm857, %v1948, %v1950
          %v1954 = vsel %vm857, %v1950, %v1952
          %v1957 = vmul.f32 %v346, %v1953
          %v1958 = vmul.f32 %v347, %v1954
          %v1959 = vadd.f32 %v1802, %v1957
          %v1960 = vadd.f32 %v1803, %v1958
          %s1961 = sld [smem:[#allocation8 + $0x34]]
          %v1962 = vstv %s1961
          %v1963 = vmul.f32 %v1962, %v1515
          %v1964 = vmul.f32 %v1962, %v1511
          %v1965 = vmul.f32 %v1962, %v1516
          %v1966 = vadd.f32 %v1963, 0.0
          %v1967 = vadd.f32 %v1964, 0.0
          %v1968 = vadd.f32 %v1965, 0.0
          %s1969 = sld [smem:[#allocation8 + $0x3b]]
          %v1970 = vstv %s1969
          %v1971 = vmul.f32 %v1970, %v1515
          %v1972 = vmul.f32 %v1970, %v1511
          %v1973 = vmul.f32 %v1970, %v1516
          %1977 = vrot.lane.b32.xlu0 %v1971, 112
          %v1978 = vpop.permute.xlu0 %1977
          %1979 = vrot.lane.b32.xlu0 %v1972, 112
          %v1980 = vpop.permute.xlu0 %1979
          %1981 = vrot.lane.b32.xlu0 %v1973, 112
          %v1982 = vpop.permute.xlu0 %1981
          %v1983 = vsel %vm434, %v1978, %v1980
          %v1984 = vsel %vm434, %v1980, %v1982
          %v1988 = vadd.f32 %v1966, %v1983
          %v1989 = vadd.f32 %v1967, %v1984
          %v1990 = vadd.f32 %v1968, %v1982
          %s1991 = sld [smem:[#allocation8 + $0x42]]
          %v1992 = vstv %s1991
          %v1993 = vmul.f32 %v1992, %v1515
          %v1994 = vmul.f32 %v1992, %v1511
          %v1995 = vmul.f32 %v1992, %v1516
          %1999 = vrot.lane.b32.xlu0 %v1993, 96
          %v2000 = vpop.permute.xlu0 %1999
          %2001 = vrot.lane.b32.xlu0 %v1994, 96
          %v2002 = vpop.permute.xlu0 %2001
          %2003 = vrot.lane.b32.xlu0 %v1995, 96
          %v2004 = vpop.permute.xlu0 %2003
          %v2005 = vsel %vm455, %v2000, %v2002
          %v2006 = vsel %vm455, %v2002, %v2004
          %v2010 = vadd.f32 %v1988, %v2005
          %v2011 = vadd.f32 %v1989, %v2006
          %v2012 = vadd.f32 %v1990, %v2004
          %s2013 = sld [smem:[#allocation8 + $0x49]]
          %v2014 = vstv %s2013
          %v2015 = vmul.f32 %v2014, %v1515
          %v2016 = vmul.f32 %v2014, %v1511
          %v2017 = vmul.f32 %v2014, %v1516
          %2021 = vrot.lane.b32.xlu0 %v2015, 80
          %v2022 = vpop.permute.xlu0 %2021
          %2023 = vrot.lane.b32.xlu0 %v2016, 80
          %v2024 = vpop.permute.xlu0 %2023
          %2025 = vrot.lane.b32.xlu0 %v2017, 80
          %v2026 = vpop.permute.xlu0 %2025
          %v2027 = vsel %vm476, %v2022, %v2024
          %v2028 = vsel %vm476, %v2024, %v2026
          %v2032 = vadd.f32 %v2010, %v2027
          %v2033 = vadd.f32 %v2011, %v2028
          %v2034 = vadd.f32 %v2012, %v2026
          %s2035 = sld [smem:[#allocation8 + $0x50]]
          %v2036 = vstv %s2035
          %v2037 = vmul.f32 %v2036, %v1515
          %v2038 = vmul.f32 %v2036, %v1511
          %v2039 = vmul.f32 %v2036, %v1516
          %2043 = vrot.lane.b32.xlu0 %v2037, 64
          %v2044 = vpop.permute.xlu0 %2043
          %2045 = vrot.lane.b32.xlu0 %v2038, 64
          %v2046 = vpop.permute.xlu0 %2045
          %2047 = vrot.lane.b32.xlu0 %v2039, 64
          %v2048 = vpop.permute.xlu0 %2047
          %v2049 = vsel %vm497, %v2044, %v2046
          %v2050 = vsel %vm497, %v2046, %v2048
          %v2054 = vadd.f32 %v2032, %v2049
          %v2055 = vadd.f32 %v2033, %v2050
          %v2056 = vadd.f32 %v2034, %v2048
          %s2057 = sld [smem:[#allocation8 + $0x57]]
          %v2058 = vstv %s2057
          %v2059 = vmul.f32 %v2058, %v1515
          %v2060 = vmul.f32 %v2058, %v1511
          %v2061 = vmul.f32 %v2058, %v1516
          %2065 = vrot.lane.b32.xlu0 %v2059, 48
          %v2066 = vpop.permute.xlu0 %2065
          %2067 = vrot.lane.b32.xlu0 %v2060, 48
          %v2068 = vpop.permute.xlu0 %2067
          %2069 = vrot.lane.b32.xlu0 %v2061, 48
          %v2070 = vpop.permute.xlu0 %2069
          %v2071 = vsel %vm518, %v2066, %v2068
          %v2072 = vsel %vm518, %v2068, %v2070
          %v2076 = vadd.f32 %v2054, %v2071
          %v2077 = vadd.f32 %v2055, %v2072
          %v2078 = vadd.f32 %v2056, %v2070
          %s2079 = sld [smem:[#allocation8 + $0x5e]]
          %v2080 = vstv %s2079
          %v2081 = vmul.f32 %v2080, %v1515
          %v2082 = vmul.f32 %v2080, %v1511
          %v2083 = vmul.f32 %v2080, %v1516
          %2087 = vrot.lane.b32.xlu0 %v2081, 32
          %v2088 = vpop.permute.xlu0 %2087
          %2089 = vrot.lane.b32.xlu0 %v2082, 32
          %v2090 = vpop.permute.xlu0 %2089
          %2091 = vrot.lane.b32.xlu0 %v2083, 32
          %v2092 = vpop.permute.xlu0 %2091
          %v2093 = vsel %vm539, %v2088, %v2090
          %v2094 = vsel %vm539, %v2090, %v2092
          %v2098 = vadd.f32 %v2076, %v2093
          %v2099 = vadd.f32 %v2077, %v2094
          %v2100 = vadd.f32 %v2078, %v2092
          %2104 = vrot.lane.b32.xlu0 %v2098, 125
          %v2105 = vpop.permute.xlu0 %2104
          %2106 = vrot.lane.b32.xlu0 %v2099, 125
          %v2107 = vpop.permute.xlu0 %2106
          %2108 = vrot.lane.b32.xlu0 %v2100, 125
          %v2109 = vpop.permute.xlu0 %2108
          %v2110 = vsel %vm1015, %v2105, %v2107
          %v2111 = vsel %vm1015, %v2107, %v2109
          %v2114 = vmul.f32 %v356, %v2110
          %v2115 = vmul.f32 %v357, %v2111
          %v2116 = vadd.f32 %v1959, %v2114
          %v2117 = vadd.f32 %v1960, %v2115
          %s2118 = sld [smem:[#allocation8 + $0x35]]
          %v2119 = vstv %s2118
          %v2120 = vmul.f32 %v2119, %v1515
          %v2121 = vmul.f32 %v2119, %v1511
          %v2122 = vmul.f32 %v2119, %v1516
          %v2123 = vadd.f32 %v2120, 0.0
          %v2124 = vadd.f32 %v2121, 0.0
          %v2125 = vadd.f32 %v2122, 0.0
          %s2126 = sld [smem:[#allocation8 + $0x3c]]
          %v2127 = vstv %s2126
          %v2128 = vmul.f32 %v2127, %v1515
          %v2129 = vmul.f32 %v2127, %v1511
          %v2130 = vmul.f32 %v2127, %v1516
          %2134 = vrot.lane.b32.xlu0 %v2128, 112
          %v2135 = vpop.permute.xlu0 %2134
          %2136 = vrot.lane.b32.xlu0 %v2129, 112
          %v2137 = vpop.permute.xlu0 %2136
          %2138 = vrot.lane.b32.xlu0 %v2130, 112
          %v2139 = vpop.permute.xlu0 %2138
          %v2140 = vsel %vm434, %v2135, %v2137
          %v2141 = vsel %vm434, %v2137, %v2139
          %v2145 = vadd.f32 %v2123, %v2140
          %v2146 = vadd.f32 %v2124, %v2141
          %v2147 = vadd.f32 %v2125, %v2139
          %s2148 = sld [smem:[#allocation8 + $0x43]]
          %v2149 = vstv %s2148
          %v2150 = vmul.f32 %v2149, %v1515
          %v2151 = vmul.f32 %v2149, %v1511
          %v2152 = vmul.f32 %v2149, %v1516
          %2156 = vrot.lane.b32.xlu0 %v2150, 96
          %v2157 = vpop.permute.xlu0 %2156
          %2158 = vrot.lane.b32.xlu0 %v2151, 96
          %v2159 = vpop.permute.xlu0 %2158
          %2160 = vrot.lane.b32.xlu0 %v2152, 96
          %v2161 = vpop.permute.xlu0 %2160
          %v2162 = vsel %vm455, %v2157, %v2159
          %v2163 = vsel %vm455, %v2159, %v2161
          %v2167 = vadd.f32 %v2145, %v2162
          %v2168 = vadd.f32 %v2146, %v2163
          %v2169 = vadd.f32 %v2147, %v2161
          %s2170 = sld [smem:[#allocation8 + $0x4a]]
          %v2171 = vstv %s2170
          %v2172 = vmul.f32 %v2171, %v1515
          %v2173 = vmul.f32 %v2171, %v1511
          %v2174 = vmul.f32 %v2171, %v1516
          %2178 = vrot.lane.b32.xlu0 %v2172, 80
          %v2179 = vpop.permute.xlu0 %2178
          %2180 = vrot.lane.b32.xlu0 %v2173, 80
          %v2181 = vpop.permute.xlu0 %2180
          %2182 = vrot.lane.b32.xlu0 %v2174, 80
          %v2183 = vpop.permute.xlu0 %2182
          %v2184 = vsel %vm476, %v2179, %v2181
          %v2185 = vsel %vm476, %v2181, %v2183
          %v2189 = vadd.f32 %v2167, %v2184
          %v2190 = vadd.f32 %v2168, %v2185
          %v2191 = vadd.f32 %v2169, %v2183
          %s2192 = sld [smem:[#allocation8 + $0x51]]
          %v2193 = vstv %s2192
          %v2194 = vmul.f32 %v2193, %v1515
          %v2195 = vmul.f32 %v2193, %v1511
          %v2196 = vmul.f32 %v2193, %v1516
          %2200 = vrot.lane.b32.xlu0 %v2194, 64
          %v2201 = vpop.permute.xlu0 %2200
          %2202 = vrot.lane.b32.xlu0 %v2195, 64
          %v2203 = vpop.permute.xlu0 %2202
          %2204 = vrot.lane.b32.xlu0 %v2196, 64
          %v2205 = vpop.permute.xlu0 %2204
          %v2206 = vsel %vm497, %v2201, %v2203
          %v2207 = vsel %vm497, %v2203, %v2205
          %v2211 = vadd.f32 %v2189, %v2206
          %v2212 = vadd.f32 %v2190, %v2207
          %v2213 = vadd.f32 %v2191, %v2205
          %s2214 = sld [smem:[#allocation8 + $0x58]]
          %v2215 = vstv %s2214
          %v2216 = vmul.f32 %v2215, %v1515
          %v2217 = vmul.f32 %v2215, %v1511
          %v2218 = vmul.f32 %v2215, %v1516
          %2222 = vrot.lane.b32.xlu0 %v2216, 48
          %v2223 = vpop.permute.xlu0 %2222
          %2224 = vrot.lane.b32.xlu0 %v2217, 48
          %v2225 = vpop.permute.xlu0 %2224
          %2226 = vrot.lane.b32.xlu0 %v2218, 48
          %v2227 = vpop.permute.xlu0 %2226
          %v2228 = vsel %vm518, %v2223, %v2225
          %v2229 = vsel %vm518, %v2225, %v2227
          %v2233 = vadd.f32 %v2211, %v2228
          %v2234 = vadd.f32 %v2212, %v2229
          %v2235 = vadd.f32 %v2213, %v2227
          %s2236 = sld [smem:[#allocation8 + $0x5f]]
          %v2237 = vstv %s2236
          %v2238 = vmul.f32 %v2237, %v1515
          %v2239 = vmul.f32 %v2237, %v1511
          %v2240 = vmul.f32 %v2237, %v1516
          %2244 = vrot.lane.b32.xlu0 %v2238, 32
          %v2245 = vpop.permute.xlu0 %2244
          %2246 = vrot.lane.b32.xlu0 %v2239, 32
          %v2247 = vpop.permute.xlu0 %2246
          %2248 = vrot.lane.b32.xlu0 %v2240, 32
          %v2249 = vpop.permute.xlu0 %2248
          %v2250 = vsel %vm539, %v2245, %v2247
          %v2251 = vsel %vm539, %v2247, %v2249
          %v2255 = vadd.f32 %v2233, %v2250
          %v2256 = vadd.f32 %v2234, %v2251
          %v2257 = vadd.f32 %v2235, %v2249
          %2261 = vrot.lane.b32.xlu0 %v2255, 124
          %v2262 = vpop.permute.xlu0 %2261
          %2263 = vrot.lane.b32.xlu0 %v2256, 124
          %v2264 = vpop.permute.xlu0 %2263
          %2265 = vrot.lane.b32.xlu0 %v2257, 124
          %v2266 = vpop.permute.xlu0 %2265
          %v2267 = vsel %vm1173, %v2262, %v2264
          %v2268 = vsel %vm1173, %v2264, %v2266
          %v2271 = vmul.f32 %v368, %v2267
          %v2272 = vmul.f32 %v369, %v2268
          %v2273 = vadd.f32 %v2116, %v2271
          %v2274 = vadd.f32 %v2117, %v2272
          %s2275 = sld [smem:[#allocation8 + $0x36]]
          %v2276 = vstv %s2275
          %v2277 = vmul.f32 %v2276, %v1515
          %v2278 = vmul.f32 %v2276, %v1511
          %v2279 = vmul.f32 %v2276, %v1516
          %v2280 = vadd.f32 %v2277, 0.0
          %v2281 = vadd.f32 %v2278, 0.0
          %v2282 = vadd.f32 %v2279, 0.0
          %s2283 = sld [smem:[#allocation8 + $0x3d]]
          %v2284 = vstv %s2283
          %v2285 = vmul.f32 %v2284, %v1515
          %v2286 = vmul.f32 %v2284, %v1511
          %v2287 = vmul.f32 %v2284, %v1516
          %2291 = vrot.lane.b32.xlu0 %v2285, 112
          %v2292 = vpop.permute.xlu0 %2291
          %2293 = vrot.lane.b32.xlu0 %v2286, 112
          %v2294 = vpop.permute.xlu0 %2293
          %2295 = vrot.lane.b32.xlu0 %v2287, 112
          %v2296 = vpop.permute.xlu0 %2295
          %v2297 = vsel %vm434, %v2292, %v2294
          %v2298 = vsel %vm434, %v2294, %v2296
          %v2302 = vadd.f32 %v2280, %v2297
          %v2303 = vadd.f32 %v2281, %v2298
          %v2304 = vadd.f32 %v2282, %v2296
          %s2305 = sld [smem:[#allocation8 + $0x44]]
          %v2306 = vstv %s2305
          %v2307 = vmul.f32 %v2306, %v1515
          %v2308 = vmul.f32 %v2306, %v1511
          %v2309 = vmul.f32 %v2306, %v1516
          %2313 = vrot.lane.b32.xlu0 %v2307, 96
          %v2314 = vpop.permute.xlu0 %2313
          %2315 = vrot.lane.b32.xlu0 %v2308, 96
          %v2316 = vpop.permute.xlu0 %2315
          %2317 = vrot.lane.b32.xlu0 %v2309, 96
          %v2318 = vpop.permute.xlu0 %2317
          %v2319 = vsel %vm455, %v2314, %v2316
          %v2320 = vsel %vm455, %v2316, %v2318
          %v2324 = vadd.f32 %v2302, %v2319
          %v2325 = vadd.f32 %v2303, %v2320
          %v2326 = vadd.f32 %v2304, %v2318
          %s2327 = sld [smem:[#allocation8 + $0x4b]]
          %v2328 = vstv %s2327
          %v2329 = vmul.f32 %v2328, %v1515
          %v2330 = vmul.f32 %v2328, %v1511
          %v2331 = vmul.f32 %v2328, %v1516
          %2335 = vrot.lane.b32.xlu0 %v2329, 80
          %v2336 = vpop.permute.xlu0 %2335
          %2337 = vrot.lane.b32.xlu0 %v2330, 80
          %v2338 = vpop.permute.xlu0 %2337
          %2339 = vrot.lane.b32.xlu0 %v2331, 80
          %v2340 = vpop.permute.xlu0 %2339
          %v2341 = vsel %vm476, %v2336, %v2338
          %v2342 = vsel %vm476, %v2338, %v2340
          %v2346 = vadd.f32 %v2324, %v2341
          %v2347 = vadd.f32 %v2325, %v2342
          %v2348 = vadd.f32 %v2326, %v2340
          %s2349 = sld [smem:[#allocation8 + $0x52]]
          %v2350 = vstv %s2349
          %v2351 = vmul.f32 %v2350, %v1515
          %v2352 = vmul.f32 %v2350, %v1511
          %v2353 = vmul.f32 %v2350, %v1516
          %2357 = vrot.lane.b32.xlu0 %v2351, 64
          %v2358 = vpop.permute.xlu0 %2357
          %2359 = vrot.lane.b32.xlu0 %v2352, 64
          %v2360 = vpop.permute.xlu0 %2359
          %2361 = vrot.lane.b32.xlu0 %v2353, 64
          %v2362 = vpop.permute.xlu0 %2361
          %v2363 = vsel %vm497, %v2358, %v2360
          %v2364 = vsel %vm497, %v2360, %v2362
          %v2368 = vadd.f32 %v2346, %v2363
          %v2369 = vadd.f32 %v2347, %v2364
          %v2370 = vadd.f32 %v2348, %v2362
          %s2371 = sld [smem:[#allocation8 + $0x59]]
          %v2372 = vstv %s2371
          %v2373 = vmul.f32 %v2372, %v1515
          %v2374 = vmul.f32 %v2372, %v1511
          %v2375 = vmul.f32 %v2372, %v1516
          %2379 = vrot.lane.b32.xlu0 %v2373, 48
          %v2380 = vpop.permute.xlu0 %2379
          %2381 = vrot.lane.b32.xlu0 %v2374, 48
          %v2382 = vpop.permute.xlu0 %2381
          %2383 = vrot.lane.b32.xlu0 %v2375, 48
          %v2384 = vpop.permute.xlu0 %2383
          %v2385 = vsel %vm518, %v2380, %v2382
          %v2386 = vsel %vm518, %v2382, %v2384
          %v2390 = vadd.f32 %v2368, %v2385
          %v2391 = vadd.f32 %v2369, %v2386
          %v2392 = vadd.f32 %v2370, %v2384
          %s2393 = sld [smem:[#allocation8 + $0x60]]
          %v2394 = vstv %s2393
          %v2395 = vmul.f32 %v2394, %v1515
          %v2396 = vmul.f32 %v2394, %v1511
          %v2397 = vmul.f32 %v2394, %v1516
          %2401 = vrot.lane.b32.xlu0 %v2395, 32
          %v2402 = vpop.permute.xlu0 %2401
          %2403 = vrot.lane.b32.xlu0 %v2396, 32
          %v2404 = vpop.permute.xlu0 %2403
          %2405 = vrot.lane.b32.xlu0 %v2397, 32
          %v2406 = vpop.permute.xlu0 %2405
          %v2407 = vsel %vm539, %v2402, %v2404
          %v2408 = vsel %vm539, %v2404, %v2406
          %v2412 = vadd.f32 %v2390, %v2407
          %v2413 = vadd.f32 %v2391, %v2408
          %v2414 = vadd.f32 %v2392, %v2406
          %2418 = vrot.lane.b32.xlu0 %v2412, 123
          %v2419 = vpop.permute.xlu0 %2418
          %2420 = vrot.lane.b32.xlu0 %v2413, 123
          %v2421 = vpop.permute.xlu0 %2420
          %2422 = vrot.lane.b32.xlu0 %v2414, 123
          %v2423 = vpop.permute.xlu0 %2422
          %v2424 = vsel %vm1331, %v2419, %v2421
          %v2425 = vsel %vm1331, %v2421, %v2423
          %v2428 = vmul.f32 %v380, %v2424
          %v2429 = vmul.f32 %v381, %v2425
          %v2430 = vadd.f32 %v2273, %v2428
          %v2431 = vadd.f32 %v2274, %v2429
          %s2432 = sld [smem:[#allocation8 + $0x37]]
          %v2433 = vstv %s2432
          %v2434 = vmul.f32 %v2433, %v1515
          %v2435 = vmul.f32 %v2433, %v1511
          %v2436 = vmul.f32 %v2433, %v1516
          %v2437 = vadd.f32 %v2434, 0.0
          %v2438 = vadd.f32 %v2435, 0.0
          %v2439 = vadd.f32 %v2436, 0.0
          %s2440 = sld [smem:[#allocation8 + $0x3e]]
          %v2441 = vstv %s2440
          %v2442 = vmul.f32 %v2441, %v1515
          %v2443 = vmul.f32 %v2441, %v1511
          %v2444 = vmul.f32 %v2441, %v1516
          %2448 = vrot.lane.b32.xlu0 %v2442, 112
          %v2449 = vpop.permute.xlu0 %2448
          %2450 = vrot.lane.b32.xlu0 %v2443, 112
          %v2451 = vpop.permute.xlu0 %2450
          %2452 = vrot.lane.b32.xlu0 %v2444, 112
          %v2453 = vpop.permute.xlu0 %2452
          %v2454 = vsel %vm434, %v2449, %v2451
          %v2455 = vsel %vm434, %v2451, %v2453
          %v2459 = vadd.f32 %v2437, %v2454
          %v2460 = vadd.f32 %v2438, %v2455
          %v2461 = vadd.f32 %v2439, %v2453
          %s2462 = sld [smem:[#allocation8 + $0x45]]
          %v2463 = vstv %s2462
          %v2464 = vmul.f32 %v2463, %v1515
          %v2465 = vmul.f32 %v2463, %v1511
          %v2466 = vmul.f32 %v2463, %v1516
          %2470 = vrot.lane.b32.xlu0 %v2464, 96
          %v2471 = vpop.permute.xlu0 %2470
          %2472 = vrot.lane.b32.xlu0 %v2465, 96
          %v2473 = vpop.permute.xlu0 %2472
          %2474 = vrot.lane.b32.xlu0 %v2466, 96
          %v2475 = vpop.permute.xlu0 %2474
          %v2476 = vsel %vm455, %v2471, %v2473
          %v2477 = vsel %vm455, %v2473, %v2475
          %v2481 = vadd.f32 %v2459, %v2476
          %v2482 = vadd.f32 %v2460, %v2477
          %v2483 = vadd.f32 %v2461, %v2475
          %s2484 = sld [smem:[#allocation8 + $0x4c]]
          %v2485 = vstv %s2484
          %v2486 = vmul.f32 %v2485, %v1515
          %v2487 = vmul.f32 %v2485, %v1511
          %v2488 = vmul.f32 %v2485, %v1516
          %2492 = vrot.lane.b32.xlu0 %v2486, 80
          %v2493 = vpop.permute.xlu0 %2492
          %2494 = vrot.lane.b32.xlu0 %v2487, 80
          %v2495 = vpop.permute.xlu0 %2494
          %2496 = vrot.lane.b32.xlu0 %v2488, 80
          %v2497 = vpop.permute.xlu0 %2496
          %v2498 = vsel %vm476, %v2493, %v2495
          %v2499 = vsel %vm476, %v2495, %v2497
          %v2503 = vadd.f32 %v2481, %v2498
          %v2504 = vadd.f32 %v2482, %v2499
          %v2505 = vadd.f32 %v2483, %v2497
          %s2506 = sld [smem:[#allocation8 + $0x53]]
          %v2507 = vstv %s2506
          %v2508 = vmul.f32 %v2507, %v1515
          %v2509 = vmul.f32 %v2507, %v1511
          %v2510 = vmul.f32 %v2507, %v1516
          %2514 = vrot.lane.b32.xlu0 %v2508, 64
          %v2515 = vpop.permute.xlu0 %2514
          %2516 = vrot.lane.b32.xlu0 %v2509, 64
          %v2517 = vpop.permute.xlu0 %2516
          %2518 = vrot.lane.b32.xlu0 %v2510, 64
          %v2519 = vpop.permute.xlu0 %2518
          %v2520 = vsel %vm497, %v2515, %v2517
          %v2521 = vsel %vm497, %v2517, %v2519
          %v2525 = vadd.f32 %v2503, %v2520
          %v2526 = vadd.f32 %v2504, %v2521
          %v2527 = vadd.f32 %v2505, %v2519
          %s2528 = sld [smem:[#allocation8 + $0x5a]]
          %v2529 = vstv %s2528
          %v2530 = vmul.f32 %v2529, %v1515
          %v2531 = vmul.f32 %v2529, %v1511
          %v2532 = vmul.f32 %v2529, %v1516
          %2536 = vrot.lane.b32.xlu0 %v2530, 48
          %v2537 = vpop.permute.xlu0 %2536
          %2538 = vrot.lane.b32.xlu0 %v2531, 48
          %v2539 = vpop.permute.xlu0 %2538
          %2540 = vrot.lane.b32.xlu0 %v2532, 48
          %v2541 = vpop.permute.xlu0 %2540
          %v2542 = vsel %vm518, %v2537, %v2539
          %v2543 = vsel %vm518, %v2539, %v2541
          %v2547 = vadd.f32 %v2525, %v2542
          %v2548 = vadd.f32 %v2526, %v2543
          %v2549 = vadd.f32 %v2527, %v2541
          %s2550 = sld [smem:[#allocation8 + $0x61]]
          %v2551 = vstv %s2550
          %v2552 = vmul.f32 %v2551, %v1515
          %v2553 = vmul.f32 %v2551, %v1511
          %v2554 = vmul.f32 %v2551, %v1516
          %2558 = vrot.lane.b32.xlu0 %v2552, 32
          %v2559 = vpop.permute.xlu0 %2558
          %2560 = vrot.lane.b32.xlu0 %v2553, 32
          %v2561 = vpop.permute.xlu0 %2560
          %2562 = vrot.lane.b32.xlu0 %v2554, 32
          %v2563 = vpop.permute.xlu0 %2562
          %v2564 = vsel %vm539, %v2559, %v2561
          %v2565 = vsel %vm539, %v2561, %v2563
          %v2569 = vadd.f32 %v2547, %v2564
          %v2570 = vadd.f32 %v2548, %v2565
          %v2571 = vadd.f32 %v2549, %v2563
          %2575 = vrot.lane.b32.xlu0 %v2569, 122
          %v2576 = vpop.permute.xlu0 %2575
          %2577 = vrot.lane.b32.xlu0 %v2570, 122
          %v2578 = vpop.permute.xlu0 %2577
          %2579 = vrot.lane.b32.xlu0 %v2571, 122
          %v2580 = vpop.permute.xlu0 %2579
          %v2581 = vsel %vm1489, %v2576, %v2578
          %v2582 = vsel %vm1489, %v2578, %v2580
          %v2585 = vmul.f32 %v392, %v2581
          %v2586 = vmul.f32 %v393, %v2582
          %v2587 = vadd.f32 %v2430, %v2585
          %v2588 = vadd.f32 %v2431, %v2586
          %v2589 = vxor.u32 %v2587, 2147483648
          %v2590 = vxor.u32 %v2588, 2147483648
          %v2591 = vmul.f32 %v2589, 1.442695
          %v2592 = vpow.pop %v2591
          %v2593 = vmul.f32 %v2590, 1.442695
          %v2594 = vpow.pop %v2593
          %v2595 = vadd.f32 %v2592, 1.0
          %v2596 = vadd.f32 %v2594, 1.0
          %v2597 = vrcp.pop %v2595
          %v2598 = vmul.f32 1.0, %v2597
          %v2599 = vrcp.pop %v2596
          %v2600 = vmul.f32 1.0, %v2599
          %v2603 = vcombine.low %v2598, %v2600
          %v2605 = vunpack.c.l.s4 1966171168
          %v2606 = vunpack.c.0.s8 %v2605
          %v2607 = vlaneseq
          %v2608 = vshrl.u32 %v2607, 7
          %v2609 = vsub.s32 %v2606, %v2608
          %v2610 = vrot.slane %v2603, %v2609
          %v2612 = vunpack.c.l.s4 1966171168
          %v2613 = vunpack.c.0.s8 %v2612
          %v2614 = vlaneseq
          %v2615 = vshrl.u32 %v2614, 7
          %v2616 = vsub.s32 %v2613, %v2615
          %v2617 = vrot.slane %v2610, %v2616
          %2619 = vst.msk [vmem:[%s189] sm:$0x3] %vm242, %v2617
        $region44: #{tpu_custom_call.1} parent=27 // pred_fallthru
          _
        %s2620 = sand.u32 %s89, 1
        %s2621 = scalar_lea.sflag [#allocation6], %s2620
        %s2622 = sand.u32 %s89, 1
        %s2623 = smul.addr %s2622, 2
        %s2624 = scalar_lea.vmem [#allocation9], %s2623
        // Predicated region
        $region45: #{tpu_custom_call.1} parent=27 // pred_check
          %p2625 = pneg %p99
        $region46: #{tpu_custom_call.1} parent=27 // pred_check_branch
          %2627 = sbr.rel (%p2625) target = $region48
        $region47: #{tpu_custom_call.1} parent=27 // pred_region
          %s2629 = ssub.s32 32, 32
          %2630 = vsyncadd %s2621, %s2629
          %s2631 = smul.addr %s24, 2
          %s2632 = smul.addr %s2631, 16
          %s2633 = scalar_lea.hbm %s2, %s2632
          %s2635 = sshll.u32 %s2624, 4
          %s2636 = int_to_ptr.vmem [resolvable:$true] %s2635
          %2638 = dma.vmem_to_hbm [thread:$0]  %s2636, 32, %s2633, %s2621
        $region48: #{tpu_custom_call.1} parent=27 // pred_fallthru
          _
      $region28: #{tpu_custom_call.1} parent=5 // pred_fallthru
        _
      %p2639 = scmp.le.s32.totalorder 2, %s15
      // Predicated region
      $region49: #{tpu_custom_call.1} parent=5 // pred_check
        %p2640 = pneg %p2639
      $region50: #{tpu_custom_call.1} parent=5 // pred_check_branch
        %2642 = sbr.rel (%p2640) target = $region52
      $region51: #{tpu_custom_call.1} parent=5 // pred_region
        %s2643 = ssub.s32 %s15, 2
        // Predicated region
        $region53: #{tpu_custom_call.1} parent=51 // pred_check
          %p2644 = pneg %p105
        $region54: #{tpu_custom_call.1} parent=51 // pred_check_branch
          %2646 = sbr.rel (%p2644) target = $region56
        $region55: #{tpu_custom_call.1} parent=51 // pred_region
          %s2647 = sand.u32 %s90, 1
          %s2648 = scalar_lea.sflag [#allocation6], %s2647
          %s2649 = sand.u32 %s90, 1
          %s2650 = smul.addr %s2649, 2
          %s2651 = scalar_lea.vmem [#allocation9], %s2650
          %2652 = dma.done %s2648, 32
        $region56: #{tpu_custom_call.1} parent=51 // pred_fallthru
          _
      $region52: #{tpu_custom_call.1} parent=5 // pred_fallthru
        _
    $region6: #{tpu_custom_call.1} parent=1 // loop_footer
      %s19 = sadd.s32 1, %s15
    $region7: #{tpu_custom_call.1} parent=1 // loop_footer_branch
      %14 = sbr.rel target = $region3
    $region8: #{tpu_custom_call.1} parent=1 // loop_exit
      _
    %2653 = vsyncpa [#allocation5], 1
    %s2654 = scalar_lea.sflag [#allocation5], 1
    %2655 = vsyncpa %s2654, 1
    %2656 = vsyncpa [#allocation6], 1
    %s2657 = scalar_lea.sflag [#allocation6], 1
    %2658 = vsyncpa %s2657, 1
    %2659 = vsyncpa [#allocation7], 1
    %s2660 = scalar_lea.sflag [#allocation7], 1
    %2661 = vsyncpa %s2660, 1

</llo_original>
